<compile_context>
chip_gen: v7x
topology: tpu7x:2x2x1
jax: 0.10.0
libtpu: 0.0.40
codegen_flags: <defaults>
</compile_context>

<pallas_src>
import functools

import numpy as np
import jax
import jax.numpy as jnp
from jax.experimental import pallas as pl
from jax.experimental.pallas import tpu as pltpu

# ---------------- small hp values consistent with the module structure -------
REF_ENC_FILTERS = [4, 8, 16]          # K = 3 conv layers (1 -> 4 -> 8 -> 16)
NUM_MELS = 16
TTS_EMBED_DIMS = 32                   # E (num_units of the attention)
NUM_HEADS = 4
TOKEN_NUM = 10
HIDDEN = TTS_EMBED_DIMS // 2          # GRU hidden size = E // 2
D_Q = TTS_EMBED_DIMS // 2             # attention query_dim
D_K = TTS_EMBED_DIMS // NUM_HEADS     # attention key_dim (= token feature dim)
BN_EPS = 1e-5


# ------------------------------ fused Pallas kernel --------------------------
def gst_fused_kernel(x_ref, m1_ref, m2_ref, m3_ref,
                     gb1_ref, gb2_ref, gb3_ref,
                     wih_ref, whh_ref, bgru_ref,
                     embed_ref, wq_ref, wkv_ref, o_ref,
                     *, n_batch, conv_dims, hidden, num_heads, key_dim):
    """Whole GST forward in one kernel.

    x:      [N*H0, W0*C0]  (mel input, samples stacked on rows, C0 = 1)
    m_l:    [3*W_l*C_l, Wo_l*Co_l]  conv weight with the stride-2 kx selection folded in
    gb_l:   [2, Co_l]  rows = (BN gamma, BN beta)
    wih:    [In, 3H]   (rows pre-permuted to our (w*C + c) feature order)
    whh:    [H, 3H];   bgru: [2, 3H] rows = (b_ih, b_hh)
    embed:  [token_num, d_k];  wq: [d_q, E];  wkv: [d_k, 2E]  ([Wk | Wv])
    o:      [N, E]
    """
    f32 = jnp.float32
    m_refs = (m1_ref, m2_ref, m3_ref)
    gb_refs = (gb1_ref, gb2_ref, gb3_ref)

    # -------- reference encoder: 3 x (conv 3x3 s2 p1 + BN(train) + ReLU) -----
    x = x_ref[...]                                        # [N*H0, W0*C0]
    for li, (H, W, Cin, Ho, Wo, Cout) in enumerate(conv_dims):
        fin = W * Cin
        fout = Wo * Cout
        mcat = m_refs[li][...]                            # [3*fin, fout]
        gb = gb_refs[li][...]                             # [2, Cout]

        # 0/1 row-selection matrices: R_ky[ho, h] = (h == 2*ho + ky - 1).
        # Targets outside [0, H) match nothing -> implicit zero padding.
        ho_i = jax.lax.broadcasted_iota(jnp.int32, (Ho, H), 0)
        h_i = jax.lax.broadcasted_iota(jnp.int32, (Ho, H), 1)
        rsel = [(h_i == 2 * ho_i + (ky - 1)).astype(f32) for ky in range(3)]

        ys = []
        for n in range(n_batch):                          # N is tiny and static
            x_n = x[n * H:(n + 1) * H, :]                 # [H, fin]
            xr = jnp.concatenate(
                [jnp.dot(r, x_n, preferred_element_type=f32) for r in rsel],
                axis=1)                                   # [Ho, 3*fin] (ky, w, ci)
            ys.append(jnp.dot(xr, mcat, preferred_element_type=f32))  # [Ho, fout]
        y = jnp.concatenate(ys, axis=0)                   # [N*Ho, fout]

        # Training-mode BatchNorm with single-pass statistics + ReLU.
        # (Conv bias omitted: cancelled exactly by the batch-mean subtraction.)
        eye_c = (jax.lax.broadcasted_iota(jnp.int32, (Cout, Cout), 0) ==
                 jax.lax.broadcasted_iota(jnp.int32, (Cout, Cout), 1)).astype(f32)
        pool = jnp.concatenate([eye_c] * Wo, axis=0)      # [fout, Cout] sum over wo
        bcast = jnp.concatenate([eye_c] * Wo, axis=1)     # [Cout, fout] bcast over wo

        s1 = jnp.sum(y, axis=0, keepdims=True)            # [1, fout]
        s2 = jnp.sum(y * y, axis=0, keepdims=True)        # [1, fout]
        s12 = jnp.dot(jnp.concatenate([s1, s2], axis=0), pool,
                      preferred_element_type=f32)         # [2, Cout]
        inv_cnt = 1.0 / float(n_batch * Ho * Wo)
        mean = s12[0:1, :] * inv_cnt
        var = s12[1:2, :] * inv_cnt - mean * mean         # biased variance
        scale = gb[0:1, :] * jax.lax.rsqrt(var + BN_EPS)  # gamma / sqrt(var+eps)
        shift = gb[1:2, :] - mean * scale                 # beta - mean*scale
        sb = jnp.dot(jnp.concatenate([scale, shift], axis=0), bcast,
                     preferred_element_type=f32)          # [2, fout]
        x = jnp.maximum(y * sb[0:1, :] + sb[1:2, :], 0.0)  # [N*Ho, fout]

    # -------- GRU (batch_first, single layer) -> final hidden state ----------
    T = conv_dims[-1][3]                                  # time steps = last Ho
    hd = hidden
    wih = wih_ref[...]
    whh = whh_ref[...]
    bg = bgru_ref[...]
    bih = bg[0:1, :]
    bhh = bg[1:2, :]

    # Input-to-hidden GEMM hoisted out of the recurrence.
    gx = []
    for n in range(n_batch):
        seq_n = x[n * T:(n + 1) * T, :]                   # [T, In]
        gx.append(jnp.dot(seq_n, wih, preferred_element_type=f32) + bih)  # [T, 3H]

    h = jnp.zeros((n_batch, hd), f32)
    for t in range(T):                                    # T is tiny and static
        gx_t = jnp.concatenate([g[t:t + 1, :] for g in gx], axis=0)   # [N, 3H]
        gh = jnp.dot(h, whh, preferred_element_type=f32) + bhh
        r = jax.nn.sigmoid(gx_t[:, 0:hd] + gh[:, 0:hd])
        z = jax.nn.sigmoid(gx_t[:, hd:2 * hd] + gh[:, hd:2 * hd])
        c = jnp.tanh(gx_t[:, 2 * hd:] + r * gh[:, 2 * hd:])
        h = (1.0 - z) * c + z * h

    # -------- STL: keys = tanh(embed); multi-head attention with T_q = 1 -----
    keys = jnp.tanh(embed_ref[...])                               # [Tk, dk]
    q = jnp.dot(h, wq_ref[...], preferred_element_type=f32)       # [N, E]
    kv = jnp.dot(keys, wkv_ref[...], preferred_element_type=f32)  # [Tk, 2E] fused K/V
    nu = wq_ref.shape[1]
    k = kv[:, 0:nu]
    v = kv[:, nu:2 * nu]
    su = nu // num_heads
    scl = 1.0 / (key_dim ** 0.5)

    sc = [jnp.dot(q[:, i * su:(i + 1) * su], k[:, i * su:(i + 1) * su].T,
                  preferred_element_type=f32) for i in range(num_heads)]
    s = jnp.concatenate(sc, axis=0) * scl                 # [heads*N, Tk]
    s = s - jnp.max(s, axis=-1, keepdims=True)            # one softmax pass
    p = jnp.exp(s)
    att = p * pl.reciprocal(jnp.sum(p, axis=-1, keepdims=True), approx=True)
    outs = [jnp.dot(att[i * n_batch:(i + 1) * n_batch, :],
                    v[:, i * su:(i + 1) * su], preferred_element_type=f32)
            for i in range(num_heads)]
    o_ref[...] = jnp.concatenate(outs, axis=-1)           # single [N, E] store


# ------------------------------ plain-JAX glue --------------------------------
def _calculate_channels(L, kernel_size, stride, pad, n_convs):
    for _ in range(n_convs):
        L = (L - kernel_size + 2 * pad) // stride + 1
    return L


def _conv_out(L):
    return (L - 3 + 2) // 2 + 1


def _build_conv_mat(w_conv, W_in, Wo):
    """Fold the kx / stride-2 column selection into the conv weight.

    w_conv: [3, 3, Cin, Cout]  (ky, kx, ci, co)
    returns [3*W_in*Cin, Wo*Cout] acting on row patches ordered (ky, w, ci):
      M[ky*W_in*Cin + w*Cin + ci, wo*Cout + co] = sum_kx [w == 2wo+kx-1] * W[ky,kx,ci,co]
    """
    K = 3
    Cin, Cout = w_conv.shape[2], w_conv.shape[3]
    w_idx = np.arange(W_in)[:, None, None]
    wo_idx = np.arange(Wo)[None, :, None]
    kx_idx = np.arange(K)[None, None, :]
    sel = (w_idx == 2 * wo_idx + kx_idx - 1).astype(np.float32)   # [W_in, Wo, K]
    m = jnp.einsum("wox,yxcd->ywcod", jnp.asarray(sel), w_conv)
    return m.reshape(K * W_in * Cin, Wo * Cout)


def init_params(key):
    ks = jax.random.split(key, 12)
    params = {"convs": []}
    filters = [1] + REF_ENC_FILTERS
    for i in range(len(REF_ENC_FILTERS)):
        cin, cout = filters[i], filters[i + 1]
        w = jax.random.normal(ks[i], (3, 3, cin, cout), jnp.float32) * 0.1
        gamma = jnp.ones((1, cout), jnp.float32)    # BatchNorm2d default weight
        beta = jnp.zeros((1, cout), jnp.float32)    # BatchNorm2d default bias
        params["convs"].append((w, gamma, beta))

    gru_in = REF_ENC_FILTERS[-1] * _calculate_channels(NUM_MELS, 3, 2, 1,
                                                       len(REF_ENC_FILTERS))
    params["gru"] = {
        "w_ih_t": jax.random.normal(ks[4], (gru_in, 3 * HIDDEN), jnp.float32) * 0.1,
        "w_hh_t": jax.random.normal(ks[5], (HIDDEN, 3 * HIDDEN), jnp.float32) * 0.1,
        "b_ih": jax.random.normal(ks[6], (1, 3 * HIDDEN), jnp.float32) * 0.1,
        "b_hh": jax.random.normal(ks[7], (1, 3 * HIDDEN), jnp.float32) * 0.1,
    }
    params["embed"] = jax.random.normal(ks[8], (TOKEN_NUM, D_K), jnp.float32) * 0.5
    params["wq"] = jax.random.normal(ks[9], (D_Q, TTS_EMBED_DIMS), jnp.float32) * 0.1
    params["wk"] = jax.random.normal(ks[10], (D_K, TTS_EMBED_DIMS), jnp.float32) * 0.1
    params["wv"] = jax.random.normal(ks[11], (D_K, TTS_EMBED_DIMS), jnp.float32) * 0.1
    return params


def gst_forward(params, inputs):
    """inputs: [N, Ty, n_mels]  ->  style_embed: [N, 1, E]"""
    N, Ty, n_mels = inputs.shape
    assert len(params["convs"]) == 3
    # PyTorch: inputs.view(N, 1, Ty, n_mels) (NCHW, C=1); we stack samples on rows.
    x2d = inputs.reshape(N * Ty, n_mels)                 # [N*H0, W0*C0]

    conv_dims, mcats, gbs = [], [], []
    H, W, C = Ty, n_mels, 1
    for (w_conv, gamma, beta) in params["convs"]:
        cout = w_conv.shape[-1]
        Ho, Wo = _conv_out(H), _conv_out(W)
        conv_dims.append((H, W, C, Ho, Wo, cout))
        mcats.append(_build_conv_mat(w_conv, W, Wo))
        gbs.append(jnp.concatenate([gamma, beta], axis=0))   # [2, Cout]
        H, W, C = Ho, Wo, cout

    # Reorder PyTorch GRU input features (c*W + w) into our activation order (w*C + c).
    feat = W * C
    perm = np.array([(f % C) * W + (f // C) for f in range(feat)], dtype=np.int32)
    w_ih_eff = params["gru"]["w_ih_t"][perm, :]
    b_gru = jnp.concatenate([params["gru"]["b_ih"], params["gru"]["b_hh"]], axis=0)
    wkv = jnp.concatenate([params["wk"], params["wv"]], axis=1)      # [d_k, 2E]

    kernel = functools.partial(
        gst_fused_kernel, n_batch=N, conv_dims=tuple(conv_dims),
        hidden=HIDDEN, num_heads=NUM_HEADS, key_dim=float(D_K))

    args = (x2d, mcats[0], mcats[1], mcats[2], gbs[0], gbs[1], gbs[2],
            w_ih_eff, params["gru"]["w_hh_t"], b_gru,
            params["embed"], params["wq"], wkv)

    style = pl.pallas_call(
        kernel,
        out_shape=jax.ShapeDtypeStruct((N, TTS_EMBED_DIMS), jnp.float32),
        in_specs=[pl.BlockSpec(memory_space=pltpu.MemorySpace.VMEM)] * len(args),
        out_specs=pl.BlockSpec(memory_space=pltpu.MemorySpace.VMEM),
        cost_estimate=pl.CostEstimate(flops=200_000, transcendentals=600,
                                      bytes_accessed=60_000),
    )(*args)
    return style.reshape(N, 1, TTS_EMBED_DIMS)

# TODO(synk): the `inputs is None` / gst_index path of STL (hard-coded token
# weights, torch.rand, .cuda()) is not translated; only the reference-encoder
# path of GST.forward is implemented.  BatchNorm uses training-mode batch
# statistics (running stats are not tracked).


if __name__ == "__main__":
    key = jax.random.PRNGKey(0)
    pkey, xkey = jax.random.split(key)
    params = init_params(pkey)

    N, TY = 2, 16
    inputs = jax.random.normal(xkey, (N, TY, NUM_MELS), jnp.float32)

    out = jax.jit(gst_forward)(params, inputs)
    out = jax.block_until_ready(out)
    assert out.shape == (N, 1, TTS_EMBED_DIMS), out.shape
    assert bool(jnp.all(jnp.isfinite(out)))
    print("KERNEL_OK")
</pallas_src>

<mosaic_0001>
module attributes {stable_mosaic.version = 11 : i64} {
  func.func @gst_fused_kernel(%arg0: memref<32x16xf32, #tpu.memory_space<vmem>>, %arg1: memref<48x32xf32, #tpu.memory_space<vmem>>, %arg2: memref<96x32xf32, #tpu.memory_space<vmem>>, %arg3: memref<96x32xf32, #tpu.memory_space<vmem>>, %arg4: memref<2x4xf32, #tpu.memory_space<vmem>>, %arg5: memref<2x8xf32, #tpu.memory_space<vmem>>, %arg6: memref<2x16xf32, #tpu.memory_space<vmem>>, %arg7: memref<32x48xf32, #tpu.memory_space<vmem>>, %arg8: memref<16x48xf32, #tpu.memory_space<vmem>>, %arg9: memref<2x48xf32, #tpu.memory_space<vmem>>, %arg10: memref<10x8xf32, #tpu.memory_space<vmem>>, %arg11: memref<16x32xf32, #tpu.memory_space<vmem>>, %arg12: memref<8x64xf32, #tpu.memory_space<vmem>>, %arg13: memref<2x32xf32, #tpu.memory_space<vmem>>) attributes {dimension_semantics = [], scalar_prefetch = 0 : i64, scratch_operands = 0 : i64, tpu.core_type = #tpu.core_type<tc>} {
    %c0 = arith.constant 0 : index
    %c0_0 = arith.constant 0 : index
    %0 = vector.load %arg0[%c0, %c0_0] : memref<32x16xf32, #tpu.memory_space<vmem>>, vector<32x16xf32>
    %c0_1 = arith.constant 0 : index
    %c0_2 = arith.constant 0 : index
    %1 = vector.load %arg1[%c0_1, %c0_2] : memref<48x32xf32, #tpu.memory_space<vmem>>, vector<48x32xf32>
    %c0_3 = arith.constant 0 : index
    %c0_4 = arith.constant 0 : index
    %2 = vector.load %arg4[%c0_3, %c0_4] : memref<2x4xf32, #tpu.memory_space<vmem>>, vector<2x4xf32>
    %3 = tpu.iota {dimensions = array<i32: 0>} : vector<8x16xi32>
    %4 = tpu.iota {dimensions = array<i32: 1>} : vector<8x16xi32>
    %c2_i32 = arith.constant 2 : i32
    %5 = vector.broadcast %c2_i32 : i32 to vector<8x16xi32>
    %6 = arith.muli %5, %3 : vector<8x16xi32>
    %c-1_i32 = arith.constant -1 : i32
    %7 = vector.broadcast %c-1_i32 : i32 to vector<8x16xi32>
    %8 = arith.addi %6, %7 : vector<8x16xi32>
    %9 = arith.cmpi eq, %4, %8 : vector<8x16xi32>
    %10 = arith.extui %9 : vector<8x16xi1> to vector<8x16xi32>
    %11 = arith.sitofp %10 : vector<8x16xi32> to vector<8x16xf32>
    %c2_i32_5 = arith.constant 2 : i32
    %12 = vector.broadcast %c2_i32_5 : i32 to vector<8x16xi32>
    %13 = arith.muli %12, %3 : vector<8x16xi32>
    %c0_i32 = arith.constant 0 : i32
    %14 = vector.broadcast %c0_i32 : i32 to vector<8x16xi32>
    %15 = arith.addi %13, %14 : vector<8x16xi32>
    %16 = arith.cmpi eq, %4, %15 : vector<8x16xi32>
    %17 = arith.extui %16 : vector<8x16xi1> to vector<8x16xi32>
    %18 = arith.sitofp %17 : vector<8x16xi32> to vector<8x16xf32>
    %c2_i32_6 = arith.constant 2 : i32
    %19 = vector.broadcast %c2_i32_6 : i32 to vector<8x16xi32>
    %20 = arith.muli %19, %3 : vector<8x16xi32>
    %c1_i32 = arith.constant 1 : i32
    %21 = vector.broadcast %c1_i32 : i32 to vector<8x16xi32>
    %22 = arith.addi %20, %21 : vector<8x16xi32>
    %23 = arith.cmpi eq, %4, %22 : vector<8x16xi32>
    %24 = arith.extui %23 : vector<8x16xi1> to vector<8x16xi32>
    %25 = arith.sitofp %24 : vector<8x16xi32> to vector<8x16xf32>
    %26 = vector.extract_strided_slice %0 {offsets = [0, 0], sizes = [16, 16], strides = [1, 1]} : vector<32x16xf32> to vector<16x16xf32>
    %cst = arith.constant dense<0.000000e+00> : vector<8x16xf32>
    %27 = tpu.matmul %11, %26, %cst {dimension_numbers = #tpu.dot_dimension_numbers<[1], [0], [0], [1], [0, 0, 1, 1], [], []>} : vector<8x16xf32>, vector<16x16xf32>, vector<8x16xf32> -> vector<8x16xf32>
    %cst_7 = arith.constant dense<0.000000e+00> : vector<8x16xf32>
    %28 = tpu.matmul %18, %26, %cst_7 {dimension_numbers = #tpu.dot_dimension_numbers<[1], [0], [0], [1], [0, 0, 1, 1], [], []>} : vector<8x16xf32>, vector<16x16xf32>, vector<8x16xf32> -> vector<8x16xf32>
    %cst_8 = arith.constant dense<0.000000e+00> : vector<8x16xf32>
    %29 = tpu.matmul %25, %26, %cst_8 {dimension_numbers = #tpu.dot_dimension_numbers<[1], [0], [0], [1], [0, 0, 1, 1], [], []>} : vector<8x16xf32>, vector<16x16xf32>, vector<8x16xf32> -> vector<8x16xf32>
    %30 = tpu.concatenate %27, %28, %29 in 1 : vector<8x16xf32>, vector<8x16xf32>, vector<8x16xf32> -> vector<8x48xf32>
    %cst_9 = arith.constant dense<0.000000e+00> : vector<8x32xf32>
    %31 = tpu.matmul %30, %1, %cst_9 {dimension_numbers = #tpu.dot_dimension_numbers<[1], [0], [0], [1], [0, 0, 1, 1], [], []>} : vector<8x48xf32>, vector<48x32xf32>, vector<8x32xf32> -> vector<8x32xf32>
    %32 = vector.extract_strided_slice %0 {offsets = [16, 0], sizes = [16, 16], strides = [1, 1]} : vector<32x16xf32> to vector<16x16xf32>
    %cst_10 = arith.constant dense<0.000000e+00> : vector<8x16xf32>
    %33 = tpu.matmul %11, %32, %cst_10 {dimension_numbers = #tpu.dot_dimension_numbers<[1], [0], [0], [1], [0, 0, 1, 1], [], []>} : vector<8x16xf32>, vector<16x16xf32>, vector<8x16xf32> -> vector<8x16xf32>
    %cst_11 = arith.constant dense<0.000000e+00> : vector<8x16xf32>
    %34 = tpu.matmul %18, %32, %cst_11 {dimension_numbers = #tpu.dot_dimension_numbers<[1], [0], [0], [1], [0, 0, 1, 1], [], []>} : vector<8x16xf32>, vector<16x16xf32>, vector<8x16xf32> -> vector<8x16xf32>
    %cst_12 = arith.constant dense<0.000000e+00> : vector<8x16xf32>
    %35 = tpu.matmul %25, %32, %cst_12 {dimension_numbers = #tpu.dot_dimension_numbers<[1], [0], [0], [1], [0, 0, 1, 1], [], []>} : vector<8x16xf32>, vector<16x16xf32>, vector<8x16xf32> -> vector<8x16xf32>
    %36 = tpu.concatenate %33, %34, %35 in 1 : vector<8x16xf32>, vector<8x16xf32>, vector<8x16xf32> -> vector<8x48xf32>
    %cst_13 = arith.constant dense<0.000000e+00> : vector<8x32xf32>
    %37 = tpu.matmul %36, %1, %cst_13 {dimension_numbers = #tpu.dot_dimension_numbers<[1], [0], [0], [1], [0, 0, 1, 1], [], []>} : vector<8x48xf32>, vector<48x32xf32>, vector<8x32xf32> -> vector<8x32xf32>
    %38 = tpu.concatenate %31, %37 in 0 : vector<8x32xf32>, vector<8x32xf32> -> vector<16x32xf32>
    %39 = tpu.iota {dimensions = array<i32: 0>} : vector<4x4xi32>
    %40 = tpu.iota {dimensions = array<i32: 1>} : vector<4x4xi32>
    %41 = arith.cmpi eq, %39, %40 : vector<4x4xi32>
    %42 = arith.extui %41 : vector<4x4xi1> to vector<4x4xi32>
    %43 = arith.sitofp %42 : vector<4x4xi32> to vector<4x4xf32>
    %44 = tpu.concatenate %43, %43, %43, %43, %43, %43, %43, %43 in 0 : vector<4x4xf32>, vector<4x4xf32>, vector<4x4xf32>, vector<4x4xf32>, vector<4x4xf32>, vector<4x4xf32>, vector<4x4xf32>, vector<4x4xf32> -> vector<32x4xf32>
    %45 = tpu.concatenate %43, %43, %43, %43, %43, %43, %43, %43 in 1 : vector<4x4xf32>, vector<4x4xf32>, vector<4x4xf32>, vector<4x4xf32>, vector<4x4xf32>, vector<4x4xf32>, vector<4x4xf32>, vector<4x4xf32> -> vector<4x32xf32>
    %cst_14 = arith.constant dense<0.000000e+00> : vector<32xf32>
    %46 = vector.multi_reduction <add>, %38, %cst_14 [0] : vector<16x32xf32> to vector<32xf32>
    %47 = vector.shape_cast %46 : vector<32xf32> to vector<1x32xf32>
    %48 = arith.mulf %38, %38 : vector<16x32xf32>
    %cst_15 = arith.constant dense<0.000000e+00> : vector<32xf32>
    %49 = vector.multi_reduction <add>, %48, %cst_15 [0] : vector<16x32xf32> to vector<32xf32>
    %50 = vector.shape_cast %49 : vector<32xf32> to vector<1x32xf32>
    %51 = tpu.concatenate %47, %50 in 0 : vector<1x32xf32>, vector<1x32xf32> -> vector<2x32xf32>
    %cst_16 = arith.constant dense<0.000000e+00> : vector<2x4xf32>
    %52 = tpu.matmul %51, %44, %cst_16 {dimension_numbers = #tpu.dot_dimension_numbers<[1], [0], [0], [1], [0, 0, 1, 1], [], []>} : vector<2x32xf32>, vector<32x4xf32>, vector<2x4xf32> -> vector<2x4xf32>
    %53 = vector.extract_strided_slice %52 {offsets = [0, 0], sizes = [1, 4], strides = [1, 1]} : vector<2x4xf32> to vector<1x4xf32>
    %cst_17 = arith.constant 7.812500e-03 : f32
    %54 = vector.broadcast %cst_17 : f32 to vector<1x4xf32>
    %55 = arith.mulf %53, %54 : vector<1x4xf32>
    %56 = vector.extract_strided_slice %52 {offsets = [1, 0], sizes = [1, 4], strides = [1, 1]} : vector<2x4xf32> to vector<1x4xf32>
    %cst_18 = arith.constant 7.812500e-03 : f32
    %57 = vector.broadcast %cst_18 : f32 to vector<1x4xf32>
    %58 = arith.mulf %56, %57 : vector<1x4xf32>
    %59 = arith.mulf %55, %55 : vector<1x4xf32>
    %60 = arith.subf %58, %59 : vector<1x4xf32>
    %61 = vector.extract_strided_slice %2 {offsets = [0, 0], sizes = [1, 4], strides = [1, 1]} : vector<2x4xf32> to vector<1x4xf32>
    %cst_19 = arith.constant 9.99999974E-6 : f32
    %62 = vector.broadcast %cst_19 : f32 to vector<1x4xf32>
    %63 = arith.addf %60, %62 : vector<1x4xf32>
    %64 = math.rsqrt %63 : vector<1x4xf32>
    %65 = arith.mulf %61, %64 : vector<1x4xf32>
    %66 = vector.extract_strided_slice %2 {offsets = [1, 0], sizes = [1, 4], strides = [1, 1]} : vector<2x4xf32> to vector<1x4xf32>
    %67 = arith.mulf %55, %65 : vector<1x4xf32>
    %68 = arith.subf %66, %67 : vector<1x4xf32>
    %69 = tpu.concatenate %65, %68 in 0 : vector<1x4xf32>, vector<1x4xf32> -> vector<2x4xf32>
    %cst_20 = arith.constant dense<0.000000e+00> : vector<2x32xf32>
    %70 = tpu.matmul %69, %45, %cst_20 {dimension_numbers = #tpu.dot_dimension_numbers<[1], [0], [0], [1], [0, 0, 1, 1], [], []>} : vector<2x4xf32>, vector<4x32xf32>, vector<2x32xf32> -> vector<2x32xf32>
    %71 = vector.extract_strided_slice %70 {offsets = [0, 0], sizes = [1, 32], strides = [1, 1]} : vector<2x32xf32> to vector<1x32xf32>
    %72 = vector.broadcast %71 : vector<1x32xf32> to vector<16x32xf32>
    %73 = arith.mulf %38, %72 : vector<16x32xf32>
    %74 = vector.extract_strided_slice %70 {offsets = [1, 0], sizes = [1, 32], strides = [1, 1]} : vector<2x32xf32> to vector<1x32xf32>
    %75 = vector.broadcast %74 : vector<1x32xf32> to vector<16x32xf32>
    %76 = arith.addf %73, %75 : vector<16x32xf32>
    %cst_21 = arith.constant 0.000000e+00 : f32
    %77 = vector.broadcast %cst_21 : f32 to vector<16x32xf32>
    %78 = arith.maximumf %76, %77 : vector<16x32xf32>
    %c0_22 = arith.constant 0 : index
    %c0_23 = arith.constant 0 : index
    %79 = vector.load %arg2[%c0_22, %c0_23] : memref<96x32xf32, #tpu.memory_space<vmem>>, vector<96x32xf32>
    %c0_24 = arith.constant 0 : index
    %c0_25 = arith.constant 0 : index
    %80 = vector.load %arg5[%c0_24, %c0_25] : memref<2x8xf32, #tpu.memory_space<vmem>>, vector<2x8xf32>
    %81 = tpu.iota {dimensions = array<i32: 0>} : vector<4x8xi32>
    %82 = tpu.iota {dimensions = array<i32: 1>} : vector<4x8xi32>
    %c2_i32_26 = arith.constant 2 : i32
    %83 = vector.broadcast %c2_i32_26 : i32 to vector<4x8xi32>
    %84 = arith.muli %83, %81 : vector<4x8xi32>
    %c-1_i32_27 = arith.constant -1 : i32
    %85 = vector.broadcast %c-1_i32_27 : i32 to vector<4x8xi32>
    %86 = arith.addi %84, %85 : vector<4x8xi32>
    %87 = arith.cmpi eq, %82, %86 : vector<4x8xi32>
    %88 = arith.extui %87 : vector<4x8xi1> to vector<4x8xi32>
    %89 = arith.sitofp %88 : vector<4x8xi32> to vector<4x8xf32>
    %c2_i32_28 = arith.constant 2 : i32
    %90 = vector.broadcast %c2_i32_28 : i32 to vector<4x8xi32>
    %91 = arith.muli %90, %81 : vector<4x8xi32>
    %c0_i32_29 = arith.constant 0 : i32
    %92 = vector.broadcast %c0_i32_29 : i32 to vector<4x8xi32>
    %93 = arith.addi %91, %92 : vector<4x8xi32>
    %94 = arith.cmpi eq, %82, %93 : vector<4x8xi32>
    %95 = arith.extui %94 : vector<4x8xi1> to vector<4x8xi32>
    %96 = arith.sitofp %95 : vector<4x8xi32> to vector<4x8xf32>
    %c2_i32_30 = arith.constant 2 : i32
    %97 = vector.broadcast %c2_i32_30 : i32 to vector<4x8xi32>
    %98 = arith.muli %97, %81 : vector<4x8xi32>
    %c1_i32_31 = arith.constant 1 : i32
    %99 = vector.broadcast %c1_i32_31 : i32 to vector<4x8xi32>
    %100 = arith.addi %98, %99 : vector<4x8xi32>
    %101 = arith.cmpi eq, %82, %100 : vector<4x8xi32>
    %102 = arith.extui %101 : vector<4x8xi1> to vector<4x8xi32>
    %103 = arith.sitofp %102 : vector<4x8xi32> to vector<4x8xf32>
    %104 = vector.extract_strided_slice %78 {offsets = [0, 0], sizes = [8, 32], strides = [1, 1]} : vector<16x32xf32> to vector<8x32xf32>
    %cst_32 = arith.constant dense<0.000000e+00> : vector<4x32xf32>
    %105 = tpu.matmul %89, %104, %cst_32 {dimension_numbers = #tpu.dot_dimension_numbers<[1], [0], [0], [1], [0, 0, 1, 1], [], []>} : vector<4x8xf32>, vector<8x32xf32>, vector<4x32xf32> -> vector<4x32xf32>
    %cst_33 = arith.constant dense<0.000000e+00> : vector<4x32xf32>
    %106 = tpu.matmul %96, %104, %cst_33 {dimension_numbers = #tpu.dot_dimension_numbers<[1], [0], [0], [1], [0, 0, 1, 1], [], []>} : vector<4x8xf32>, vector<8x32xf32>, vector<4x32xf32> -> vector<4x32xf32>
    %cst_34 = arith.constant dense<0.000000e+00> : vector<4x32xf32>
    %107 = tpu.matmul %103, %104, %cst_34 {dimension_numbers = #tpu.dot_dimension_numbers<[1], [0], [0], [1], [0, 0, 1, 1], [], []>} : vector<4x8xf32>, vector<8x32xf32>, vector<4x32xf32> -> vector<4x32xf32>
    %108 = tpu.concatenate %105, %106, %107 in 1 : vector<4x32xf32>, vector<4x32xf32>, vector<4x32xf32> -> vector<4x96xf32>
    %cst_35 = arith.constant dense<0.000000e+00> : vector<4x32xf32>
    %109 = tpu.matmul %108, %79, %cst_35 {dimension_numbers = #tpu.dot_dimension_numbers<[1], [0], [0], [1], [0, 0, 1, 1], [], []>} : vector<4x96xf32>, vector<96x32xf32>, vector<4x32xf32> -> vector<4x32xf32>
    %110 = vector.extract_strided_slice %78 {offsets = [8, 0], sizes = [8, 32], strides = [1, 1]} : vector<16x32xf32> to vector<8x32xf32>
    %cst_36 = arith.constant dense<0.000000e+00> : vector<4x32xf32>
    %111 = tpu.matmul %89, %110, %cst_36 {dimension_numbers = #tpu.dot_dimension_numbers<[1], [0], [0], [1], [0, 0, 1, 1], [], []>} : vector<4x8xf32>, vector<8x32xf32>, vector<4x32xf32> -> vector<4x32xf32>
    %cst_37 = arith.constant dense<0.000000e+00> : vector<4x32xf32>
    %112 = tpu.matmul %96, %110, %cst_37 {dimension_numbers = #tpu.dot_dimension_numbers<[1], [0], [0], [1], [0, 0, 1, 1], [], []>} : vector<4x8xf32>, vector<8x32xf32>, vector<4x32xf32> -> vector<4x32xf32>
    %cst_38 = arith.constant dense<0.000000e+00> : vector<4x32xf32>
    %113 = tpu.matmul %103, %110, %cst_38 {dimension_numbers = #tpu.dot_dimension_numbers<[1], [0], [0], [1], [0, 0, 1, 1], [], []>} : vector<4x8xf32>, vector<8x32xf32>, vector<4x32xf32> -> vector<4x32xf32>
    %114 = tpu.concatenate %111, %112, %113 in 1 : vector<4x32xf32>, vector<4x32xf32>, vector<4x32xf32> -> vector<4x96xf32>
    %cst_39 = arith.constant dense<0.000000e+00> : vector<4x32xf32>
    %115 = tpu.matmul %114, %79, %cst_39 {dimension_numbers = #tpu.dot_dimension_numbers<[1], [0], [0], [1], [0, 0, 1, 1], [], []>} : vector<4x96xf32>, vector<96x32xf32>, vector<4x32xf32> -> vector<4x32xf32>
    %116 = tpu.concatenate %109, %115 in 0 : vector<4x32xf32>, vector<4x32xf32> -> vector<8x32xf32>
    %117 = tpu.iota {dimensions = array<i32: 0>} : vector<8x8xi32>
    %118 = tpu.iota {dimensions = array<i32: 1>} : vector<8x8xi32>
    %119 = arith.cmpi eq, %117, %118 : vector<8x8xi32>
    %120 = arith.extui %119 : vector<8x8xi1> to vector<8x8xi32>
    %121 = arith.sitofp %120 : vector<8x8xi32> to vector<8x8xf32>
    %122 = tpu.concatenate %121, %121, %121, %121 in 0 : vector<8x8xf32>, vector<8x8xf32>, vector<8x8xf32>, vector<8x8xf32> -> vector<32x8xf32>
    %123 = tpu.concatenate %121, %121, %121, %121 in 1 : vector<8x8xf32>, vector<8x8xf32>, vector<8x8xf32>, vector<8x8xf32> -> vector<8x32xf32>
    %cst_40 = arith.constant dense<0.000000e+00> : vector<32xf32>
    %124 = vector.multi_reduction <add>, %116, %cst_40 [0] : vector<8x32xf32> to vector<32xf32>
    %125 = vector.shape_cast %124 : vector<32xf32> to vector<1x32xf32>
    %126 = arith.mulf %116, %116 : vector<8x32xf32>
    %cst_41 = arith.constant dense<0.000000e+00> : vector<32xf32>
    %127 = vector.multi_reduction <add>, %126, %cst_41 [0] : vector<8x32xf32> to vector<32xf32>
    %128 = vector.shape_cast %127 : vector<32xf32> to vector<1x32xf32>
    %129 = tpu.concatenate %125, %128 in 0 : vector<1x32xf32>, vector<1x32xf32> -> vector<2x32xf32>
    %cst_42 = arith.constant dense<0.000000e+00> : vector<2x8xf32>
    %130 = tpu.matmul %129, %122, %cst_42 {dimension_numbers = #tpu.dot_dimension_numbers<[1], [0], [0], [1], [0, 0, 1, 1], [], []>} : vector<2x32xf32>, vector<32x8xf32>, vector<2x8xf32> -> vector<2x8xf32>
    %131 = vector.extract_strided_slice %130 {offsets = [0, 0], sizes = [1, 8], strides = [1, 1]} : vector<2x8xf32> to vector<1x8xf32>
    %cst_43 = arith.constant 3.125000e-02 : f32
    %132 = vector.broadcast %cst_43 : f32 to vector<1x8xf32>
    %133 = arith.mulf %131, %132 : vector<1x8xf32>
    %134 = vector.extract_strided_slice %130 {offsets = [1, 0], sizes = [1, 8], strides = [1, 1]} : vector<2x8xf32> to vector<1x8xf32>
    %cst_44 = arith.constant 3.125000e-02 : f32
    %135 = vector.broadcast %cst_44 : f32 to vector<1x8xf32>
    %136 = arith.mulf %134, %135 : vector<1x8xf32>
    %137 = arith.mulf %133, %133 : vector<1x8xf32>
    %138 = arith.subf %136, %137 : vector<1x8xf32>
    %139 = vector.extract_strided_slice %80 {offsets = [0, 0], sizes = [1, 8], strides = [1, 1]} : vector<2x8xf32> to vector<1x8xf32>
    %cst_45 = arith.constant 9.99999974E-6 : f32
    %140 = vector.broadcast %cst_45 : f32 to vector<1x8xf32>
    %141 = arith.addf %138, %140 : vector<1x8xf32>
    %142 = math.rsqrt %141 : vector<1x8xf32>
    %143 = arith.mulf %139, %142 : vector<1x8xf32>
    %144 = vector.extract_strided_slice %80 {offsets = [1, 0], sizes = [1, 8], strides = [1, 1]} : vector<2x8xf32> to vector<1x8xf32>
    %145 = arith.mulf %133, %143 : vector<1x8xf32>
    %146 = arith.subf %144, %145 : vector<1x8xf32>
    %147 = tpu.concatenate %143, %146 in 0 : vector<1x8xf32>, vector<1x8xf32> -> vector<2x8xf32>
    %cst_46 = arith.constant dense<0.000000e+00> : vector<2x32xf32>
    %148 = tpu.matmul %147, %123, %cst_46 {dimension_numbers = #tpu.dot_dimension_numbers<[1], [0], [0], [1], [0, 0, 1, 1], [], []>} : vector<2x8xf32>, vector<8x32xf32>, vector<2x32xf32> -> vector<2x32xf32>
    %149 = vector.extract_strided_slice %148 {offsets = [0, 0], sizes = [1, 32], strides = [1, 1]} : vector<2x32xf32> to vector<1x32xf32>
    %150 = vector.broadcast %149 : vector<1x32xf32> to vector<8x32xf32>
    %151 = arith.mulf %116, %150 : vector<8x32xf32>
    %152 = vector.extract_strided_slice %148 {offsets = [1, 0], sizes = [1, 32], strides = [1, 1]} : vector<2x32xf32> to vector<1x32xf32>
    %153 = vector.broadcast %152 : vector<1x32xf32> to vector<8x32xf32>
    %154 = arith.addf %151, %153 : vector<8x32xf32>
    %cst_47 = arith.constant 0.000000e+00 : f32
    %155 = vector.broadcast %cst_47 : f32 to vector<8x32xf32>
    %156 = arith.maximumf %154, %155 : vector<8x32xf32>
    %c0_48 = arith.constant 0 : index
    %c0_49 = arith.constant 0 : index
    %157 = vector.load %arg3[%c0_48, %c0_49] : memref<96x32xf32, #tpu.memory_space<vmem>>, vector<96x32xf32>
    %c0_50 = arith.constant 0 : index
    %c0_51 = arith.constant 0 : index
    %158 = vector.load %arg6[%c0_50, %c0_51] : memref<2x16xf32, #tpu.memory_space<vmem>>, vector<2x16xf32>
    %159 = tpu.iota {dimensions = array<i32: 0>} : vector<2x4xi32>
    %160 = tpu.iota {dimensions = array<i32: 1>} : vector<2x4xi32>
    %c2_i32_52 = arith.constant 2 : i32
    %161 = vector.broadcast %c2_i32_52 : i32 to vector<2x4xi32>
    %162 = arith.muli %161, %159 : vector<2x4xi32>
    %c-1_i32_53 = arith.constant -1 : i32
    %163 = vector.broadcast %c-1_i32_53 : i32 to vector<2x4xi32>
    %164 = arith.addi %162, %163 : vector<2x4xi32>
    %165 = arith.cmpi eq, %160, %164 : vector<2x4xi32>
    %166 = arith.extui %165 : vector<2x4xi1> to vector<2x4xi32>
    %167 = arith.sitofp %166 : vector<2x4xi32> to vector<2x4xf32>
    %c2_i32_54 = arith.constant 2 : i32
    %168 = vector.broadcast %c2_i32_54 : i32 to vector<2x4xi32>
    %169 = arith.muli %168, %159 : vector<2x4xi32>
    %c0_i32_55 = arith.constant 0 : i32
    %170 = vector.broadcast %c0_i32_55 : i32 to vector<2x4xi32>
    %171 = arith.addi %169, %170 : vector<2x4xi32>
    %172 = arith.cmpi eq, %160, %171 : vector<2x4xi32>
    %173 = arith.extui %172 : vector<2x4xi1> to vector<2x4xi32>
    %174 = arith.sitofp %173 : vector<2x4xi32> to vector<2x4xf32>
    %c2_i32_56 = arith.constant 2 : i32
    %175 = vector.broadcast %c2_i32_56 : i32 to vector<2x4xi32>
    %176 = arith.muli %175, %159 : vector<2x4xi32>
    %c1_i32_57 = arith.constant 1 : i32
    %177 = vector.broadcast %c1_i32_57 : i32 to vector<2x4xi32>
    %178 = arith.addi %176, %177 : vector<2x4xi32>
    %179 = arith.cmpi eq, %160, %178 : vector<2x4xi32>
    %180 = arith.extui %179 : vector<2x4xi1> to vector<2x4xi32>
    %181 = arith.sitofp %180 : vector<2x4xi32> to vector<2x4xf32>
    %182 = vector.extract_strided_slice %156 {offsets = [0, 0], sizes = [4, 32], strides = [1, 1]} : vector<8x32xf32> to vector<4x32xf32>
    %cst_58 = arith.constant dense<0.000000e+00> : vector<2x32xf32>
    %183 = tpu.matmul %167, %182, %cst_58 {dimension_numbers = #tpu.dot_dimension_numbers<[1], [0], [0], [1], [0, 0, 1, 1], [], []>} : vector<2x4xf32>, vector<4x32xf32>, vector<2x32xf32> -> vector<2x32xf32>
    %cst_59 = arith.constant dense<0.000000e+00> : vector<2x32xf32>
    %184 = tpu.matmul %174, %182, %cst_59 {dimension_numbers = #tpu.dot_dimension_numbers<[1], [0], [0], [1], [0, 0, 1, 1], [], []>} : vector<2x4xf32>, vector<4x32xf32>, vector<2x32xf32> -> vector<2x32xf32>
    %cst_60 = arith.constant dense<0.000000e+00> : vector<2x32xf32>
    %185 = tpu.matmul %181, %182, %cst_60 {dimension_numbers = #tpu.dot_dimension_numbers<[1], [0], [0], [1], [0, 0, 1, 1], [], []>} : vector<2x4xf32>, vector<4x32xf32>, vector<2x32xf32> -> vector<2x32xf32>
    %186 = tpu.concatenate %183, %184, %185 in 1 : vector<2x32xf32>, vector<2x32xf32>, vector<2x32xf32> -> vector<2x96xf32>
    %cst_61 = arith.constant dense<0.000000e+00> : vector<2x32xf32>
    %187 = tpu.matmul %186, %157, %cst_61 {dimension_numbers = #tpu.dot_dimension_numbers<[1], [0], [0], [1], [0, 0, 1, 1], [], []>} : vector<2x96xf32>, vector<96x32xf32>, vector<2x32xf32> -> vector<2x32xf32>
    %188 = vector.extract_strided_slice %156 {offsets = [4, 0], sizes = [4, 32], strides = [1, 1]} : vector<8x32xf32> to vector<4x32xf32>
    %cst_62 = arith.constant dense<0.000000e+00> : vector<2x32xf32>
    %189 = tpu.matmul %167, %188, %cst_62 {dimension_numbers = #tpu.dot_dimension_numbers<[1], [0], [0], [1], [0, 0, 1, 1], [], []>} : vector<2x4xf32>, vector<4x32xf32>, vector<2x32xf32> -> vector<2x32xf32>
    %cst_63 = arith.constant dense<0.000000e+00> : vector<2x32xf32>
    %190 = tpu.matmul %174, %188, %cst_63 {dimension_numbers = #tpu.dot_dimension_numbers<[1], [0], [0], [1], [0, 0, 1, 1], [], []>} : vector<2x4xf32>, vector<4x32xf32>, vector<2x32xf32> -> vector<2x32xf32>
    %cst_64 = arith.constant dense<0.000000e+00> : vector<2x32xf32>
    %191 = tpu.matmul %181, %188, %cst_64 {dimension_numbers = #tpu.dot_dimension_numbers<[1], [0], [0], [1], [0, 0, 1, 1], [], []>} : vector<2x4xf32>, vector<4x32xf32>, vector<2x32xf32> -> vector<2x32xf32>
    %192 = tpu.concatenate %189, %190, %191 in 1 : vector<2x32xf32>, vector<2x32xf32>, vector<2x32xf32> -> vector<2x96xf32>
    %cst_65 = arith.constant dense<0.000000e+00> : vector<2x32xf32>
    %193 = tpu.matmul %192, %157, %cst_65 {dimension_numbers = #tpu.dot_dimension_numbers<[1], [0], [0], [1], [0, 0, 1, 1], [], []>} : vector<2x96xf32>, vector<96x32xf32>, vector<2x32xf32> -> vector<2x32xf32>
    %194 = tpu.concatenate %187, %193 in 0 : vector<2x32xf32>, vector<2x32xf32> -> vector<4x32xf32>
    %195 = tpu.iota {dimensions = array<i32: 0>} : vector<16x16xi32>
    %196 = tpu.iota {dimensions = array<i32: 1>} : vector<16x16xi32>
    %197 = arith.cmpi eq, %195, %196 : vector<16x16xi32>
    %198 = arith.extui %197 : vector<16x16xi1> to vector<16x16xi32>
    %199 = arith.sitofp %198 : vector<16x16xi32> to vector<16x16xf32>
    %200 = tpu.concatenate %199, %199 in 0 : vector<16x16xf32>, vector<16x16xf32> -> vector<32x16xf32>
    %201 = tpu.concatenate %199, %199 in 1 : vector<16x16xf32>, vector<16x16xf32> -> vector<16x32xf32>
    %cst_66 = arith.constant dense<0.000000e+00> : vector<32xf32>
    %202 = vector.multi_reduction <add>, %194, %cst_66 [0] : vector<4x32xf32> to vector<32xf32>
    %203 = vector.shape_cast %202 : vector<32xf32> to vector<1x32xf32>
    %204 = arith.mulf %194, %194 : vector<4x32xf32>
    %cst_67 = arith.constant dense<0.000000e+00> : vector<32xf32>
    %205 = vector.multi_reduction <add>, %204, %cst_67 [0] : vector<4x32xf32> to vector<32xf32>
    %206 = vector.shape_cast %205 : vector<32xf32> to vector<1x32xf32>
    %207 = tpu.concatenate %203, %206 in 0 : vector<1x32xf32>, vector<1x32xf32> -> vector<2x32xf32>
    %cst_68 = arith.constant dense<0.000000e+00> : vector<2x16xf32>
    %208 = tpu.matmul %207, %200, %cst_68 {dimension_numbers = #tpu.dot_dimension_numbers<[1], [0], [0], [1], [0, 0, 1, 1], [], []>} : vector<2x32xf32>, vector<32x16xf32>, vector<2x16xf32> -> vector<2x16xf32>
    %209 = vector.extract_strided_slice %208 {offsets = [0, 0], sizes = [1, 16], strides = [1, 1]} : vector<2x16xf32> to vector<1x16xf32>
    %cst_69 = arith.constant 1.250000e-01 : f32
    %210 = vector.broadcast %cst_69 : f32 to vector<1x16xf32>
    %211 = arith.mulf %209, %210 : vector<1x16xf32>
    %212 = vector.extract_strided_slice %208 {offsets = [1, 0], sizes = [1, 16], strides = [1, 1]} : vector<2x16xf32> to vector<1x16xf32>
    %cst_70 = arith.constant 1.250000e-01 : f32
    %213 = vector.broadcast %cst_70 : f32 to vector<1x16xf32>
    %214 = arith.mulf %212, %213 : vector<1x16xf32>
    %215 = arith.mulf %211, %211 : vector<1x16xf32>
    %216 = arith.subf %214, %215 : vector<1x16xf32>
    %217 = vector.extract_strided_slice %158 {offsets = [0, 0], sizes = [1, 16], strides = [1, 1]} : vector<2x16xf32> to vector<1x16xf32>
    %cst_71 = arith.constant 9.99999974E-6 : f32
    %218 = vector.broadcast %cst_71 : f32 to vector<1x16xf32>
    %219 = arith.addf %216, %218 : vector<1x16xf32>
    %220 = math.rsqrt %219 : vector<1x16xf32>
    %221 = arith.mulf %217, %220 : vector<1x16xf32>
    %222 = vector.extract_strided_slice %158 {offsets = [1, 0], sizes = [1, 16], strides = [1, 1]} : vector<2x16xf32> to vector<1x16xf32>
    %223 = arith.mulf %211, %221 : vector<1x16xf32>
    %224 = arith.subf %222, %223 : vector<1x16xf32>
    %225 = tpu.concatenate %221, %224 in 0 : vector<1x16xf32>, vector<1x16xf32> -> vector<2x16xf32>
    %cst_72 = arith.constant dense<0.000000e+00> : vector<2x32xf32>
    %226 = tpu.matmul %225, %201, %cst_72 {dimension_numbers = #tpu.dot_dimension_numbers<[1], [0], [0], [1], [0, 0, 1, 1], [], []>} : vector<2x16xf32>, vector<16x32xf32>, vector<2x32xf32> -> vector<2x32xf32>
    %227 = vector.extract_strided_slice %226 {offsets = [0, 0], sizes = [1, 32], strides = [1, 1]} : vector<2x32xf32> to vector<1x32xf32>
    %228 = vector.broadcast %227 : vector<1x32xf32> to vector<4x32xf32>
    %229 = arith.mulf %194, %228 : vector<4x32xf32>
    %230 = vector.extract_strided_slice %226 {offsets = [1, 0], sizes = [1, 32], strides = [1, 1]} : vector<2x32xf32> to vector<1x32xf32>
    %231 = vector.broadcast %230 : vector<1x32xf32> to vector<4x32xf32>
    %232 = arith.addf %229, %231 : vector<4x32xf32>
    %cst_73 = arith.constant 0.000000e+00 : f32
    %233 = vector.broadcast %cst_73 : f32 to vector<4x32xf32>
    %234 = arith.maximumf %232, %233 : vector<4x32xf32>
    %c0_74 = arith.constant 0 : index
    %c0_75 = arith.constant 0 : index
    %235 = vector.load %arg7[%c0_74, %c0_75] : memref<32x48xf32, #tpu.memory_space<vmem>>, vector<32x48xf32>
    %c0_76 = arith.constant 0 : index
    %c0_77 = arith.constant 0 : index
    %236 = vector.load %arg8[%c0_76, %c0_77] : memref<16x48xf32, #tpu.memory_space<vmem>>, vector<16x48xf32>
    %c0_78 = arith.constant 0 : index
    %c0_79 = arith.constant 0 : index
    %237 = vector.load %arg9[%c0_78, %c0_79] : memref<2x48xf32, #tpu.memory_space<vmem>>, vector<2x48xf32>
    %238 = vector.extract_strided_slice %237 {offsets = [0, 0], sizes = [1, 48], strides = [1, 1]} : vector<2x48xf32> to vector<1x48xf32>
    %239 = vector.extract_strided_slice %237 {offsets = [1, 0], sizes = [1, 48], strides = [1, 1]} : vector<2x48xf32> to vector<1x48xf32>
    %240 = vector.extract_strided_slice %234 {offsets = [0, 0], sizes = [2, 32], strides = [1, 1]} : vector<4x32xf32> to vector<2x32xf32>
    %cst_80 = arith.constant dense<0.000000e+00> : vector<2x48xf32>
    %241 = tpu.matmul %240, %235, %cst_80 {dimension_numbers = #tpu.dot_dimension_numbers<[1], [0], [0], [1], [0, 0, 1, 1], [], []>} : vector<2x32xf32>, vector<32x48xf32>, vector<2x48xf32> -> vector<2x48xf32>
    %242 = vector.broadcast %238 : vector<1x48xf32> to vector<2x48xf32>
    %243 = arith.addf %241, %242 : vector<2x48xf32>
    %244 = vector.extract_strided_slice %234 {offsets = [2, 0], sizes = [2, 32], strides = [1, 1]} : vector<4x32xf32> to vector<2x32xf32>
    %cst_81 = arith.constant dense<0.000000e+00> : vector<2x48xf32>
    %245 = tpu.matmul %244, %235, %cst_81 {dimension_numbers = #tpu.dot_dimension_numbers<[1], [0], [0], [1], [0, 0, 1, 1], [], []>} : vector<2x32xf32>, vector<32x48xf32>, vector<2x48xf32> -> vector<2x48xf32>
    %246 = vector.broadcast %238 : vector<1x48xf32> to vector<2x48xf32>
    %247 = arith.addf %245, %246 : vector<2x48xf32>
    %cst_82 = arith.constant 0.000000e+00 : f32
    %248 = vector.broadcast %cst_82 : f32 to vector<2x16xf32>
    %249 = vector.extract_strided_slice %243 {offsets = [0, 0], sizes = [1, 48], strides = [1, 1]} : vector<2x48xf32> to vector<1x48xf32>
    %250 = vector.extract_strided_slice %247 {offsets = [0, 0], sizes = [1, 48], strides = [1, 1]} : vector<2x48xf32> to vector<1x48xf32>
    %251 = tpu.concatenate %249, %250 in 0 : vector<1x48xf32>, vector<1x48xf32> -> vector<2x48xf32>
    %cst_83 = arith.constant dense<0.000000e+00> : vector<2x48xf32>
    %252 = tpu.matmul %248, %236, %cst_83 {dimension_numbers = #tpu.dot_dimension_numbers<[1], [0], [0], [1], [0, 0, 1, 1], [], []>} : vector<2x16xf32>, vector<16x48xf32>, vector<2x48xf32> -> vector<2x48xf32>
    %253 = vector.broadcast %239 : vector<1x48xf32> to vector<2x48xf32>
    %254 = arith.addf %252, %253 : vector<2x48xf32>
    %255 = vector.extract_strided_slice %251 {offsets = [0, 0], sizes = [2, 16], strides = [1, 1]} : vector<2x48xf32> to vector<2x16xf32>
    %256 = vector.extract_strided_slice %254 {offsets = [0, 0], sizes = [2, 16], strides = [1, 1]} : vector<2x48xf32> to vector<2x16xf32>
    %257 = arith.addf %255, %256 : vector<2x16xf32>
    %258 = arith.negf %257 : vector<2x16xf32>
    %259 = math.exp %258 : vector<2x16xf32>
    %cst_84 = arith.constant 1.000000e+00 : f32
    %260 = vector.broadcast %cst_84 : f32 to vector<2x16xf32>
    %261 = arith.addf %260, %259 : vector<2x16xf32>
    %262 = arith.divf %260, %261 : vector<2x16xf32>
    %263 = vector.extract_strided_slice %251 {offsets = [0, 16], sizes = [2, 16], strides = [1, 1]} : vector<2x48xf32> to vector<2x16xf32>
    %264 = vector.extract_strided_slice %254 {offsets = [0, 16], sizes = [2, 16], strides = [1, 1]} : vector<2x48xf32> to vector<2x16xf32>
    %265 = arith.addf %263, %264 : vector<2x16xf32>
    %266 = arith.negf %265 : vector<2x16xf32>
    %267 = math.exp %266 : vector<2x16xf32>
    %cst_85 = arith.constant 1.000000e+00 : f32
    %268 = vector.broadcast %cst_85 : f32 to vector<2x16xf32>
    %269 = arith.addf %268, %267 : vector<2x16xf32>
    %270 = arith.divf %268, %269 : vector<2x16xf32>
    %271 = vector.extract_strided_slice %251 {offsets = [0, 32], sizes = [2, 16], strides = [1, 1]} : vector<2x48xf32> to vector<2x16xf32>
    %272 = vector.extract_strided_slice %254 {offsets = [0, 32], sizes = [2, 16], strides = [1, 1]} : vector<2x48xf32> to vector<2x16xf32>
    %273 = arith.mulf %262, %272 : vector<2x16xf32>
    %274 = arith.addf %271, %273 : vector<2x16xf32>
    %275 = math.tanh %274 : vector<2x16xf32>
    %cst_86 = arith.constant 1.000000e+00 : f32
    %276 = vector.broadcast %cst_86 : f32 to vector<2x16xf32>
    %277 = arith.subf %276, %270 : vector<2x16xf32>
    %278 = arith.mulf %277, %275 : vector<2x16xf32>
    %279 = arith.mulf %270, %248 : vector<2x16xf32>
    %280 = arith.addf %278, %279 : vector<2x16xf32>
    %281 = vector.extract_strided_slice %243 {offsets = [1, 0], sizes = [1, 48], strides = [1, 1]} : vector<2x48xf32> to vector<1x48xf32>
    %282 = vector.extract_strided_slice %247 {offsets = [1, 0], sizes = [1, 48], strides = [1, 1]} : vector<2x48xf32> to vector<1x48xf32>
    %283 = tpu.concatenate %281, %282 in 0 : vector<1x48xf32>, vector<1x48xf32> -> vector<2x48xf32>
    %cst_87 = arith.constant dense<0.000000e+00> : vector<2x48xf32>
    %284 = tpu.matmul %280, %236, %cst_87 {dimension_numbers = #tpu.dot_dimension_numbers<[1], [0], [0], [1], [0, 0, 1, 1], [], []>} : vector<2x16xf32>, vector<16x48xf32>, vector<2x48xf32> -> vector<2x48xf32>
    %285 = vector.broadcast %239 : vector<1x48xf32> to vector<2x48xf32>
    %286 = arith.addf %284, %285 : vector<2x48xf32>
    %287 = vector.extract_strided_slice %283 {offsets = [0, 0], sizes = [2, 16], strides = [1, 1]} : vector<2x48xf32> to vector<2x16xf32>
    %288 = vector.extract_strided_slice %286 {offsets = [0, 0], sizes = [2, 16], strides = [1, 1]} : vector<2x48xf32> to vector<2x16xf32>
    %289 = arith.addf %287, %288 : vector<2x16xf32>
    %290 = arith.negf %289 : vector<2x16xf32>
    %291 = math.exp %290 : vector<2x16xf32>
    %cst_88 = arith.constant 1.000000e+00 : f32
    %292 = vector.broadcast %cst_88 : f32 to vector<2x16xf32>
    %293 = arith.addf %292, %291 : vector<2x16xf32>
    %294 = arith.divf %292, %293 : vector<2x16xf32>
    %295 = vector.extract_strided_slice %283 {offsets = [0, 16], sizes = [2, 16], strides = [1, 1]} : vector<2x48xf32> to vector<2x16xf32>
    %296 = vector.extract_strided_slice %286 {offsets = [0, 16], sizes = [2, 16], strides = [1, 1]} : vector<2x48xf32> to vector<2x16xf32>
    %297 = arith.addf %295, %296 : vector<2x16xf32>
    %298 = arith.negf %297 : vector<2x16xf32>
    %299 = math.exp %298 : vector<2x16xf32>
    %cst_89 = arith.constant 1.000000e+00 : f32
    %300 = vector.broadcast %cst_89 : f32 to vector<2x16xf32>
    %301 = arith.addf %300, %299 : vector<2x16xf32>
    %302 = arith.divf %300, %301 : vector<2x16xf32>
    %303 = vector.extract_strided_slice %283 {offsets = [0, 32], sizes = [2, 16], strides = [1, 1]} : vector<2x48xf32> to vector<2x16xf32>
    %304 = vector.extract_strided_slice %286 {offsets = [0, 32], sizes = [2, 16], strides = [1, 1]} : vector<2x48xf32> to vector<2x16xf32>
    %305 = arith.mulf %294, %304 : vector<2x16xf32>
    %306 = arith.addf %303, %305 : vector<2x16xf32>
    %307 = math.tanh %306 : vector<2x16xf32>
    %cst_90 = arith.constant 1.000000e+00 : f32
    %308 = vector.broadcast %cst_90 : f32 to vector<2x16xf32>
    %309 = arith.subf %308, %302 : vector<2x16xf32>
    %310 = arith.mulf %309, %307 : vector<2x16xf32>
    %311 = arith.mulf %302, %280 : vector<2x16xf32>
    %312 = arith.addf %310, %311 : vector<2x16xf32>
    %c0_91 = arith.constant 0 : index
    %c0_92 = arith.constant 0 : index
    %313 = vector.load %arg10[%c0_91, %c0_92] : memref<10x8xf32, #tpu.memory_space<vmem>>, vector<10x8xf32>
    %314 = math.tanh %313 : vector<10x8xf32>
    %c0_93 = arith.constant 0 : index
    %c0_94 = arith.constant 0 : index
    %315 = vector.load %arg11[%c0_93, %c0_94] : memref<16x32xf32, #tpu.memory_space<vmem>>, vector<16x32xf32>
    %cst_95 = arith.constant dense<0.000000e+00> : vector<2x32xf32>
    %316 = tpu.matmul %312, %315, %cst_95 {dimension_numbers = #tpu.dot_dimension_numbers<[1], [0], [0], [1], [0, 0, 1, 1], [], []>} : vector<2x16xf32>, vector<16x32xf32>, vector<2x32xf32> -> vector<2x32xf32>
    %c0_96 = arith.constant 0 : index
    %c0_97 = arith.constant 0 : index
    %317 = vector.load %arg12[%c0_96, %c0_97] : memref<8x64xf32, #tpu.memory_space<vmem>>, vector<8x64xf32>
    %cst_98 = arith.constant dense<0.000000e+00> : vector<10x64xf32>
    %318 = tpu.matmul %314, %317, %cst_98 {dimension_numbers = #tpu.dot_dimension_numbers<[1], [0], [0], [1], [0, 0, 1, 1], [], []>} : vector<10x8xf32>, vector<8x64xf32>, vector<10x64xf32> -> vector<10x64xf32>
    %319 = vector.extract_strided_slice %318 {offsets = [0, 0], sizes = [10, 32], strides = [1, 1]} : vector<10x64xf32> to vector<10x32xf32>
    %320 = vector.extract_strided_slice %318 {offsets = [0, 32], sizes = [10, 32], strides = [1, 1]} : vector<10x64xf32> to vector<10x32xf32>
    %321 = vector.extract_strided_slice %316 {offsets = [0, 0], sizes = [2, 8], strides = [1, 1]} : vector<2x32xf32> to vector<2x8xf32>
    %322 = vector.extract_strided_slice %319 {offsets = [0, 0], sizes = [10, 8], strides = [1, 1]} : vector<10x32xf32> to vector<10x8xf32>
    %323 = tpu.transpose %322, [1, 0] : vector<10x8xf32> -> vector<8x10xf32>
    %cst_99 = arith.constant dense<0.000000e+00> : vector<2x10xf32>
    %324 = tpu.matmul %321, %323, %cst_99 {dimension_numbers = #tpu.dot_dimension_numbers<[1], [0], [0], [1], [0, 0, 1, 1], [], []>} : vector<2x8xf32>, vector<8x10xf32>, vector<2x10xf32> -> vector<2x10xf32>
    %325 = vector.extract_strided_slice %316 {offsets = [0, 8], sizes = [2, 8], strides = [1, 1]} : vector<2x32xf32> to vector<2x8xf32>
    %326 = vector.extract_strided_slice %319 {offsets = [0, 8], sizes = [10, 8], strides = [1, 1]} : vector<10x32xf32> to vector<10x8xf32>
    %327 = tpu.transpose %326, [1, 0] : vector<10x8xf32> -> vector<8x10xf32>
    %cst_100 = arith.constant dense<0.000000e+00> : vector<2x10xf32>
    %328 = tpu.matmul %325, %327, %cst_100 {dimension_numbers = #tpu.dot_dimension_numbers<[1], [0], [0], [1], [0, 0, 1, 1], [], []>} : vector<2x8xf32>, vector<8x10xf32>, vector<2x10xf32> -> vector<2x10xf32>
    %329 = vector.extract_strided_slice %316 {offsets = [0, 16], sizes = [2, 8], strides = [1, 1]} : vector<2x32xf32> to vector<2x8xf32>
    %330 = vector.extract_strided_slice %319 {offsets = [0, 16], sizes = [10, 8], strides = [1, 1]} : vector<10x32xf32> to vector<10x8xf32>
    %331 = tpu.transpose %330, [1, 0] : vector<10x8xf32> -> vector<8x10xf32>
    %cst_101 = arith.constant dense<0.000000e+00> : vector<2x10xf32>
    %332 = tpu.matmul %329, %331, %cst_101 {dimension_numbers = #tpu.dot_dimension_numbers<[1], [0], [0], [1], [0, 0, 1, 1], [], []>} : vector<2x8xf32>, vector<8x10xf32>, vector<2x10xf32> -> vector<2x10xf32>
    %333 = vector.extract_strided_slice %316 {offsets = [0, 24], sizes = [2, 8], strides = [1, 1]} : vector<2x32xf32> to vector<2x8xf32>
    %334 = vector.extract_strided_slice %319 {offsets = [0, 24], sizes = [10, 8], strides = [1, 1]} : vector<10x32xf32> to vector<10x8xf32>
    %335 = tpu.transpose %334, [1, 0] : vector<10x8xf32> -> vector<8x10xf32>
    %cst_102 = arith.constant dense<0.000000e+00> : vector<2x10xf32>
    %336 = tpu.matmul %333, %335, %cst_102 {dimension_numbers = #tpu.dot_dimension_numbers<[1], [0], [0], [1], [0, 0, 1, 1], [], []>} : vector<2x8xf32>, vector<8x10xf32>, vector<2x10xf32> -> vector<2x10xf32>
    %337 = tpu.concatenate %324, %328, %332, %336 in 0 : vector<2x10xf32>, vector<2x10xf32>, vector<2x10xf32>, vector<2x10xf32> -> vector<8x10xf32>
    %cst_103 = arith.constant 0.353553385 : f32
    %338 = vector.broadcast %cst_103 : f32 to vector<8x10xf32>
    %339 = arith.mulf %337, %338 : vector<8x10xf32>
    %cst_104 = arith.constant dense<0xFF800000> : vector<8xf32>
    %340 = vector.multi_reduction <maximumf>, %339, %cst_104 [1] : vector<8x10xf32> to vector<8xf32>
    %341 = vector.shape_cast %340 : vector<8xf32> to vector<8x1xf32>
    %342 = vector.broadcast %341 : vector<8x1xf32> to vector<8x10xf32>
    %343 = arith.subf %339, %342 : vector<8x10xf32>
    %344 = math.exp %343 : vector<8x10xf32>
    %cst_105 = arith.constant dense<0.000000e+00> : vector<8xf32>
    %345 = vector.multi_reduction <add>, %344, %cst_105 [1] : vector<8x10xf32> to vector<8xf32>
    %346 = vector.shape_cast %345 : vector<8xf32> to vector<8x1xf32>
    %347 = tpu.reciprocal %346 {approx = true} : vector<8x1xf32> -> vector<8x1xf32>
    %348 = vector.broadcast %347 : vector<8x1xf32> to vector<8x10xf32>
    %349 = arith.mulf %344, %348 : vector<8x10xf32>
    %350 = vector.extract_strided_slice %349 {offsets = [0, 0], sizes = [2, 10], strides = [1, 1]} : vector<8x10xf32> to vector<2x10xf32>
    %351 = vector.extract_strided_slice %320 {offsets = [0, 0], sizes = [10, 8], strides = [1, 1]} : vector<10x32xf32> to vector<10x8xf32>
    %cst_106 = arith.constant dense<0.000000e+00> : vector<2x8xf32>
    %352 = tpu.matmul %350, %351, %cst_106 {dimension_numbers = #tpu.dot_dimension_numbers<[1], [0], [0], [1], [0, 0, 1, 1], [], []>} : vector<2x10xf32>, vector<10x8xf32>, vector<2x8xf32> -> vector<2x8xf32>
    %353 = vector.extract_strided_slice %349 {offsets = [2, 0], sizes = [2, 10], strides = [1, 1]} : vector<8x10xf32> to vector<2x10xf32>
    %354 = vector.extract_strided_slice %320 {offsets = [0, 8], sizes = [10, 8], strides = [1, 1]} : vector<10x32xf32> to vector<10x8xf32>
    %cst_107 = arith.constant dense<0.000000e+00> : vector<2x8xf32>
    %355 = tpu.matmul %353, %354, %cst_107 {dimension_numbers = #tpu.dot_dimension_numbers<[1], [0], [0], [1], [0, 0, 1, 1], [], []>} : vector<2x10xf32>, vector<10x8xf32>, vector<2x8xf32> -> vector<2x8xf32>
    %356 = vector.extract_strided_slice %349 {offsets = [4, 0], sizes = [2, 10], strides = [1, 1]} : vector<8x10xf32> to vector<2x10xf32>
    %357 = vector.extract_strided_slice %320 {offsets = [0, 16], sizes = [10, 8], strides = [1, 1]} : vector<10x32xf32> to vector<10x8xf32>
    %cst_108 = arith.constant dense<0.000000e+00> : vector<2x8xf32>
    %358 = tpu.matmul %356, %357, %cst_108 {dimension_numbers = #tpu.dot_dimension_numbers<[1], [0], [0], [1], [0, 0, 1, 1], [], []>} : vector<2x10xf32>, vector<10x8xf32>, vector<2x8xf32> -> vector<2x8xf32>
    %359 = vector.extract_strided_slice %349 {offsets = [6, 0], sizes = [2, 10], strides = [1, 1]} : vector<8x10xf32> to vector<2x10xf32>
    %360 = vector.extract_strided_slice %320 {offsets = [0, 24], sizes = [10, 8], strides = [1, 1]} : vector<10x32xf32> to vector<10x8xf32>
    %cst_109 = arith.constant dense<0.000000e+00> : vector<2x8xf32>
    %361 = tpu.matmul %359, %360, %cst_109 {dimension_numbers = #tpu.dot_dimension_numbers<[1], [0], [0], [1], [0, 0, 1, 1], [], []>} : vector<2x10xf32>, vector<10x8xf32>, vector<2x8xf32> -> vector<2x8xf32>
    %362 = tpu.concatenate %352, %355, %358, %361 in 1 : vector<2x8xf32>, vector<2x8xf32>, vector<2x8xf32>, vector<2x8xf32> -> vector<2x32xf32>
    %c0_110 = arith.constant 0 : index
    %c0_111 = arith.constant 0 : index
    %363 = vector.load %arg13[%c0_110, %c0_111] : memref<2x32xf32, #tpu.memory_space<vmem>>, vector<2x32xf32>
    tpu.vector_store %arg13[%c0_110, %c0_111], %362 {strides = array<i32>} : memref<2x32xf32, #tpu.memory_space<vmem>>, vector<2x32xf32>,
    return
  }
}

</mosaic_0001>

<llo_original>
// kernel: gst_forward.1
$region0: #{gst_forward.1}
  #allocation0 [shape = 'u32[]', space=smem, size = 0x4, offset = 0x4, fixed_abs, tag = 'smem constant byte address 0x4 - core index']
  #allocation1 [shape = 'u32[144,128]{1,0:T(1,128)}', space=vmem, size = 0x12000, scoped, tag = 'internal scratch']
  %s0 = inlined_call_operand.vmem [shape: f32[32,16], index: 0, kind: input, shape index: {}]
  %s1 = inlined_call_operand.vmem [shape: f32[48,32], index: 1, kind: input, shape index: {}]
  %s2 = inlined_call_operand.vmem [shape: f32[96,32], index: 2, kind: input, shape index: {}]
  %s3 = inlined_call_operand.vmem [shape: f32[96,32], index: 3, kind: input, shape index: {}]
  %s4 = inlined_call_operand.vmem [shape: f32[2,4], index: 4, kind: input, shape index: {}]
  %s5 = inlined_call_operand.vmem [shape: f32[2,8], index: 5, kind: input, shape index: {}]
  %s6 = inlined_call_operand.vmem [shape: f32[2,16], index: 6, kind: input, shape index: {}]
  %s7 = inlined_call_operand.vmem [shape: f32[32,48], index: 7, kind: input, shape index: {}]
  %s8 = inlined_call_operand.vmem [shape: f32[16,48], index: 8, kind: input, shape index: {}]
  %s9 = inlined_call_operand.vmem [shape: f32[2,48], index: 9, kind: input, shape index: {}]
  %s10 = inlined_call_operand.vmem [shape: f32[10,8], index: 10, kind: input, shape index: {}]
  %s11 = inlined_call_operand.vmem [shape: f32[16,32], index: 11, kind: input, shape index: {}]
  %s12 = inlined_call_operand.vmem [shape: f32[8,64], index: 12, kind: input, shape index: {}]
  %s13 = inlined_call_operand.hbm [shape: f32[2,32], index: 13, kind: output, shape index: {}]
  %s14 = sld [smem:[#allocation0]]
  $region62: #{gst_forward.1} parent=0
    _
  %s16 = ssub.s32 1, %s14
  %s17 = scalar_select 0, %s16, %s14
  $region1: #{gst_forward.1} parent=0
    #allocation2 [shape = 'u8[1024]{0}', space=vmem, size = 0x400, scoped, tag = 'output window, operand 0, single buffered']
    #allocation3 [shape = 's32[1]{0}', space=sflag, size = 0x4, scoped, tag = 'scoped memory for gst_forward.1']
    %18 = vsyncpa [#allocation3], 0
    // Predicated region
    $region2: #{gst_forward.1} parent=1 // pred_check
      _
    $region3: #{gst_forward.1} parent=1 // pred_check_branch
      %20 = sbr.rel (0) target = $region5
    $region4: #{gst_forward.1} parent=1 // pred_region
      _
    $region5: #{gst_forward.1} parent=1 // pred_fallthru
      _
    // Predicated region
    $region6: #{gst_forward.1} parent=1 // pred_check
      _
    $region7: #{gst_forward.1} parent=1 // pred_check_branch
      %22 = sbr.rel (0) target = $region9
    $region8: #{gst_forward.1} parent=1 // pred_region
      _
    $region9: #{gst_forward.1} parent=1 // pred_fallthru
      _
    // Predicated region
    $region10: #{gst_forward.1} parent=1 // pred_check
      _
    $region11: #{gst_forward.1} parent=1 // pred_check_branch
      %24 = sbr.rel (0) target = $region13
    $region12: #{gst_forward.1} parent=1 // pred_region
      _
    $region13: #{gst_forward.1} parent=1 // pred_fallthru
      _
    // Predicated region
    $region14: #{gst_forward.1} parent=1 // pred_check
      _
    $region15: #{gst_forward.1} parent=1 // pred_check_branch
      %26 = sbr.rel (0) target = $region17
    $region16: #{gst_forward.1} parent=1 // pred_region
      _
    $region17: #{gst_forward.1} parent=1 // pred_fallthru
      _
    // Predicated region
    $region18: #{gst_forward.1} parent=1 // pred_check
      _
    $region19: #{gst_forward.1} parent=1 // pred_check_branch
      %28 = sbr.rel (0) target = $region21
    $region20: #{gst_forward.1} parent=1 // pred_region
      _
    $region21: #{gst_forward.1} parent=1 // pred_fallthru
      _
    // Predicated region
    $region22: #{gst_forward.1} parent=1 // pred_check
      _
    $region23: #{gst_forward.1} parent=1 // pred_check_branch
      %30 = sbr.rel (0) target = $region25
    $region24: #{gst_forward.1} parent=1 // pred_region
      _
    $region25: #{gst_forward.1} parent=1 // pred_fallthru
      _
    // Predicated region
    $region26: #{gst_forward.1} parent=1 // pred_check
      _
    $region27: #{gst_forward.1} parent=1 // pred_check_branch
      %32 = sbr.rel (0) target = $region29
    $region28: #{gst_forward.1} parent=1 // pred_region
      _
    $region29: #{gst_forward.1} parent=1 // pred_fallthru
      _
    // Predicated region
    $region30: #{gst_forward.1} parent=1 // pred_check
      _
    $region31: #{gst_forward.1} parent=1 // pred_check_branch
      %34 = sbr.rel (0) target = $region33
    $region32: #{gst_forward.1} parent=1 // pred_region
      _
    $region33: #{gst_forward.1} parent=1 // pred_fallthru
      _
    // Predicated region
    $region34: #{gst_forward.1} parent=1 // pred_check
      _
    $region35: #{gst_forward.1} parent=1 // pred_check_branch
      %36 = sbr.rel (0) target = $region37
    $region36: #{gst_forward.1} parent=1 // pred_region
      _
    $region37: #{gst_forward.1} parent=1 // pred_fallthru
      _
    // Predicated region
    $region38: #{gst_forward.1} parent=1 // pred_check
      _
    $region39: #{gst_forward.1} parent=1 // pred_check_branch
      %38 = sbr.rel (0) target = $region41
    $region40: #{gst_forward.1} parent=1 // pred_region
      _
    $region41: #{gst_forward.1} parent=1 // pred_fallthru
      _
    // Predicated region
    $region42: #{gst_forward.1} parent=1 // pred_check
      _
    $region43: #{gst_forward.1} parent=1 // pred_check_branch
      %40 = sbr.rel (0) target = $region45
    $region44: #{gst_forward.1} parent=1 // pred_region
      _
    $region45: #{gst_forward.1} parent=1 // pred_fallthru
      _
    // Predicated region
    $region46: #{gst_forward.1} parent=1 // pred_check
      _
    $region47: #{gst_forward.1} parent=1 // pred_check_branch
      %42 = sbr.rel (0) target = $region49
    $region48: #{gst_forward.1} parent=1 // pred_region
      _
    $region49: #{gst_forward.1} parent=1 // pred_fallthru
      _
    // Predicated region
    $region50: #{gst_forward.1} parent=1 // pred_check
      _
    $region51: #{gst_forward.1} parent=1 // pred_check_branch
      %44 = sbr.rel (0) target = $region53
    $region52: #{gst_forward.1} parent=1 // pred_region
      _
    $region53: #{gst_forward.1} parent=1 // pred_fallthru
      _
    %v45 = vld [vmem:[%s0] sm:$0xff]
    %v46 = vld [vmem:[%s0 + $0x8] sm:$0xff]
    %v47 = vld [vmem:[%s0 + $0x10] sm:$0xff]
    %v48 = vld [vmem:[%s0 + $0x18] sm:$0xff]
    %v49 = vld [vmem:[%s1] sm:$0xff]
    %v50 = vld [vmem:[%s1 + $0x8] sm:$0xff]
    %v51 = vld [vmem:[%s1 + $0x10] sm:$0xff]
    %v52 = vld [vmem:[%s1 + $0x18] sm:$0xff]
    %v53 = vld [vmem:[%s1 + $0x20] sm:$0xff]
    %v54 = vld [vmem:[%s1 + $0x28] sm:$0xff]
    %v55 = vld [vmem:[%s4] sm:$0x3]
    %v56 = vlaneseq
    %v57 = vshrl.u32 %v56, 7
    %v58 = vlaneseq
    %v59 = vand.u32 %v58, 127
    %v60 = vmul.u32 %v57, 2
    %v61 = vadd.s32 %v60, 4294967295
    %vm62 = vcmp.eq.s32.totalorder %v59, %v61
    %v63 = vsel %vm62, 1, 0
    %v64 = vcvt.s32.f32 %v63
    %vm65 = vcmp.eq.s32.totalorder %v59, %v60
    %v66 = vsel %vm65, 1, 0
    %v67 = vcvt.s32.f32 %v66
    %v68 = vadd.s32 %v60, 1
    %vm69 = vcmp.eq.s32.totalorder %v59, %v68
    %v70 = vsel %vm69, 1, 0
    %v71 = vcvt.s32.f32 %v70
    %vm72 = vcmask 130048
    %v74 = vsel %vm72, %v64, 0
    %76 = vmatprep.subr.mxu0 0.0
    %77 = vmatpush1.msra.mxu0 %v45
    %78 = vmatprep.subr.mxu0 0.0
    %79 = vmatpush1.msra.mxu0 %v46
    %80 = vmatprep.subr.mxu0 0.0
    %81 = vmatpush1.msra.mxu0 0.0
    %82 = vmatprep.subr.mxu0 0.0
    %83 = vmatpush1.msra.mxu0 0.0
    %84 = vmatprep.subr.mxu0 0.0
    %85 = vmatpush1.msra.mxu0 0.0
    %86 = vmatprep.subr.mxu0 0.0
    %87 = vmatpush1.msra.mxu0 0.0
    %88 = vmatprep.subr.mxu0 0.0
    %89 = vmatpush1.msra.mxu0 0.0
    %90 = vmatprep.subr.mxu0 0.0
    %91 = vmatpush1.msra.mxu0 0.0
    %92 = vmatprep.subr.mxu0 0.0
    %93 = vmatpush1.msra.mxu0 0.0
    %94 = vmatprep.subr.mxu0 0.0
    %95 = vmatpush1.msra.mxu0 0.0
    %96 = vmatprep.subr.mxu0 0.0
    %97 = vmatpush1.msra.mxu0 0.0
    %98 = vmatprep.subr.mxu0 0.0
    %99 = vmatpush1.msra.mxu0 0.0
    %100 = vmatprep.subr.mxu0 0.0
    %101 = vmatpush1.msra.mxu0 0.0
    %102 = vmatprep.subr.mxu0 0.0
    %103 = vmatpush1.msra.mxu0 0.0
    %104 = vmatprep.subr.mxu0 0.0
    %105 = vmatpush1.msra.mxu0 0.0
    %106 = vmatprep.subr.mxu0 0.0
    %107 = vmatpush1.msra.mxu0 0.0
    %108 = vmatprep.subr.mxu0 0.0
    %109 = vmatpush1.msra.mxu0 0.0
    %110 = vmatprep.subr.mxu0 0.0
    %111 = vmatpush1.msra.mxu0 0.0
    %112 = vmatprep.subr.mxu0 0.0
    %113 = vmatpush1.msra.mxu0 0.0
    %114 = vmatprep.subr.mxu0 0.0
    %115 = vmatpush1.msra.mxu0 0.0
    %116 = vmatprep.subr.mxu0 0.0
    %117 = vmatpush1.msra.mxu0 0.0
    %118 = vmatprep.subr.mxu0 0.0
    %119 = vmatpush1.msra.mxu0 0.0
    %120 = vmatprep.subr.mxu0 0.0
    %121 = vmatpush1.msra.mxu0 0.0
    %122 = vmatprep.subr.mxu0 0.0
    %123 = vmatpush1.msra.mxu0 0.0
    %124 = vmatprep.subr.mxu0 0.0
    %125 = vmatpush1.msra.mxu0 0.0
    %126 = vmatprep.subr.mxu0 0.0
    %127 = vmatpush1.msra.mxu0 0.0
    %128 = vmatprep.subr.mxu0 0.0
    %129 = vmatpush1.msra.mxu0 0.0
    %130 = vmatprep.subr.mxu0 0.0
    %131 = vmatpush1.msra.mxu0 0.0
    %132 = vmatprep.subr.mxu0 0.0
    %133 = vmatpush1.msra.mxu0 0.0
    %134 = vmatprep.subr.mxu0 0.0
    %135 = vmatpush1.msra.mxu0 0.0
    %136 = vmatprep.subr.mxu0 0.0
    %137 = vmatpush1.msra.mxu0 0.0
    %138 = vmatprep.subr.mxu0 0.0
    %139 = vmatpush1.msra.mxu0 0.0
    %140 = vmatprep.mubr.f32.mxu0 0.0
    %141 = vmatmul.mubr.f32.gmra.mrb[0].mxu0 %v74
    %v142 = vpop.f32.mrb[0].mxu0
    %v143 = vadd.f32 0.0, %v142
    %v144 = vpop.f32.mrb[0].mxu0
    %145 = vdwg.mxu0
    %v147 = vsel %vm72, %v67, 0
    %149 = vmatprep.subr.mxu0 0.0
    %150 = vmatpush1.msra.mxu0 %v45
    %151 = vmatprep.subr.mxu0 0.0
    %152 = vmatpush1.msra.mxu0 %v46
    %153 = vmatprep.subr.mxu0 0.0
    %154 = vmatpush1.msra.mxu0 0.0
    %155 = vmatprep.subr.mxu0 0.0
    %156 = vmatpush1.msra.mxu0 0.0
    %157 = vmatprep.subr.mxu0 0.0
    %158 = vmatpush1.msra.mxu0 0.0
    %159 = vmatprep.subr.mxu0 0.0
    %160 = vmatpush1.msra.mxu0 0.0
    %161 = vmatprep.subr.mxu0 0.0
    %162 = vmatpush1.msra.mxu0 0.0
    %163 = vmatprep.subr.mxu0 0.0
    %164 = vmatpush1.msra.mxu0 0.0
    %165 = vmatprep.subr.mxu0 0.0
    %166 = vmatpush1.msra.mxu0 0.0
    %167 = vmatprep.subr.mxu0 0.0
    %168 = vmatpush1.msra.mxu0 0.0
    %169 = vmatprep.subr.mxu0 0.0
    %170 = vmatpush1.msra.mxu0 0.0
    %171 = vmatprep.subr.mxu0 0.0
    %172 = vmatpush1.msra.mxu0 0.0
    %173 = vmatprep.subr.mxu0 0.0
    %174 = vmatpush1.msra.mxu0 0.0
    %175 = vmatprep.subr.mxu0 0.0
    %176 = vmatpush1.msra.mxu0 0.0
    %177 = vmatprep.subr.mxu0 0.0
    %178 = vmatpush1.msra.mxu0 0.0
    %179 = vmatprep.subr.mxu0 0.0
    %180 = vmatpush1.msra.mxu0 0.0
    %181 = vmatprep.subr.mxu0 0.0
    %182 = vmatpush1.msra.mxu0 0.0
    %183 = vmatprep.subr.mxu0 0.0
    %184 = vmatpush1.msra.mxu0 0.0
    %185 = vmatprep.subr.mxu0 0.0
    %186 = vmatpush1.msra.mxu0 0.0
    %187 = vmatprep.subr.mxu0 0.0
    %188 = vmatpush1.msra.mxu0 0.0
    %189 = vmatprep.subr.mxu0 0.0
    %190 = vmatpush1.msra.mxu0 0.0
    %191 = vmatprep.subr.mxu0 0.0
    %192 = vmatpush1.msra.mxu0 0.0
    %193 = vmatprep.subr.mxu0 0.0
    %194 = vmatpush1.msra.mxu0 0.0
    %195 = vmatprep.subr.mxu0 0.0
    %196 = vmatpush1.msra.mxu0 0.0
    %197 = vmatprep.subr.mxu0 0.0
    %198 = vmatpush1.msra.mxu0 0.0
    %199 = vmatprep.subr.mxu0 0.0
    %200 = vmatpush1.msra.mxu0 0.0
    %201 = vmatprep.subr.mxu0 0.0
    %202 = vmatpush1.msra.mxu0 0.0
    %203 = vmatprep.subr.mxu0 0.0
    %204 = vmatpush1.msra.mxu0 0.0
    %205 = vmatprep.subr.mxu0 0.0
    %206 = vmatpush1.msra.mxu0 0.0
    %207 = vmatprep.subr.mxu0 0.0
    %208 = vmatpush1.msra.mxu0 0.0
    %209 = vmatprep.subr.mxu0 0.0
    %210 = vmatpush1.msra.mxu0 0.0
    %211 = vmatprep.subr.mxu0 0.0
    %212 = vmatpush1.msra.mxu0 0.0
    %213 = vmatprep.mubr.f32.mxu0 0.0
    %214 = vmatmul.mubr.f32.gmra.mrb[0].mxu0 %v147
    %v215 = vpop.f32.mrb[0].mxu0
    %v216 = vadd.f32 0.0, %v215
    %v217 = vpop.f32.mrb[0].mxu0
    %218 = vdwg.mxu0
    %v220 = vsel %vm72, %v71, 0
    %222 = vmatprep.subr.mxu0 0.0
    %223 = vmatpush1.msra.mxu0 %v45
    %224 = vmatprep.subr.mxu0 0.0
    %225 = vmatpush1.msra.mxu0 %v46
    %226 = vmatprep.subr.mxu0 0.0
    %227 = vmatpush1.msra.mxu0 0.0
    %228 = vmatprep.subr.mxu0 0.0
    %229 = vmatpush1.msra.mxu0 0.0
    %230 = vmatprep.subr.mxu0 0.0
    %231 = vmatpush1.msra.mxu0 0.0
    %232 = vmatprep.subr.mxu0 0.0
    %233 = vmatpush1.msra.mxu0 0.0
    %234 = vmatprep.subr.mxu0 0.0
    %235 = vmatpush1.msra.mxu0 0.0
    %236 = vmatprep.subr.mxu0 0.0
    %237 = vmatpush1.msra.mxu0 0.0
    %238 = vmatprep.subr.mxu0 0.0
    %239 = vmatpush1.msra.mxu0 0.0
    %240 = vmatprep.subr.mxu0 0.0
    %241 = vmatpush1.msra.mxu0 0.0
    %242 = vmatprep.subr.mxu0 0.0
    %243 = vmatpush1.msra.mxu0 0.0
    %244 = vmatprep.subr.mxu0 0.0
    %245 = vmatpush1.msra.mxu0 0.0
    %246 = vmatprep.subr.mxu0 0.0
    %247 = vmatpush1.msra.mxu0 0.0
    %248 = vmatprep.subr.mxu0 0.0
    %249 = vmatpush1.msra.mxu0 0.0
    %250 = vmatprep.subr.mxu0 0.0
    %251 = vmatpush1.msra.mxu0 0.0
    %252 = vmatprep.subr.mxu0 0.0
    %253 = vmatpush1.msra.mxu0 0.0
    %254 = vmatprep.subr.mxu0 0.0
    %255 = vmatpush1.msra.mxu0 0.0
    %256 = vmatprep.subr.mxu0 0.0
    %257 = vmatpush1.msra.mxu0 0.0
    %258 = vmatprep.subr.mxu0 0.0
    %259 = vmatpush1.msra.mxu0 0.0
    %260 = vmatprep.subr.mxu0 0.0
    %261 = vmatpush1.msra.mxu0 0.0
    %262 = vmatprep.subr.mxu0 0.0
    %263 = vmatpush1.msra.mxu0 0.0
    %264 = vmatprep.subr.mxu0 0.0
    %265 = vmatpush1.msra.mxu0 0.0
    %266 = vmatprep.subr.mxu0 0.0
    %267 = vmatpush1.msra.mxu0 0.0
    %268 = vmatprep.subr.mxu0 0.0
    %269 = vmatpush1.msra.mxu0 0.0
    %270 = vmatprep.subr.mxu0 0.0
    %271 = vmatpush1.msra.mxu0 0.0
    %272 = vmatprep.subr.mxu0 0.0
    %273 = vmatpush1.msra.mxu0 0.0
    %274 = vmatprep.subr.mxu0 0.0
    %275 = vmatpush1.msra.mxu0 0.0
    %276 = vmatprep.subr.mxu0 0.0
    %277 = vmatpush1.msra.mxu0 0.0
    %278 = vmatprep.subr.mxu0 0.0
    %279 = vmatpush1.msra.mxu0 0.0
    %280 = vmatprep.subr.mxu0 0.0
    %281 = vmatpush1.msra.mxu0 0.0
    %282 = vmatprep.subr.mxu0 0.0
    %283 = vmatpush1.msra.mxu0 0.0
    %284 = vmatprep.subr.mxu0 0.0
    %285 = vmatpush1.msra.mxu0 0.0
    %286 = vmatprep.mubr.f32.mxu0 0.0
    %287 = vmatmul.mubr.f32.gmra.mrb[0].mxu0 %v220
    %v288 = vpop.f32.mrb[0].mxu0
    %v289 = vadd.f32 0.0, %v288
    %v290 = vpop.f32.mrb[0].mxu0
    %291 = vdwg.mxu0
    %293 = vrot.lane.b32.xlu0 %v216, 16
    %v294 = vpop.permute.xlu0 %293
    %297 = vrot.lane.b32.xlu0 %v289, 32
    %v298 = vpop.permute.xlu0 %297
    %v300 = vsel %vm72, %v143, %v294
    %vm301 = vcmask 261120
    %v302 = vsel %vm301, %v300, %v298
    %vm303 = vcmask 392192
    %v305 = vsel %vm303, %v302, 0
    %307 = vmatprep.subr.mxu0 0.0
    %308 = vmatpush1.msra.mxu0 %v49
    %309 = vmatprep.subr.mxu0 0.0
    %310 = vmatpush1.msra.mxu0 %v50
    %311 = vmatprep.subr.mxu0 0.0
    %312 = vmatpush1.msra.mxu0 %v51
    %313 = vmatprep.subr.mxu0 0.0
    %314 = vmatpush1.msra.mxu0 %v52
    %315 = vmatprep.subr.mxu0 0.0
    %316 = vmatpush1.msra.mxu0 %v53
    %317 = vmatprep.subr.mxu0 0.0
    %318 = vmatpush1.msra.mxu0 %v54
    %319 = vmatprep.subr.mxu0 0.0
    %320 = vmatpush1.msra.mxu0 0.0
    %321 = vmatprep.subr.mxu0 0.0
    %322 = vmatpush1.msra.mxu0 0.0
    %323 = vmatprep.subr.mxu0 0.0
    %324 = vmatpush1.msra.mxu0 0.0
    %325 = vmatprep.subr.mxu0 0.0
    %326 = vmatpush1.msra.mxu0 0.0
    %327 = vmatprep.subr.mxu0 0.0
    %328 = vmatpush1.msra.mxu0 0.0
    %329 = vmatprep.subr.mxu0 0.0
    %330 = vmatpush1.msra.mxu0 0.0
    %331 = vmatprep.subr.mxu0 0.0
    %332 = vmatpush1.msra.mxu0 0.0
    %333 = vmatprep.subr.mxu0 0.0
    %334 = vmatpush1.msra.mxu0 0.0
    %335 = vmatprep.subr.mxu0 0.0
    %336 = vmatpush1.msra.mxu0 0.0
    %337 = vmatprep.subr.mxu0 0.0
    %338 = vmatpush1.msra.mxu0 0.0
    %339 = vmatprep.subr.mxu0 0.0
    %340 = vmatpush1.msra.mxu0 0.0
    %341 = vmatprep.subr.mxu0 0.0
    %342 = vmatpush1.msra.mxu0 0.0
    %343 = vmatprep.subr.mxu0 0.0
    %344 = vmatpush1.msra.mxu0 0.0
    %345 = vmatprep.subr.mxu0 0.0
    %346 = vmatpush1.msra.mxu0 0.0
    %347 = vmatprep.subr.mxu0 0.0
    %348 = vmatpush1.msra.mxu0 0.0
    %349 = vmatprep.subr.mxu0 0.0
    %350 = vmatpush1.msra.mxu0 0.0
    %351 = vmatprep.subr.mxu0 0.0
    %352 = vmatpush1.msra.mxu0 0.0
    %353 = vmatprep.subr.mxu0 0.0
    %354 = vmatpush1.msra.mxu0 0.0
    %355 = vmatprep.subr.mxu0 0.0
    %356 = vmatpush1.msra.mxu0 0.0
    %357 = vmatprep.subr.mxu0 0.0
    %358 = vmatpush1.msra.mxu0 0.0
    %359 = vmatprep.subr.mxu0 0.0
    %360 = vmatpush1.msra.mxu0 0.0
    %361 = vmatprep.subr.mxu0 0.0
    %362 = vmatpush1.msra.mxu0 0.0
    %363 = vmatprep.subr.mxu0 0.0
    %364 = vmatpush1.msra.mxu0 0.0
    %365 = vmatprep.subr.mxu0 0.0
    %366 = vmatpush1.msra.mxu0 0.0
    %367 = vmatprep.subr.mxu0 0.0
    %368 = vmatpush1.msra.mxu0 0.0
    %369 = vmatprep.subr.mxu0 0.0
    %370 = vmatpush1.msra.mxu0 0.0
    %371 = vmatprep.mubr.f32.mxu0 0.0
    %372 = vmatmul.mubr.f32.gmra.mrb[0].mxu0 %v305
    %v373 = vpop.f32.mrb[0].mxu0
    %v374 = vadd.f32 0.0, %v373
    %v375 = vpop.f32.mrb[0].mxu0
    %376 = vdwg.mxu0
    %377 = vmatprep.subr.mxu0 0.0
    %378 = vmatpush1.msra.mxu0 %v47
    %379 = vmatprep.subr.mxu0 0.0
    %380 = vmatpush1.msra.mxu0 %v48
    %381 = vmatprep.subr.mxu0 0.0
    %382 = vmatpush1.msra.mxu0 0.0
    %383 = vmatprep.subr.mxu0 0.0
    %384 = vmatpush1.msra.mxu0 0.0
    %385 = vmatprep.subr.mxu0 0.0
    %386 = vmatpush1.msra.mxu0 0.0
    %387 = vmatprep.subr.mxu0 0.0
    %388 = vmatpush1.msra.mxu0 0.0
    %389 = vmatprep.subr.mxu0 0.0
    %390 = vmatpush1.msra.mxu0 0.0
    %391 = vmatprep.subr.mxu0 0.0
    %392 = vmatpush1.msra.mxu0 0.0
    %393 = vmatprep.subr.mxu0 0.0
    %394 = vmatpush1.msra.mxu0 0.0
    %395 = vmatprep.subr.mxu0 0.0
    %396 = vmatpush1.msra.mxu0 0.0
    %397 = vmatprep.subr.mxu0 0.0
    %398 = vmatpush1.msra.mxu0 0.0
    %399 = vmatprep.subr.mxu0 0.0
    %400 = vmatpush1.msra.mxu0 0.0
    %401 = vmatprep.subr.mxu0 0.0
    %402 = vmatpush1.msra.mxu0 0.0
    %403 = vmatprep.subr.mxu0 0.0
    %404 = vmatpush1.msra.mxu0 0.0
    %405 = vmatprep.subr.mxu0 0.0
    %406 = vmatpush1.msra.mxu0 0.0
    %407 = vmatprep.subr.mxu0 0.0
    %408 = vmatpush1.msra.mxu0 0.0
    %409 = vmatprep.subr.mxu0 0.0
    %410 = vmatpush1.msra.mxu0 0.0
    %411 = vmatprep.subr.mxu0 0.0
    %412 = vmatpush1.msra.mxu0 0.0
    %413 = vmatprep.subr.mxu0 0.0
    %414 = vmatpush1.msra.mxu0 0.0
    %415 = vmatprep.subr.mxu0 0.0
    %416 = vmatpush1.msra.mxu0 0.0
    %417 = vmatprep.subr.mxu0 0.0
    %418 = vmatpush1.msra.mxu0 0.0
    %419 = vmatprep.subr.mxu0 0.0
    %420 = vmatpush1.msra.mxu0 0.0
    %421 = vmatprep.subr.mxu0 0.0
    %422 = vmatpush1.msra.mxu0 0.0
    %423 = vmatprep.subr.mxu0 0.0
    %424 = vmatpush1.msra.mxu0 0.0
    %425 = vmatprep.subr.mxu0 0.0
    %426 = vmatpush1.msra.mxu0 0.0
    %427 = vmatprep.subr.mxu0 0.0
    %428 = vmatpush1.msra.mxu0 0.0
    %429 = vmatprep.subr.mxu0 0.0
    %430 = vmatpush1.msra.mxu0 0.0
    %431 = vmatprep.subr.mxu0 0.0
    %432 = vmatpush1.msra.mxu0 0.0
    %433 = vmatprep.subr.mxu0 0.0
    %434 = vmatpush1.msra.mxu0 0.0
    %435 = vmatprep.subr.mxu0 0.0
    %436 = vmatpush1.msra.mxu0 0.0
    %437 = vmatprep.subr.mxu0 0.0
    %438 = vmatpush1.msra.mxu0 0.0
    %439 = vmatprep.subr.mxu0 0.0
    %440 = vmatpush1.msra.mxu0 0.0
    %441 = vmatprep.mubr.f32.mxu0 0.0
    %442 = vmatmul.mubr.f32.gmra.mrb[0].mxu0 %v74
    %v443 = vpop.f32.mrb[0].mxu0
    %v444 = vadd.f32 0.0, %v443
    %v445 = vpop.f32.mrb[0].mxu0
    %446 = vdwg.mxu0
    %447 = vmatprep.subr.mxu0 0.0
    %448 = vmatpush1.msra.mxu0 %v47
    %449 = vmatprep.subr.mxu0 0.0
    %450 = vmatpush1.msra.mxu0 %v48
    %451 = vmatprep.subr.mxu0 0.0
    %452 = vmatpush1.msra.mxu0 0.0
    %453 = vmatprep.subr.mxu0 0.0
    %454 = vmatpush1.msra.mxu0 0.0
    %455 = vmatprep.subr.mxu0 0.0
    %456 = vmatpush1.msra.mxu0 0.0
    %457 = vmatprep.subr.mxu0 0.0
    %458 = vmatpush1.msra.mxu0 0.0
    %459 = vmatprep.subr.mxu0 0.0
    %460 = vmatpush1.msra.mxu0 0.0
    %461 = vmatprep.subr.mxu0 0.0
    %462 = vmatpush1.msra.mxu0 0.0
    %463 = vmatprep.subr.mxu0 0.0
    %464 = vmatpush1.msra.mxu0 0.0
    %465 = vmatprep.subr.mxu0 0.0
    %466 = vmatpush1.msra.mxu0 0.0
    %467 = vmatprep.subr.mxu0 0.0
    %468 = vmatpush1.msra.mxu0 0.0
    %469 = vmatprep.subr.mxu0 0.0
    %470 = vmatpush1.msra.mxu0 0.0
    %471 = vmatprep.subr.mxu0 0.0
    %472 = vmatpush1.msra.mxu0 0.0
    %473 = vmatprep.subr.mxu0 0.0
    %474 = vmatpush1.msra.mxu0 0.0
    %475 = vmatprep.subr.mxu0 0.0
    %476 = vmatpush1.msra.mxu0 0.0
    %477 = vmatprep.subr.mxu0 0.0
    %478 = vmatpush1.msra.mxu0 0.0
    %479 = vmatprep.subr.mxu0 0.0
    %480 = vmatpush1.msra.mxu0 0.0
    %481 = vmatprep.subr.mxu0 0.0
    %482 = vmatpush1.msra.mxu0 0.0
    %483 = vmatprep.subr.mxu0 0.0
    %484 = vmatpush1.msra.mxu0 0.0
    %485 = vmatprep.subr.mxu0 0.0
    %486 = vmatpush1.msra.mxu0 0.0
    %487 = vmatprep.subr.mxu0 0.0
    %488 = vmatpush1.msra.mxu0 0.0
    %489 = vmatprep.subr.mxu0 0.0
    %490 = vmatpush1.msra.mxu0 0.0
    %491 = vmatprep.subr.mxu0 0.0
    %492 = vmatpush1.msra.mxu0 0.0
    %493 = vmatprep.subr.mxu0 0.0
    %494 = vmatpush1.msra.mxu0 0.0
    %495 = vmatprep.subr.mxu0 0.0
    %496 = vmatpush1.msra.mxu0 0.0
    %497 = vmatprep.subr.mxu0 0.0
    %498 = vmatpush1.msra.mxu0 0.0
    %499 = vmatprep.subr.mxu0 0.0
    %500 = vmatpush1.msra.mxu0 0.0
    %501 = vmatprep.subr.mxu0 0.0
    %502 = vmatpush1.msra.mxu0 0.0
    %503 = vmatprep.subr.mxu0 0.0
    %504 = vmatpush1.msra.mxu0 0.0
    %505 = vmatprep.subr.mxu0 0.0
    %506 = vmatpush1.msra.mxu0 0.0
    %507 = vmatprep.subr.mxu0 0.0
    %508 = vmatpush1.msra.mxu0 0.0
    %509 = vmatprep.subr.mxu0 0.0
    %510 = vmatpush1.msra.mxu0 0.0
    %511 = vmatprep.mubr.f32.mxu0 0.0
    %512 = vmatmul.mubr.f32.gmra.mrb[0].mxu0 %v147
    %v513 = vpop.f32.mrb[0].mxu0
    %v514 = vadd.f32 0.0, %v513
    %v515 = vpop.f32.mrb[0].mxu0
    %516 = vdwg.mxu0
    %517 = vmatprep.subr.mxu0 0.0
    %518 = vmatpush1.msra.mxu0 %v47
    %519 = vmatprep.subr.mxu0 0.0
    %520 = vmatpush1.msra.mxu0 %v48
    %521 = vmatprep.subr.mxu0 0.0
    %522 = vmatpush1.msra.mxu0 0.0
    %523 = vmatprep.subr.mxu0 0.0
    %524 = vmatpush1.msra.mxu0 0.0
    %525 = vmatprep.subr.mxu0 0.0
    %526 = vmatpush1.msra.mxu0 0.0
    %527 = vmatprep.subr.mxu0 0.0
    %528 = vmatpush1.msra.mxu0 0.0
    %529 = vmatprep.subr.mxu0 0.0
    %530 = vmatpush1.msra.mxu0 0.0
    %531 = vmatprep.subr.mxu0 0.0
    %532 = vmatpush1.msra.mxu0 0.0
    %533 = vmatprep.subr.mxu0 0.0
    %534 = vmatpush1.msra.mxu0 0.0
    %535 = vmatprep.subr.mxu0 0.0
    %536 = vmatpush1.msra.mxu0 0.0
    %537 = vmatprep.subr.mxu0 0.0
    %538 = vmatpush1.msra.mxu0 0.0
    %539 = vmatprep.subr.mxu0 0.0
    %540 = vmatpush1.msra.mxu0 0.0
    %541 = vmatprep.subr.mxu0 0.0
    %542 = vmatpush1.msra.mxu0 0.0
    %543 = vmatprep.subr.mxu0 0.0
    %544 = vmatpush1.msra.mxu0 0.0
    %545 = vmatprep.subr.mxu0 0.0
    %546 = vmatpush1.msra.mxu0 0.0
    %547 = vmatprep.subr.mxu0 0.0
    %548 = vmatpush1.msra.mxu0 0.0
    %549 = vmatprep.subr.mxu0 0.0
    %550 = vmatpush1.msra.mxu0 0.0
    %551 = vmatprep.subr.mxu0 0.0
    %552 = vmatpush1.msra.mxu0 0.0
    %553 = vmatprep.subr.mxu0 0.0
    %554 = vmatpush1.msra.mxu0 0.0
    %555 = vmatprep.subr.mxu0 0.0
    %556 = vmatpush1.msra.mxu0 0.0
    %557 = vmatprep.subr.mxu0 0.0
    %558 = vmatpush1.msra.mxu0 0.0
    %559 = vmatprep.subr.mxu0 0.0
    %560 = vmatpush1.msra.mxu0 0.0
    %561 = vmatprep.subr.mxu0 0.0
    %562 = vmatpush1.msra.mxu0 0.0
    %563 = vmatprep.subr.mxu0 0.0
    %564 = vmatpush1.msra.mxu0 0.0
    %565 = vmatprep.subr.mxu0 0.0
    %566 = vmatpush1.msra.mxu0 0.0
    %567 = vmatprep.subr.mxu0 0.0
    %568 = vmatpush1.msra.mxu0 0.0
    %569 = vmatprep.subr.mxu0 0.0
    %570 = vmatpush1.msra.mxu0 0.0
    %571 = vmatprep.subr.mxu0 0.0
    %572 = vmatpush1.msra.mxu0 0.0
    %573 = vmatprep.subr.mxu0 0.0
    %574 = vmatpush1.msra.mxu0 0.0
    %575 = vmatprep.subr.mxu0 0.0
    %576 = vmatpush1.msra.mxu0 0.0
    %577 = vmatprep.subr.mxu0 0.0
    %578 = vmatpush1.msra.mxu0 0.0
    %579 = vmatprep.subr.mxu0 0.0
    %580 = vmatpush1.msra.mxu0 0.0
    %581 = vmatprep.mubr.f32.mxu0 0.0
    %582 = vmatmul.mubr.f32.gmra.mrb[0].mxu0 %v220
    %v583 = vpop.f32.mrb[0].mxu0
    %v584 = vadd.f32 0.0, %v583
    %v585 = vpop.f32.mrb[0].mxu0
    %586 = vdwg.mxu0
    %588 = vrot.lane.b32.xlu0 %v514, 16
    %v589 = vpop.permute.xlu0 %588
    %592 = vrot.lane.b32.xlu0 %v584, 32
    %v593 = vpop.permute.xlu0 %592
    %v595 = vsel %vm72, %v444, %v589
    %v596 = vsel %vm301, %v595, %v593
    %v598 = vsel %vm303, %v596, 0
    %600 = vmatprep.subr.mxu0 0.0
    %601 = vmatpush1.msra.mxu0 %v49
    %602 = vmatprep.subr.mxu0 0.0
    %603 = vmatpush1.msra.mxu0 %v50
    %604 = vmatprep.subr.mxu0 0.0
    %605 = vmatpush1.msra.mxu0 %v51
    %606 = vmatprep.subr.mxu0 0.0
    %607 = vmatpush1.msra.mxu0 %v52
    %608 = vmatprep.subr.mxu0 0.0
    %609 = vmatpush1.msra.mxu0 %v53
    %610 = vmatprep.subr.mxu0 0.0
    %611 = vmatpush1.msra.mxu0 %v54
    %612 = vmatprep.subr.mxu0 0.0
    %613 = vmatpush1.msra.mxu0 0.0
    %614 = vmatprep.subr.mxu0 0.0
    %615 = vmatpush1.msra.mxu0 0.0
    %616 = vmatprep.subr.mxu0 0.0
    %617 = vmatpush1.msra.mxu0 0.0
    %618 = vmatprep.subr.mxu0 0.0
    %619 = vmatpush1.msra.mxu0 0.0
    %620 = vmatprep.subr.mxu0 0.0
    %621 = vmatpush1.msra.mxu0 0.0
    %622 = vmatprep.subr.mxu0 0.0
    %623 = vmatpush1.msra.mxu0 0.0
    %624 = vmatprep.subr.mxu0 0.0
    %625 = vmatpush1.msra.mxu0 0.0
    %626 = vmatprep.subr.mxu0 0.0
    %627 = vmatpush1.msra.mxu0 0.0
    %628 = vmatprep.subr.mxu0 0.0
    %629 = vmatpush1.msra.mxu0 0.0
    %630 = vmatprep.subr.mxu0 0.0
    %631 = vmatpush1.msra.mxu0 0.0
    %632 = vmatprep.subr.mxu0 0.0
    %633 = vmatpush1.msra.mxu0 0.0
    %634 = vmatprep.subr.mxu0 0.0
    %635 = vmatpush1.msra.mxu0 0.0
    %636 = vmatprep.subr.mxu0 0.0
    %637 = vmatpush1.msra.mxu0 0.0
    %638 = vmatprep.subr.mxu0 0.0
    %639 = vmatpush1.msra.mxu0 0.0
    %640 = vmatprep.subr.mxu0 0.0
    %641 = vmatpush1.msra.mxu0 0.0
    %642 = vmatprep.subr.mxu0 0.0
    %643 = vmatpush1.msra.mxu0 0.0
    %644 = vmatprep.subr.mxu0 0.0
    %645 = vmatpush1.msra.mxu0 0.0
    %646 = vmatprep.subr.mxu0 0.0
    %647 = vmatpush1.msra.mxu0 0.0
    %648 = vmatprep.subr.mxu0 0.0
    %649 = vmatpush1.msra.mxu0 0.0
    %650 = vmatprep.subr.mxu0 0.0
    %651 = vmatpush1.msra.mxu0 0.0
    %652 = vmatprep.subr.mxu0 0.0
    %653 = vmatpush1.msra.mxu0 0.0
    %654 = vmatprep.subr.mxu0 0.0
    %655 = vmatpush1.msra.mxu0 0.0
    %656 = vmatprep.subr.mxu0 0.0
    %657 = vmatpush1.msra.mxu0 0.0
    %658 = vmatprep.subr.mxu0 0.0
    %659 = vmatpush1.msra.mxu0 0.0
    %660 = vmatprep.subr.mxu0 0.0
    %661 = vmatpush1.msra.mxu0 0.0
    %662 = vmatprep.subr.mxu0 0.0
    %663 = vmatpush1.msra.mxu0 0.0
    %664 = vmatprep.mubr.f32.mxu0 0.0
    %665 = vmatmul.mubr.f32.gmra.mrb[0].mxu0 %v598
    %v666 = vpop.f32.mrb[0].mxu0
    %v667 = vadd.f32 0.0, %v666
    %v668 = vpop.f32.mrb[0].mxu0
    %669 = vdwg.mxu0
    %vm670 = vcmp.eq.s32.totalorder %v57, %v59
    %v671 = vsel %vm670, 1, 0
    %v672 = vcvt.s32.f32 %v671
    %v674 = vrot.slane %v672, 4
    %vm676 = vcmask 1043456
    %v677 = vsel %vm676, %v672, %v674
    %678 = vrot.lane.b32.xlu0 %v672, 4
    %v679 = vpop.permute.xlu0 %678
    %681 = vrot.lane.b32.xlu0 %v672, 8
    %v682 = vpop.permute.xlu0 %681
    %684 = vrot.lane.b32.xlu0 %v672, 12
    %v685 = vpop.permute.xlu0 %684
    %687 = vrot.lane.b32.xlu0 %v672, 16
    %v688 = vpop.permute.xlu0 %687
    %690 = vrot.lane.b32.xlu0 %v672, 20
    %v691 = vpop.permute.xlu0 %690
    %693 = vrot.lane.b32.xlu0 %v672, 24
    %v694 = vpop.permute.xlu0 %693
    %696 = vrot.lane.b32.xlu0 %v672, 28
    %v697 = vpop.permute.xlu0 %696
    %vm699 = vcmask 31744
    %v700 = vsel %vm699, %v672, %v679
    %vm701 = vcmask 64512
    %v702 = vsel %vm701, %v700, %v682
    %vm703 = vcmask 97280
    %v704 = vsel %vm703, %v702, %v685
    %v705 = vsel %vm72, %v704, %v688
    %vm706 = vcmask 162816
    %v707 = vsel %vm706, %v705, %v691
    %vm708 = vcmask 195584
    %v709 = vsel %vm708, %v707, %v694
    %vm710 = vcmask 228352
    %v711 = vsel %vm710, %v709, %v697
    %v712 = vsel %vm301, %v374, 0.0
    %v713 = vsel %vm301, %v667, 0.0
    %v714 = vadd.f32 %v712, %v713
    %v715 = vrot.slane %v714, 4
    %v716 = vadd.f32 %v714, %v715
    %v717 = vrot.slane %v716, 2
    %v718 = vadd.f32 %v716, %v717
    %v719 = vrot.slane %v718, 1
    %v720 = vadd.f32 %v718, %v719
    %v721 = vmul.f32 %v374, %v374
    %v722 = vmul.f32 %v667, %v667
    %v723 = vsel %vm301, %v721, 0.0
    %v724 = vsel %vm301, %v722, 0.0
    %v725 = vadd.f32 %v723, %v724
    %v726 = vrot.slane %v725, 4
    %v727 = vadd.f32 %v725, %v726
    %v728 = vrot.slane %v727, 2
    %v729 = vadd.f32 %v727, %v728
    %v730 = vrot.slane %v729, 1
    %v731 = vadd.f32 %v729, %v730
    %vm732 = vcmask 1040384
    %v733 = vsel %vm732, %v720, %v731
    %v735 = vsel %vm301, %v733, 0
    %737 = vmatprep.subr.mxu0 0.0
    %738 = vmatpush1.msra.mxu0 %v677
    %739 = vmatprep.subr.mxu0 0.0
    %740 = vmatpush1.msra.mxu0 %v677
    %741 = vmatprep.subr.mxu0 0.0
    %742 = vmatpush1.msra.mxu0 %v677
    %743 = vmatprep.subr.mxu0 0.0
    %744 = vmatpush1.msra.mxu0 %v677
    %745 = vmatprep.subr.mxu0 0.0
    %746 = vmatpush1.msra.mxu0 0.0
    %747 = vmatprep.subr.mxu0 0.0
    %748 = vmatpush1.msra.mxu0 0.0
    %749 = vmatprep.subr.mxu0 0.0
    %750 = vmatpush1.msra.mxu0 0.0
    %751 = vmatprep.subr.mxu0 0.0
    %752 = vmatpush1.msra.mxu0 0.0
    %753 = vmatprep.subr.mxu0 0.0
    %754 = vmatpush1.msra.mxu0 0.0
    %755 = vmatprep.subr.mxu0 0.0
    %756 = vmatpush1.msra.mxu0 0.0
    %757 = vmatprep.subr.mxu0 0.0
    %758 = vmatpush1.msra.mxu0 0.0
    %759 = vmatprep.subr.mxu0 0.0
    %760 = vmatpush1.msra.mxu0 0.0
    %761 = vmatprep.subr.mxu0 0.0
    %762 = vmatpush1.msra.mxu0 0.0
    %763 = vmatprep.subr.mxu0 0.0
    %764 = vmatpush1.msra.mxu0 0.0
    %765 = vmatprep.subr.mxu0 0.0
    %766 = vmatpush1.msra.mxu0 0.0
    %767 = vmatprep.subr.mxu0 0.0
    %768 = vmatpush1.msra.mxu0 0.0
    %769 = vmatprep.subr.mxu0 0.0
    %770 = vmatpush1.msra.mxu0 0.0
    %771 = vmatprep.subr.mxu0 0.0
    %772 = vmatpush1.msra.mxu0 0.0
    %773 = vmatprep.subr.mxu0 0.0
    %774 = vmatpush1.msra.mxu0 0.0
    %775 = vmatprep.subr.mxu0 0.0
    %776 = vmatpush1.msra.mxu0 0.0
    %777 = vmatprep.subr.mxu0 0.0
    %778 = vmatpush1.msra.mxu0 0.0
    %779 = vmatprep.subr.mxu0 0.0
    %780 = vmatpush1.msra.mxu0 0.0
    %781 = vmatprep.subr.mxu0 0.0
    %782 = vmatpush1.msra.mxu0 0.0
    %783 = vmatprep.subr.mxu0 0.0
    %784 = vmatpush1.msra.mxu0 0.0
    %785 = vmatprep.subr.mxu0 0.0
    %786 = vmatpush1.msra.mxu0 0.0
    %787 = vmatprep.subr.mxu0 0.0
    %788 = vmatpush1.msra.mxu0 0.0
    %789 = vmatprep.subr.mxu0 0.0
    %790 = vmatpush1.msra.mxu0 0.0
    %791 = vmatprep.subr.mxu0 0.0
    %792 = vmatpush1.msra.mxu0 0.0
    %793 = vmatprep.subr.mxu0 0.0
    %794 = vmatpush1.msra.mxu0 0.0
    %795 = vmatprep.subr.mxu0 0.0
    %796 = vmatpush1.msra.mxu0 0.0
    %797 = vmatprep.subr.mxu0 0.0
    %798 = vmatpush1.msra.mxu0 0.0
    %799 = vmatprep.subr.mxu0 0.0
    %800 = vmatpush1.msra.mxu0 0.0
    %801 = vmatprep.mubr.f32.mxu0 0.0
    %802 = vmatmul.mubr.f32.gmra.mrb[0].mxu0 %v735
    %v803 = vpop.f32.mrb[0].mxu0
    %v804 = vadd.f32 0.0, %v803
    %v805 = vpop.f32.mrb[0].mxu0
    %806 = vdwg.mxu0
    %v807 = vmul.f32 %v804, 0.0078125
    %v808 = vmul.f32 %v807, %v807
    %v810 = vrot.slane %v808, 7
    %v812 = vsub.f32 %v807, %v810
    %v813 = vadd.f32 %v812, 1e-05
    %v814 = vrsqrt.pop %v813
    %v816 = vrot.slane %v814, 1
    %v818 = vmul.f32 %v55, %v816
    %v819 = vmul.f32 %v807, %v818
    %v821 = vrot.slane %v819, 7
    %v823 = vsub.f32 %v55, %v821
    %v824 = vsel %vm732, %v818, %v823
    %v826 = vsel %vm699, %v824, 0
    %v829 = vsel %vm676, %v711, 0
    %831 = vmatprep.subr.mxu0 0.0
    %832 = vmatpush1.msra.mxu0 %v829
    %833 = vmatprep.subr.mxu0 0.0
    %834 = vmatpush1.msra.mxu0 0.0
    %835 = vmatprep.subr.mxu0 0.0
    %836 = vmatpush1.msra.mxu0 0.0
    %837 = vmatprep.subr.mxu0 0.0
    %838 = vmatpush1.msra.mxu0 0.0
    %839 = vmatprep.subr.mxu0 0.0
    %840 = vmatpush1.msra.mxu0 0.0
    %841 = vmatprep.subr.mxu0 0.0
    %842 = vmatpush1.msra.mxu0 0.0
    %843 = vmatprep.subr.mxu0 0.0
    %844 = vmatpush1.msra.mxu0 0.0
    %845 = vmatprep.subr.mxu0 0.0
    %846 = vmatpush1.msra.mxu0 0.0
    %847 = vmatprep.subr.mxu0 0.0
    %848 = vmatpush1.msra.mxu0 0.0
    %849 = vmatprep.subr.mxu0 0.0
    %850 = vmatpush1.msra.mxu0 0.0
    %851 = vmatprep.subr.mxu0 0.0
    %852 = vmatpush1.msra.mxu0 0.0
    %853 = vmatprep.subr.mxu0 0.0
    %854 = vmatpush1.msra.mxu0 0.0
    %855 = vmatprep.subr.mxu0 0.0
    %856 = vmatpush1.msra.mxu0 0.0
    %857 = vmatprep.subr.mxu0 0.0
    %858 = vmatpush1.msra.mxu0 0.0
    %859 = vmatprep.subr.mxu0 0.0
    %860 = vmatpush1.msra.mxu0 0.0
    %861 = vmatprep.subr.mxu0 0.0
    %862 = vmatpush1.msra.mxu0 0.0
    %863 = vmatprep.subr.mxu0 0.0
    %864 = vmatpush1.msra.mxu0 0.0
    %865 = vmatprep.subr.mxu0 0.0
    %866 = vmatpush1.msra.mxu0 0.0
    %867 = vmatprep.subr.mxu0 0.0
    %868 = vmatpush1.msra.mxu0 0.0
    %869 = vmatprep.subr.mxu0 0.0
    %870 = vmatpush1.msra.mxu0 0.0
    %871 = vmatprep.subr.mxu0 0.0
    %872 = vmatpush1.msra.mxu0 0.0
    %873 = vmatprep.subr.mxu0 0.0
    %874 = vmatpush1.msra.mxu0 0.0
    %875 = vmatprep.subr.mxu0 0.0
    %876 = vmatpush1.msra.mxu0 0.0
    %877 = vmatprep.subr.mxu0 0.0
    %878 = vmatpush1.msra.mxu0 0.0
    %879 = vmatprep.subr.mxu0 0.0
    %880 = vmatpush1.msra.mxu0 0.0
    %881 = vmatprep.subr.mxu0 0.0
    %882 = vmatpush1.msra.mxu0 0.0
    %883 = vmatprep.subr.mxu0 0.0
    %884 = vmatpush1.msra.mxu0 0.0
    %885 = vmatprep.subr.mxu0 0.0
    %886 = vmatpush1.msra.mxu0 0.0
    %887 = vmatprep.subr.mxu0 0.0
    %888 = vmatpush1.msra.mxu0 0.0
    %889 = vmatprep.subr.mxu0 0.0
    %890 = vmatpush1.msra.mxu0 0.0
    %891 = vmatprep.subr.mxu0 0.0
    %892 = vmatpush1.msra.mxu0 0.0
    %893 = vmatprep.subr.mxu0 0.0
    %894 = vmatpush1.msra.mxu0 0.0
    %895 = vmatprep.mubr.f32.mxu0 0.0
    %896 = vmatmul.mubr.f32.gmra.mrb[0].mxu0 %v826
    %v897 = vpop.f32.mrb[0].mxu0
    %v898 = vadd.f32 0.0, %v897
    %v899 = vpop.f32.mrb[0].mxu0
    %900 = vdwg.mxu0
    %v901 = vlaneseq
    %v902 = vshrl.u32 %v901, 7
    %v903 = vsub.s32 0, %v902
    %v904 = vrot.slane %v898, %v903
    %v905 = vmul.f32 %v374, %v904
    %v906 = vmul.f32 %v667, %v904
    %v907 = vlaneseq
    %v908 = vshrl.u32 %v907, 7
    %v909 = vsub.s32 1, %v908
    %v910 = vrot.slane %v898, %v909
    %v911 = vadd.f32 %v905, %v910
    %v912 = vadd.f32 %v906, %v910
    %v913 = vmax.f32 %v911, 0.0
    %v914 = vmax.f32 %v912, 0.0
    %v915 = vld [vmem:[%s2] sm:$0xff]
    %v916 = vld [vmem:[%s2 + $0x8] sm:$0xff]
    %v917 = vld [vmem:[%s2 + $0x10] sm:$0xff]
    %v918 = vld [vmem:[%s2 + $0x18] sm:$0xff]
    %v919 = vld [vmem:[%s2 + $0x20] sm:$0xff]
    %v920 = vld [vmem:[%s2 + $0x28] sm:$0xff]
    %v921 = vld [vmem:[%s2 + $0x30] sm:$0xff]
    %v922 = vld [vmem:[%s2 + $0x38] sm:$0xff]
    %v923 = vld [vmem:[%s2 + $0x40] sm:$0xff]
    %v924 = vld [vmem:[%s2 + $0x48] sm:$0xff]
    %v925 = vld [vmem:[%s2 + $0x50] sm:$0xff]
    %v926 = vld [vmem:[%s2 + $0x58] sm:$0xff]
    %v927 = vld [vmem:[%s5] sm:$0x3]
    %v928 = vsel %vm701, %v64, 0
    %930 = vmatprep.subr.mxu0 0.0
    %931 = vmatpush1.msra.mxu0 %v913
    %932 = vmatprep.subr.mxu0 0.0
    %933 = vmatpush1.msra.mxu0 0.0
    %934 = vmatprep.subr.mxu0 0.0
    %935 = vmatpush1.msra.mxu0 0.0
    %936 = vmatprep.subr.mxu0 0.0
    %937 = vmatpush1.msra.mxu0 0.0
    %938 = vmatprep.subr.mxu0 0.0
    %939 = vmatpush1.msra.mxu0 0.0
    %940 = vmatprep.subr.mxu0 0.0
    %941 = vmatpush1.msra.mxu0 0.0
    %942 = vmatprep.subr.mxu0 0.0
    %943 = vmatpush1.msra.mxu0 0.0
    %944 = vmatprep.subr.mxu0 0.0
    %945 = vmatpush1.msra.mxu0 0.0
    %946 = vmatprep.subr.mxu0 0.0
    %947 = vmatpush1.msra.mxu0 0.0
    %948 = vmatprep.subr.mxu0 0.0
    %949 = vmatpush1.msra.mxu0 0.0
    %950 = vmatprep.subr.mxu0 0.0
    %951 = vmatpush1.msra.mxu0 0.0
    %952 = vmatprep.subr.mxu0 0.0
    %953 = vmatpush1.msra.mxu0 0.0
    %954 = vmatprep.subr.mxu0 0.0
    %955 = vmatpush1.msra.mxu0 0.0
    %956 = vmatprep.subr.mxu0 0.0
    %957 = vmatpush1.msra.mxu0 0.0
    %958 = vmatprep.subr.mxu0 0.0
    %959 = vmatpush1.msra.mxu0 0.0
    %960 = vmatprep.subr.mxu0 0.0
    %961 = vmatpush1.msra.mxu0 0.0
    %962 = vmatprep.subr.mxu0 0.0
    %963 = vmatpush1.msra.mxu0 0.0
    %964 = vmatprep.subr.mxu0 0.0
    %965 = vmatpush1.msra.mxu0 0.0
    %966 = vmatprep.subr.mxu0 0.0
    %967 = vmatpush1.msra.mxu0 0.0
    %968 = vmatprep.subr.mxu0 0.0
    %969 = vmatpush1.msra.mxu0 0.0
    %970 = vmatprep.subr.mxu0 0.0
    %971 = vmatpush1.msra.mxu0 0.0
    %972 = vmatprep.subr.mxu0 0.0
    %973 = vmatpush1.msra.mxu0 0.0
    %974 = vmatprep.subr.mxu0 0.0
    %975 = vmatpush1.msra.mxu0 0.0
    %976 = vmatprep.subr.mxu0 0.0
    %977 = vmatpush1.msra.mxu0 0.0
    %978 = vmatprep.subr.mxu0 0.0
    %979 = vmatpush1.msra.mxu0 0.0
    %980 = vmatprep.subr.mxu0 0.0
    %981 = vmatpush1.msra.mxu0 0.0
    %982 = vmatprep.subr.mxu0 0.0
    %983 = vmatpush1.msra.mxu0 0.0
    %984 = vmatprep.subr.mxu0 0.0
    %985 = vmatpush1.msra.mxu0 0.0
    %986 = vmatprep.subr.mxu0 0.0
    %987 = vmatpush1.msra.mxu0 0.0
    %988 = vmatprep.subr.mxu0 0.0
    %989 = vmatpush1.msra.mxu0 0.0
    %990 = vmatprep.subr.mxu0 0.0
    %991 = vmatpush1.msra.mxu0 0.0
    %992 = vmatprep.subr.mxu0 0.0
    %993 = vmatpush1.msra.mxu0 0.0
    %994 = vmatprep.mubr.f32.mxu0 0.0
    %995 = vmatmul.mubr.f32.gmra.mrb[0].mxu0 %v928
    %v996 = vpop.f32.mrb[0].mxu0
    %v997 = vadd.f32 0.0, %v996
    %v998 = vpop.f32.mrb[0].mxu0
    %999 = vdwg.mxu0
    %v1000 = vsel %vm701, %v67, 0
    %1002 = vmatprep.subr.mxu0 0.0
    %1003 = vmatpush1.msra.mxu0 %v913
    %1004 = vmatprep.subr.mxu0 0.0
    %1005 = vmatpush1.msra.mxu0 0.0
    %1006 = vmatprep.subr.mxu0 0.0
    %1007 = vmatpush1.msra.mxu0 0.0
    %1008 = vmatprep.subr.mxu0 0.0
    %1009 = vmatpush1.msra.mxu0 0.0
    %1010 = vmatprep.subr.mxu0 0.0
    %1011 = vmatpush1.msra.mxu0 0.0
    %1012 = vmatprep.subr.mxu0 0.0
    %1013 = vmatpush1.msra.mxu0 0.0
    %1014 = vmatprep.subr.mxu0 0.0
    %1015 = vmatpush1.msra.mxu0 0.0
    %1016 = vmatprep.subr.mxu0 0.0
    %1017 = vmatpush1.msra.mxu0 0.0
    %1018 = vmatprep.subr.mxu0 0.0
    %1019 = vmatpush1.msra.mxu0 0.0
    %1020 = vmatprep.subr.mxu0 0.0
    %1021 = vmatpush1.msra.mxu0 0.0
    %1022 = vmatprep.subr.mxu0 0.0
    %1023 = vmatpush1.msra.mxu0 0.0
    %1024 = vmatprep.subr.mxu0 0.0
    %1025 = vmatpush1.msra.mxu0 0.0
    %1026 = vmatprep.subr.mxu0 0.0
    %1027 = vmatpush1.msra.mxu0 0.0
    %1028 = vmatprep.subr.mxu0 0.0
    %1029 = vmatpush1.msra.mxu0 0.0
    %1030 = vmatprep.subr.mxu0 0.0
    %1031 = vmatpush1.msra.mxu0 0.0
    %1032 = vmatprep.subr.mxu0 0.0
    %1033 = vmatpush1.msra.mxu0 0.0
    %1034 = vmatprep.subr.mxu0 0.0
    %1035 = vmatpush1.msra.mxu0 0.0
    %1036 = vmatprep.subr.mxu0 0.0
    %1037 = vmatpush1.msra.mxu0 0.0
    %1038 = vmatprep.subr.mxu0 0.0
    %1039 = vmatpush1.msra.mxu0 0.0
    %1040 = vmatprep.subr.mxu0 0.0
    %1041 = vmatpush1.msra.mxu0 0.0
    %1042 = vmatprep.subr.mxu0 0.0
    %1043 = vmatpush1.msra.mxu0 0.0
    %1044 = vmatprep.subr.mxu0 0.0
    %1045 = vmatpush1.msra.mxu0 0.0
    %1046 = vmatprep.subr.mxu0 0.0
    %1047 = vmatpush1.msra.mxu0 0.0
    %1048 = vmatprep.subr.mxu0 0.0
    %1049 = vmatpush1.msra.mxu0 0.0
    %1050 = vmatprep.subr.mxu0 0.0
    %1051 = vmatpush1.msra.mxu0 0.0
    %1052 = vmatprep.subr.mxu0 0.0
    %1053 = vmatpush1.msra.mxu0 0.0
    %1054 = vmatprep.subr.mxu0 0.0
    %1055 = vmatpush1.msra.mxu0 0.0
    %1056 = vmatprep.subr.mxu0 0.0
    %1057 = vmatpush1.msra.mxu0 0.0
    %1058 = vmatprep.subr.mxu0 0.0
    %1059 = vmatpush1.msra.mxu0 0.0
    %1060 = vmatprep.subr.mxu0 0.0
    %1061 = vmatpush1.msra.mxu0 0.0
    %1062 = vmatprep.subr.mxu0 0.0
    %1063 = vmatpush1.msra.mxu0 0.0
    %1064 = vmatprep.subr.mxu0 0.0
    %1065 = vmatpush1.msra.mxu0 0.0
    %1066 = vmatprep.mubr.f32.mxu0 0.0
    %1067 = vmatmul.mubr.f32.gmra.mrb[0].mxu0 %v1000
    %v1068 = vpop.f32.mrb[0].mxu0
    %v1069 = vadd.f32 0.0, %v1068
    %v1070 = vpop.f32.mrb[0].mxu0
    %1071 = vdwg.mxu0
    %v1072 = vsel %vm701, %v71, 0
    %1074 = vmatprep.subr.mxu0 0.0
    %1075 = vmatpush1.msra.mxu0 %v913
    %1076 = vmatprep.subr.mxu0 0.0
    %1077 = vmatpush1.msra.mxu0 0.0
    %1078 = vmatprep.subr.mxu0 0.0
    %1079 = vmatpush1.msra.mxu0 0.0
    %1080 = vmatprep.subr.mxu0 0.0
    %1081 = vmatpush1.msra.mxu0 0.0
    %1082 = vmatprep.subr.mxu0 0.0
    %1083 = vmatpush1.msra.mxu0 0.0
    %1084 = vmatprep.subr.mxu0 0.0
    %1085 = vmatpush1.msra.mxu0 0.0
    %1086 = vmatprep.subr.mxu0 0.0
    %1087 = vmatpush1.msra.mxu0 0.0
    %1088 = vmatprep.subr.mxu0 0.0
    %1089 = vmatpush1.msra.mxu0 0.0
    %1090 = vmatprep.subr.mxu0 0.0
    %1091 = vmatpush1.msra.mxu0 0.0
    %1092 = vmatprep.subr.mxu0 0.0
    %1093 = vmatpush1.msra.mxu0 0.0
    %1094 = vmatprep.subr.mxu0 0.0
    %1095 = vmatpush1.msra.mxu0 0.0
    %1096 = vmatprep.subr.mxu0 0.0
    %1097 = vmatpush1.msra.mxu0 0.0
    %1098 = vmatprep.subr.mxu0 0.0
    %1099 = vmatpush1.msra.mxu0 0.0
    %1100 = vmatprep.subr.mxu0 0.0
    %1101 = vmatpush1.msra.mxu0 0.0
    %1102 = vmatprep.subr.mxu0 0.0
    %1103 = vmatpush1.msra.mxu0 0.0
    %1104 = vmatprep.subr.mxu0 0.0
    %1105 = vmatpush1.msra.mxu0 0.0
    %1106 = vmatprep.subr.mxu0 0.0
    %1107 = vmatpush1.msra.mxu0 0.0
    %1108 = vmatprep.subr.mxu0 0.0
    %1109 = vmatpush1.msra.mxu0 0.0
    %1110 = vmatprep.subr.mxu0 0.0
    %1111 = vmatpush1.msra.mxu0 0.0
    %1112 = vmatprep.subr.mxu0 0.0
    %1113 = vmatpush1.msra.mxu0 0.0
    %1114 = vmatprep.subr.mxu0 0.0
    %1115 = vmatpush1.msra.mxu0 0.0
    %1116 = vmatprep.subr.mxu0 0.0
    %1117 = vmatpush1.msra.mxu0 0.0
    %1118 = vmatprep.subr.mxu0 0.0
    %1119 = vmatpush1.msra.mxu0 0.0
    %1120 = vmatprep.subr.mxu0 0.0
    %1121 = vmatpush1.msra.mxu0 0.0
    %1122 = vmatprep.subr.mxu0 0.0
    %1123 = vmatpush1.msra.mxu0 0.0
    %1124 = vmatprep.subr.mxu0 0.0
    %1125 = vmatpush1.msra.mxu0 0.0
    %1126 = vmatprep.subr.mxu0 0.0
    %1127 = vmatpush1.msra.mxu0 0.0
    %1128 = vmatprep.subr.mxu0 0.0
    %1129 = vmatpush1.msra.mxu0 0.0
    %1130 = vmatprep.subr.mxu0 0.0
    %1131 = vmatpush1.msra.mxu0 0.0
    %1132 = vmatprep.subr.mxu0 0.0
    %1133 = vmatpush1.msra.mxu0 0.0
    %1134 = vmatprep.subr.mxu0 0.0
    %1135 = vmatpush1.msra.mxu0 0.0
    %1136 = vmatprep.subr.mxu0 0.0
    %1137 = vmatpush1.msra.mxu0 0.0
    %1138 = vmatprep.mubr.f32.mxu0 0.0
    %1139 = vmatmul.mubr.f32.gmra.mrb[0].mxu0 %v1072
    %v1140 = vpop.f32.mrb[0].mxu0
    %v1141 = vadd.f32 0.0, %v1140
    %v1142 = vpop.f32.mrb[0].mxu0
    %1143 = vdwg.mxu0
    %1145 = vrot.lane.b32.xlu0 %v1069, 32
    %v1146 = vpop.permute.xlu0 %1145
    %1149 = vrot.lane.b32.xlu0 %v1141, 64
    %v1150 = vpop.permute.xlu0 %1149
    %v1152 = vsel %vm301, %v997, %v1146
    %vm1153 = vcmask 523264
    %v1154 = vsel %vm1153, %v1152, %v1150
    %vm1155 = vcmask 785408
    %v1157 = vsel %vm1155, %v1154, 0
    %1159 = vmatprep.subr.mxu0 0.0
    %1160 = vmatpush1.msra.mxu0 %v915
    %1161 = vmatprep.subr.mxu0 0.0
    %1162 = vmatpush1.msra.mxu0 %v916
    %1163 = vmatprep.subr.mxu0 0.0
    %1164 = vmatpush1.msra.mxu0 %v917
    %1165 = vmatprep.subr.mxu0 0.0
    %1166 = vmatpush1.msra.mxu0 %v918
    %1167 = vmatprep.subr.mxu0 0.0
    %1168 = vmatpush1.msra.mxu0 %v919
    %1169 = vmatprep.subr.mxu0 0.0
    %1170 = vmatpush1.msra.mxu0 %v920
    %1171 = vmatprep.subr.mxu0 0.0
    %1172 = vmatpush1.msra.mxu0 %v921
    %1173 = vmatprep.subr.mxu0 0.0
    %1174 = vmatpush1.msra.mxu0 %v922
    %1175 = vmatprep.subr.mxu0 0.0
    %1176 = vmatpush1.msra.mxu0 %v923
    %1177 = vmatprep.subr.mxu0 0.0
    %1178 = vmatpush1.msra.mxu0 %v924
    %1179 = vmatprep.subr.mxu0 0.0
    %1180 = vmatpush1.msra.mxu0 %v925
    %1181 = vmatprep.subr.mxu0 0.0
    %1182 = vmatpush1.msra.mxu0 %v926
    %1183 = vmatprep.subr.mxu0 0.0
    %1184 = vmatpush1.msra.mxu0 0.0
    %1185 = vmatprep.subr.mxu0 0.0
    %1186 = vmatpush1.msra.mxu0 0.0
    %1187 = vmatprep.subr.mxu0 0.0
    %1188 = vmatpush1.msra.mxu0 0.0
    %1189 = vmatprep.subr.mxu0 0.0
    %1190 = vmatpush1.msra.mxu0 0.0
    %1191 = vmatprep.subr.mxu0 0.0
    %1192 = vmatpush1.msra.mxu0 0.0
    %1193 = vmatprep.subr.mxu0 0.0
    %1194 = vmatpush1.msra.mxu0 0.0
    %1195 = vmatprep.subr.mxu0 0.0
    %1196 = vmatpush1.msra.mxu0 0.0
    %1197 = vmatprep.subr.mxu0 0.0
    %1198 = vmatpush1.msra.mxu0 0.0
    %1199 = vmatprep.subr.mxu0 0.0
    %1200 = vmatpush1.msra.mxu0 0.0
    %1201 = vmatprep.subr.mxu0 0.0
    %1202 = vmatpush1.msra.mxu0 0.0
    %1203 = vmatprep.subr.mxu0 0.0
    %1204 = vmatpush1.msra.mxu0 0.0
    %1205 = vmatprep.subr.mxu0 0.0
    %1206 = vmatpush1.msra.mxu0 0.0
    %1207 = vmatprep.subr.mxu0 0.0
    %1208 = vmatpush1.msra.mxu0 0.0
    %1209 = vmatprep.subr.mxu0 0.0
    %1210 = vmatpush1.msra.mxu0 0.0
    %1211 = vmatprep.subr.mxu0 0.0
    %1212 = vmatpush1.msra.mxu0 0.0
    %1213 = vmatprep.subr.mxu0 0.0
    %1214 = vmatpush1.msra.mxu0 0.0
    %1215 = vmatprep.subr.mxu0 0.0
    %1216 = vmatpush1.msra.mxu0 0.0
    %1217 = vmatprep.subr.mxu0 0.0
    %1218 = vmatpush1.msra.mxu0 0.0
    %1219 = vmatprep.subr.mxu0 0.0
    %1220 = vmatpush1.msra.mxu0 0.0
    %1221 = vmatprep.subr.mxu0 0.0
    %1222 = vmatpush1.msra.mxu0 0.0
    %1223 = vmatprep.mubr.f32.mxu0 0.0
    %1224 = vmatmul.mubr.f32.gmra.mrb[0].mxu0 %v1157
    %v1225 = vpop.f32.mrb[0].mxu0
    %v1226 = vadd.f32 0.0, %v1225
    %v1227 = vpop.f32.mrb[0].mxu0
    %1228 = vdwg.mxu0
    %1229 = vmatprep.subr.mxu0 0.0
    %1230 = vmatpush1.msra.mxu0 %v914
    %1231 = vmatprep.subr.mxu0 0.0
    %1232 = vmatpush1.msra.mxu0 0.0
    %1233 = vmatprep.subr.mxu0 0.0
    %1234 = vmatpush1.msra.mxu0 0.0
    %1235 = vmatprep.subr.mxu0 0.0
    %1236 = vmatpush1.msra.mxu0 0.0
    %1237 = vmatprep.subr.mxu0 0.0
    %1238 = vmatpush1.msra.mxu0 0.0
    %1239 = vmatprep.subr.mxu0 0.0
    %1240 = vmatpush1.msra.mxu0 0.0
    %1241 = vmatprep.subr.mxu0 0.0
    %1242 = vmatpush1.msra.mxu0 0.0
    %1243 = vmatprep.subr.mxu0 0.0
    %1244 = vmatpush1.msra.mxu0 0.0
    %1245 = vmatprep.subr.mxu0 0.0
    %1246 = vmatpush1.msra.mxu0 0.0
    %1247 = vmatprep.subr.mxu0 0.0
    %1248 = vmatpush1.msra.mxu0 0.0
    %1249 = vmatprep.subr.mxu0 0.0
    %1250 = vmatpush1.msra.mxu0 0.0
    %1251 = vmatprep.subr.mxu0 0.0
    %1252 = vmatpush1.msra.mxu0 0.0
    %1253 = vmatprep.subr.mxu0 0.0
    %1254 = vmatpush1.msra.mxu0 0.0
    %1255 = vmatprep.subr.mxu0 0.0
    %1256 = vmatpush1.msra.mxu0 0.0
    %1257 = vmatprep.subr.mxu0 0.0
    %1258 = vmatpush1.msra.mxu0 0.0
    %1259 = vmatprep.subr.mxu0 0.0
    %1260 = vmatpush1.msra.mxu0 0.0
    %1261 = vmatprep.subr.mxu0 0.0
    %1262 = vmatpush1.msra.mxu0 0.0
    %1263 = vmatprep.subr.mxu0 0.0
    %1264 = vmatpush1.msra.mxu0 0.0
    %1265 = vmatprep.subr.mxu0 0.0
    %1266 = vmatpush1.msra.mxu0 0.0
    %1267 = vmatprep.subr.mxu0 0.0
    %1268 = vmatpush1.msra.mxu0 0.0
    %1269 = vmatprep.subr.mxu0 0.0
    %1270 = vmatpush1.msra.mxu0 0.0
    %1271 = vmatprep.subr.mxu0 0.0
    %1272 = vmatpush1.msra.mxu0 0.0
    %1273 = vmatprep.subr.mxu0 0.0
    %1274 = vmatpush1.msra.mxu0 0.0
    %1275 = vmatprep.subr.mxu0 0.0
    %1276 = vmatpush1.msra.mxu0 0.0
    %1277 = vmatprep.subr.mxu0 0.0
    %1278 = vmatpush1.msra.mxu0 0.0
    %1279 = vmatprep.subr.mxu0 0.0
    %1280 = vmatpush1.msra.mxu0 0.0
    %1281 = vmatprep.subr.mxu0 0.0
    %1282 = vmatpush1.msra.mxu0 0.0
    %1283 = vmatprep.subr.mxu0 0.0
    %1284 = vmatpush1.msra.mxu0 0.0
    %1285 = vmatprep.subr.mxu0 0.0
    %1286 = vmatpush1.msra.mxu0 0.0
    %1287 = vmatprep.subr.mxu0 0.0
    %1288 = vmatpush1.msra.mxu0 0.0
    %1289 = vmatprep.subr.mxu0 0.0
    %1290 = vmatpush1.msra.mxu0 0.0
    %1291 = vmatprep.subr.mxu0 0.0
    %1292 = vmatpush1.msra.mxu0 0.0
    %1293 = vmatprep.mubr.f32.mxu0 0.0
    %1294 = vmatmul.mubr.f32.gmra.mrb[0].mxu0 %v928
    %v1295 = vpop.f32.mrb[0].mxu0
    %v1296 = vadd.f32 0.0, %v1295
    %v1297 = vpop.f32.mrb[0].mxu0
    %1298 = vdwg.mxu0
    %1299 = vmatprep.subr.mxu0 0.0
    %1300 = vmatpush1.msra.mxu0 %v914
    %1301 = vmatprep.subr.mxu0 0.0
    %1302 = vmatpush1.msra.mxu0 0.0
    %1303 = vmatprep.subr.mxu0 0.0
    %1304 = vmatpush1.msra.mxu0 0.0
    %1305 = vmatprep.subr.mxu0 0.0
    %1306 = vmatpush1.msra.mxu0 0.0
    %1307 = vmatprep.subr.mxu0 0.0
    %1308 = vmatpush1.msra.mxu0 0.0
    %1309 = vmatprep.subr.mxu0 0.0
    %1310 = vmatpush1.msra.mxu0 0.0
    %1311 = vmatprep.subr.mxu0 0.0
    %1312 = vmatpush1.msra.mxu0 0.0
    %1313 = vmatprep.subr.mxu0 0.0
    %1314 = vmatpush1.msra.mxu0 0.0
    %1315 = vmatprep.subr.mxu0 0.0
    %1316 = vmatpush1.msra.mxu0 0.0
    %1317 = vmatprep.subr.mxu0 0.0
    %1318 = vmatpush1.msra.mxu0 0.0
    %1319 = vmatprep.subr.mxu0 0.0
    %1320 = vmatpush1.msra.mxu0 0.0
    %1321 = vmatprep.subr.mxu0 0.0
    %1322 = vmatpush1.msra.mxu0 0.0
    %1323 = vmatprep.subr.mxu0 0.0
    %1324 = vmatpush1.msra.mxu0 0.0
    %1325 = vmatprep.subr.mxu0 0.0
    %1326 = vmatpush1.msra.mxu0 0.0
    %1327 = vmatprep.subr.mxu0 0.0
    %1328 = vmatpush1.msra.mxu0 0.0
    %1329 = vmatprep.subr.mxu0 0.0
    %1330 = vmatpush1.msra.mxu0 0.0
    %1331 = vmatprep.subr.mxu0 0.0
    %1332 = vmatpush1.msra.mxu0 0.0
    %1333 = vmatprep.subr.mxu0 0.0
    %1334 = vmatpush1.msra.mxu0 0.0
    %1335 = vmatprep.subr.mxu0 0.0
    %1336 = vmatpush1.msra.mxu0 0.0
    %1337 = vmatprep.subr.mxu0 0.0
    %1338 = vmatpush1.msra.mxu0 0.0
    %1339 = vmatprep.subr.mxu0 0.0
    %1340 = vmatpush1.msra.mxu0 0.0
    %1341 = vmatprep.subr.mxu0 0.0
    %1342 = vmatpush1.msra.mxu0 0.0
    %1343 = vmatprep.subr.mxu0 0.0
    %1344 = vmatpush1.msra.mxu0 0.0
    %1345 = vmatprep.subr.mxu0 0.0
    %1346 = vmatpush1.msra.mxu0 0.0
    %1347 = vmatprep.subr.mxu0 0.0
    %1348 = vmatpush1.msra.mxu0 0.0
    %1349 = vmatprep.subr.mxu0 0.0
    %1350 = vmatpush1.msra.mxu0 0.0
    %1351 = vmatprep.subr.mxu0 0.0
    %1352 = vmatpush1.msra.mxu0 0.0
    %1353 = vmatprep.subr.mxu0 0.0
    %1354 = vmatpush1.msra.mxu0 0.0
    %1355 = vmatprep.subr.mxu0 0.0
    %1356 = vmatpush1.msra.mxu0 0.0
    %1357 = vmatprep.subr.mxu0 0.0
    %1358 = vmatpush1.msra.mxu0 0.0
    %1359 = vmatprep.subr.mxu0 0.0
    %1360 = vmatpush1.msra.mxu0 0.0
    %1361 = vmatprep.subr.mxu0 0.0
    %1362 = vmatpush1.msra.mxu0 0.0
    %1363 = vmatprep.mubr.f32.mxu0 0.0
    %1364 = vmatmul.mubr.f32.gmra.mrb[0].mxu0 %v1000
    %v1365 = vpop.f32.mrb[0].mxu0
    %v1366 = vadd.f32 0.0, %v1365
    %v1367 = vpop.f32.mrb[0].mxu0
    %1368 = vdwg.mxu0
    %1369 = vmatprep.subr.mxu0 0.0
    %1370 = vmatpush1.msra.mxu0 %v914
    %1371 = vmatprep.subr.mxu0 0.0
    %1372 = vmatpush1.msra.mxu0 0.0
    %1373 = vmatprep.subr.mxu0 0.0
    %1374 = vmatpush1.msra.mxu0 0.0
    %1375 = vmatprep.subr.mxu0 0.0
    %1376 = vmatpush1.msra.mxu0 0.0
    %1377 = vmatprep.subr.mxu0 0.0
    %1378 = vmatpush1.msra.mxu0 0.0
    %1379 = vmatprep.subr.mxu0 0.0
    %1380 = vmatpush1.msra.mxu0 0.0
    %1381 = vmatprep.subr.mxu0 0.0
    %1382 = vmatpush1.msra.mxu0 0.0
    %1383 = vmatprep.subr.mxu0 0.0
    %1384 = vmatpush1.msra.mxu0 0.0
    %1385 = vmatprep.subr.mxu0 0.0
    %1386 = vmatpush1.msra.mxu0 0.0
    %1387 = vmatprep.subr.mxu0 0.0
    %1388 = vmatpush1.msra.mxu0 0.0
    %1389 = vmatprep.subr.mxu0 0.0
    %1390 = vmatpush1.msra.mxu0 0.0
    %1391 = vmatprep.subr.mxu0 0.0
    %1392 = vmatpush1.msra.mxu0 0.0
    %1393 = vmatprep.subr.mxu0 0.0
    %1394 = vmatpush1.msra.mxu0 0.0
    %1395 = vmatprep.subr.mxu0 0.0
    %1396 = vmatpush1.msra.mxu0 0.0
    %1397 = vmatprep.subr.mxu0 0.0
    %1398 = vmatpush1.msra.mxu0 0.0
    %1399 = vmatprep.subr.mxu0 0.0
    %1400 = vmatpush1.msra.mxu0 0.0
    %1401 = vmatprep.subr.mxu0 0.0
    %1402 = vmatpush1.msra.mxu0 0.0
    %1403 = vmatprep.subr.mxu0 0.0
    %1404 = vmatpush1.msra.mxu0 0.0
    %1405 = vmatprep.subr.mxu0 0.0
    %1406 = vmatpush1.msra.mxu0 0.0
    %1407 = vmatprep.subr.mxu0 0.0
    %1408 = vmatpush1.msra.mxu0 0.0
    %1409 = vmatprep.subr.mxu0 0.0
    %1410 = vmatpush1.msra.mxu0 0.0
    %1411 = vmatprep.subr.mxu0 0.0
    %1412 = vmatpush1.msra.mxu0 0.0
    %1413 = vmatprep.subr.mxu0 0.0
    %1414 = vmatpush1.msra.mxu0 0.0
    %1415 = vmatprep.subr.mxu0 0.0
    %1416 = vmatpush1.msra.mxu0 0.0
    %1417 = vmatprep.subr.mxu0 0.0
    %1418 = vmatpush1.msra.mxu0 0.0
    %1419 = vmatprep.subr.mxu0 0.0
    %1420 = vmatpush1.msra.mxu0 0.0
    %1421 = vmatprep.subr.mxu0 0.0
    %1422 = vmatpush1.msra.mxu0 0.0
    %1423 = vmatprep.subr.mxu0 0.0
    %1424 = vmatpush1.msra.mxu0 0.0
    %1425 = vmatprep.subr.mxu0 0.0
    %1426 = vmatpush1.msra.mxu0 0.0
    %1427 = vmatprep.subr.mxu0 0.0
    %1428 = vmatpush1.msra.mxu0 0.0
    %1429 = vmatprep.subr.mxu0 0.0
    %1430 = vmatpush1.msra.mxu0 0.0
    %1431 = vmatprep.subr.mxu0 0.0
    %1432 = vmatpush1.msra.mxu0 0.0
    %1433 = vmatprep.mubr.f32.mxu0 0.0
    %1434 = vmatmul.mubr.f32.gmra.mrb[0].mxu0 %v1072
    %v1435 = vpop.f32.mrb[0].mxu0
    %v1436 = vadd.f32 0.0, %v1435
    %v1437 = vpop.f32.mrb[0].mxu0
    %1438 = vdwg.mxu0
    %1440 = vrot.lane.b32.xlu0 %v1366, 32
    %v1441 = vpop.permute.xlu0 %1440
    %1444 = vrot.lane.b32.xlu0 %v1436, 64
    %v1445 = vpop.permute.xlu0 %1444
    %v1447 = vsel %vm301, %v1296, %v1441
    %v1448 = vsel %vm1153, %v1447, %v1445
    %v1450 = vsel %vm1155, %v1448, 0
    %1452 = vmatprep.subr.mxu0 0.0
    %1453 = vmatpush1.msra.mxu0 %v915
    %1454 = vmatprep.subr.mxu0 0.0
    %1455 = vmatpush1.msra.mxu0 %v916
    %1456 = vmatprep.subr.mxu0 0.0
    %1457 = vmatpush1.msra.mxu0 %v917
    %1458 = vmatprep.subr.mxu0 0.0
    %1459 = vmatpush1.msra.mxu0 %v918
    %1460 = vmatprep.subr.mxu0 0.0
    %1461 = vmatpush1.msra.mxu0 %v919
    %1462 = vmatprep.subr.mxu0 0.0
    %1463 = vmatpush1.msra.mxu0 %v920
    %1464 = vmatprep.subr.mxu0 0.0
    %1465 = vmatpush1.msra.mxu0 %v921
    %1466 = vmatprep.subr.mxu0 0.0
    %1467 = vmatpush1.msra.mxu0 %v922
    %1468 = vmatprep.subr.mxu0 0.0
    %1469 = vmatpush1.msra.mxu0 %v923
    %1470 = vmatprep.subr.mxu0 0.0
    %1471 = vmatpush1.msra.mxu0 %v924
    %1472 = vmatprep.subr.mxu0 0.0
    %1473 = vmatpush1.msra.mxu0 %v925
    %1474 = vmatprep.subr.mxu0 0.0
    %1475 = vmatpush1.msra.mxu0 %v926
    %1476 = vmatprep.subr.mxu0 0.0
    %1477 = vmatpush1.msra.mxu0 0.0
    %1478 = vmatprep.subr.mxu0 0.0
    %1479 = vmatpush1.msra.mxu0 0.0
    %1480 = vmatprep.subr.mxu0 0.0
    %1481 = vmatpush1.msra.mxu0 0.0
    %1482 = vmatprep.subr.mxu0 0.0
    %1483 = vmatpush1.msra.mxu0 0.0
    %1484 = vmatprep.subr.mxu0 0.0
    %1485 = vmatpush1.msra.mxu0 0.0
    %1486 = vmatprep.subr.mxu0 0.0
    %1487 = vmatpush1.msra.mxu0 0.0
    %1488 = vmatprep.subr.mxu0 0.0
    %1489 = vmatpush1.msra.mxu0 0.0
    %1490 = vmatprep.subr.mxu0 0.0
    %1491 = vmatpush1.msra.mxu0 0.0
    %1492 = vmatprep.subr.mxu0 0.0
    %1493 = vmatpush1.msra.mxu0 0.0
    %1494 = vmatprep.subr.mxu0 0.0
    %1495 = vmatpush1.msra.mxu0 0.0
    %1496 = vmatprep.subr.mxu0 0.0
    %1497 = vmatpush1.msra.mxu0 0.0
    %1498 = vmatprep.subr.mxu0 0.0
    %1499 = vmatpush1.msra.mxu0 0.0
    %1500 = vmatprep.subr.mxu0 0.0
    %1501 = vmatpush1.msra.mxu0 0.0
    %1502 = vmatprep.subr.mxu0 0.0
    %1503 = vmatpush1.msra.mxu0 0.0
    %1504 = vmatprep.subr.mxu0 0.0
    %1505 = vmatpush1.msra.mxu0 0.0
    %1506 = vmatprep.subr.mxu0 0.0
    %1507 = vmatpush1.msra.mxu0 0.0
    %1508 = vmatprep.subr.mxu0 0.0
    %1509 = vmatpush1.msra.mxu0 0.0
    %1510 = vmatprep.subr.mxu0 0.0
    %1511 = vmatpush1.msra.mxu0 0.0
    %1512 = vmatprep.subr.mxu0 0.0
    %1513 = vmatpush1.msra.mxu0 0.0
    %1514 = vmatprep.subr.mxu0 0.0
    %1515 = vmatpush1.msra.mxu0 0.0
    %1516 = vmatprep.mubr.f32.mxu0 0.0
    %1517 = vmatmul.mubr.f32.gmra.mrb[0].mxu0 %v1450
    %v1518 = vpop.f32.mrb[0].mxu0
    %v1519 = vadd.f32 0.0, %v1518
    %v1520 = vpop.f32.mrb[0].mxu0
    %1521 = vdwg.mxu0
    %v1523 = vrot.slane %v1519, 4
    %v1525 = vsel %vm676, %v1226, %v1523
    %v1526 = vsel %vm701, %v672, %v682
    %v1527 = vsel %vm72, %v1526, %v688
    %v1528 = vsel %vm708, %v1527, %v694
    %v1529 = vsel %vm301, %v1525, 0.0
    %v1530 = vrot.slane %v1529, 4
    %v1531 = vadd.f32 %v1529, %v1530
    %v1532 = vrot.slane %v1531, 2
    %v1533 = vadd.f32 %v1531, %v1532
    %v1534 = vrot.slane %v1533, 1
    %v1535 = vadd.f32 %v1533, %v1534
    %v1536 = vmul.f32 %v1525, %v1525
    %v1537 = vsel %vm301, %v1536, 0.0
    %v1538 = vrot.slane %v1537, 4
    %v1539 = vadd.f32 %v1537, %v1538
    %v1540 = vrot.slane %v1539, 2
    %v1541 = vadd.f32 %v1539, %v1540
    %v1542 = vrot.slane %v1541, 1
    %v1543 = vadd.f32 %v1541, %v1542
    %v1544 = vsel %vm732, %v1535, %v1543
    %v1546 = vsel %vm301, %v1544, 0
    %1548 = vmatprep.subr.mxu0 0.0
    %1549 = vmatpush1.msra.mxu0 %v672
    %1550 = vmatprep.subr.mxu0 0.0
    %1551 = vmatpush1.msra.mxu0 %v672
    %1552 = vmatprep.subr.mxu0 0.0
    %1553 = vmatpush1.msra.mxu0 %v672
    %1554 = vmatprep.subr.mxu0 0.0
    %1555 = vmatpush1.msra.mxu0 %v672
    %1556 = vmatprep.subr.mxu0 0.0
    %1557 = vmatpush1.msra.mxu0 0.0
    %1558 = vmatprep.subr.mxu0 0.0
    %1559 = vmatpush1.msra.mxu0 0.0
    %1560 = vmatprep.subr.mxu0 0.0
    %1561 = vmatpush1.msra.mxu0 0.0
    %1562 = vmatprep.subr.mxu0 0.0
    %1563 = vmatpush1.msra.mxu0 0.0
    %1564 = vmatprep.subr.mxu0 0.0
    %1565 = vmatpush1.msra.mxu0 0.0
    %1566 = vmatprep.subr.mxu0 0.0
    %1567 = vmatpush1.msra.mxu0 0.0
    %1568 = vmatprep.subr.mxu0 0.0
    %1569 = vmatpush1.msra.mxu0 0.0
    %1570 = vmatprep.subr.mxu0 0.0
    %1571 = vmatpush1.msra.mxu0 0.0
    %1572 = vmatprep.subr.mxu0 0.0
    %1573 = vmatpush1.msra.mxu0 0.0
    %1574 = vmatprep.subr.mxu0 0.0
    %1575 = vmatpush1.msra.mxu0 0.0
    %1576 = vmatprep.subr.mxu0 0.0
    %1577 = vmatpush1.msra.mxu0 0.0
    %1578 = vmatprep.subr.mxu0 0.0
    %1579 = vmatpush1.msra.mxu0 0.0
    %1580 = vmatprep.subr.mxu0 0.0
    %1581 = vmatpush1.msra.mxu0 0.0
    %1582 = vmatprep.subr.mxu0 0.0
    %1583 = vmatpush1.msra.mxu0 0.0
    %1584 = vmatprep.subr.mxu0 0.0
    %1585 = vmatpush1.msra.mxu0 0.0
    %1586 = vmatprep.subr.mxu0 0.0
    %1587 = vmatpush1.msra.mxu0 0.0
    %1588 = vmatprep.subr.mxu0 0.0
    %1589 = vmatpush1.msra.mxu0 0.0
    %1590 = vmatprep.subr.mxu0 0.0
    %1591 = vmatpush1.msra.mxu0 0.0
    %1592 = vmatprep.subr.mxu0 0.0
    %1593 = vmatpush1.msra.mxu0 0.0
    %1594 = vmatprep.subr.mxu0 0.0
    %1595 = vmatpush1.msra.mxu0 0.0
    %1596 = vmatprep.subr.mxu0 0.0
    %1597 = vmatpush1.msra.mxu0 0.0
    %1598 = vmatprep.subr.mxu0 0.0
    %1599 = vmatpush1.msra.mxu0 0.0
    %1600 = vmatprep.subr.mxu0 0.0
    %1601 = vmatpush1.msra.mxu0 0.0
    %1602 = vmatprep.subr.mxu0 0.0
    %1603 = vmatpush1.msra.mxu0 0.0
    %1604 = vmatprep.subr.mxu0 0.0
    %1605 = vmatpush1.msra.mxu0 0.0
    %1606 = vmatprep.subr.mxu0 0.0
    %1607 = vmatpush1.msra.mxu0 0.0
    %1608 = vmatprep.subr.mxu0 0.0
    %1609 = vmatpush1.msra.mxu0 0.0
    %1610 = vmatprep.subr.mxu0 0.0
    %1611 = vmatpush1.msra.mxu0 0.0
    %1612 = vmatprep.mubr.f32.mxu0 0.0
    %1613 = vmatmul.mubr.f32.gmra.mrb[0].mxu0 %v1546
    %v1614 = vpop.f32.mrb[0].mxu0
    %v1615 = vadd.f32 0.0, %v1614
    %v1616 = vpop.f32.mrb[0].mxu0
    %1617 = vdwg.mxu0
    %v1618 = vmul.f32 %v1615, 0.03125
    %v1619 = vmul.f32 %v1618, %v1618
    %v1621 = vrot.slane %v1619, 7
    %v1623 = vsub.f32 %v1618, %v1621
    %v1624 = vadd.f32 %v1623, 1e-05
    %v1625 = vrsqrt.pop %v1624
    %v1627 = vrot.slane %v1625, 1
    %v1629 = vmul.f32 %v927, %v1627
    %v1630 = vmul.f32 %v1618, %v1629
    %v1632 = vrot.slane %v1630, 7
    %v1634 = vsub.f32 %v927, %v1632
    %v1635 = vsel %vm732, %v1629, %v1634
    %v1637 = vsel %vm701, %v1635, 0
    %1639 = vmatprep.subr.mxu0 0.0
    %1640 = vmatpush1.msra.mxu0 %v1528
    %1641 = vmatprep.subr.mxu0 0.0
    %1642 = vmatpush1.msra.mxu0 0.0
    %1643 = vmatprep.subr.mxu0 0.0
    %1644 = vmatpush1.msra.mxu0 0.0
    %1645 = vmatprep.subr.mxu0 0.0
    %1646 = vmatpush1.msra.mxu0 0.0
    %1647 = vmatprep.subr.mxu0 0.0
    %1648 = vmatpush1.msra.mxu0 0.0
    %1649 = vmatprep.subr.mxu0 0.0
    %1650 = vmatpush1.msra.mxu0 0.0
    %1651 = vmatprep.subr.mxu0 0.0
    %1652 = vmatpush1.msra.mxu0 0.0
    %1653 = vmatprep.subr.mxu0 0.0
    %1654 = vmatpush1.msra.mxu0 0.0
    %1655 = vmatprep.subr.mxu0 0.0
    %1656 = vmatpush1.msra.mxu0 0.0
    %1657 = vmatprep.subr.mxu0 0.0
    %1658 = vmatpush1.msra.mxu0 0.0
    %1659 = vmatprep.subr.mxu0 0.0
    %1660 = vmatpush1.msra.mxu0 0.0
    %1661 = vmatprep.subr.mxu0 0.0
    %1662 = vmatpush1.msra.mxu0 0.0
    %1663 = vmatprep.subr.mxu0 0.0
    %1664 = vmatpush1.msra.mxu0 0.0
    %1665 = vmatprep.subr.mxu0 0.0
    %1666 = vmatpush1.msra.mxu0 0.0
    %1667 = vmatprep.subr.mxu0 0.0
    %1668 = vmatpush1.msra.mxu0 0.0
    %1669 = vmatprep.subr.mxu0 0.0
    %1670 = vmatpush1.msra.mxu0 0.0
    %1671 = vmatprep.subr.mxu0 0.0
    %1672 = vmatpush1.msra.mxu0 0.0
    %1673 = vmatprep.subr.mxu0 0.0
    %1674 = vmatpush1.msra.mxu0 0.0
    %1675 = vmatprep.subr.mxu0 0.0
    %1676 = vmatpush1.msra.mxu0 0.0
    %1677 = vmatprep.subr.mxu0 0.0
    %1678 = vmatpush1.msra.mxu0 0.0
    %1679 = vmatprep.subr.mxu0 0.0
    %1680 = vmatpush1.msra.mxu0 0.0
    %1681 = vmatprep.subr.mxu0 0.0
    %1682 = vmatpush1.msra.mxu0 0.0
    %1683 = vmatprep.subr.mxu0 0.0
    %1684 = vmatpush1.msra.mxu0 0.0
    %1685 = vmatprep.subr.mxu0 0.0
    %1686 = vmatpush1.msra.mxu0 0.0
    %1687 = vmatprep.subr.mxu0 0.0
    %1688 = vmatpush1.msra.mxu0 0.0
    %1689 = vmatprep.subr.mxu0 0.0
    %1690 = vmatpush1.msra.mxu0 0.0
    %1691 = vmatprep.subr.mxu0 0.0
    %1692 = vmatpush1.msra.mxu0 0.0
    %1693 = vmatprep.subr.mxu0 0.0
    %1694 = vmatpush1.msra.mxu0 0.0
    %1695 = vmatprep.subr.mxu0 0.0
    %1696 = vmatpush1.msra.mxu0 0.0
    %1697 = vmatprep.subr.mxu0 0.0
    %1698 = vmatpush1.msra.mxu0 0.0
    %1699 = vmatprep.subr.mxu0 0.0
    %1700 = vmatpush1.msra.mxu0 0.0
    %1701 = vmatprep.subr.mxu0 0.0
    %1702 = vmatpush1.msra.mxu0 0.0
    %1703 = vmatprep.mubr.f32.mxu0 0.0
    %1704 = vmatmul.mubr.f32.gmra.mrb[0].mxu0 %v1637
    %v1705 = vpop.f32.mrb[0].mxu0
    %v1706 = vadd.f32 0.0, %v1705
    %v1707 = vpop.f32.mrb[0].mxu0
    %1708 = vdwg.mxu0
    %v1709 = vlaneseq
    %v1710 = vshrl.u32 %v1709, 7
    %v1711 = vsub.s32 0, %v1710
    %v1712 = vrot.slane %v1706, %v1711
    %v1713 = vmul.f32 %v1525, %v1712
    %v1714 = vlaneseq
    %v1715 = vshrl.u32 %v1714, 7
    %v1716 = vsub.s32 1, %v1715
    %v1717 = vrot.slane %v1706, %v1716
    %v1718 = vadd.f32 %v1713, %v1717
    %v1719 = vmax.f32 %v1718, 0.0
    %v1720 = vld [vmem:[%s3] sm:$0xff]
    %v1721 = vld [vmem:[%s3 + $0x8] sm:$0xff]
    %v1722 = vld [vmem:[%s3 + $0x10] sm:$0xff]
    %v1723 = vld [vmem:[%s3 + $0x18] sm:$0xff]
    %v1724 = vld [vmem:[%s3 + $0x20] sm:$0xff]
    %v1725 = vld [vmem:[%s3 + $0x28] sm:$0xff]
    %v1726 = vld [vmem:[%s3 + $0x30] sm:$0xff]
    %v1727 = vld [vmem:[%s3 + $0x38] sm:$0xff]
    %v1728 = vld [vmem:[%s3 + $0x40] sm:$0xff]
    %v1729 = vld [vmem:[%s3 + $0x48] sm:$0xff]
    %v1730 = vld [vmem:[%s3 + $0x50] sm:$0xff]
    %v1731 = vld [vmem:[%s3 + $0x58] sm:$0xff]
    %v1732 = vld [vmem:[%s6] sm:$0x3]
    %v1733 = vsel %vm699, %v64, 0
    %v1736 = vsel %vm676, %v1719, 0
    %1738 = vmatprep.subr.mxu0 0.0
    %1739 = vmatpush1.msra.mxu0 %v1736
    %1740 = vmatprep.subr.mxu0 0.0
    %1741 = vmatpush1.msra.mxu0 0.0
    %1742 = vmatprep.subr.mxu0 0.0
    %1743 = vmatpush1.msra.mxu0 0.0
    %1744 = vmatprep.subr.mxu0 0.0
    %1745 = vmatpush1.msra.mxu0 0.0
    %1746 = vmatprep.subr.mxu0 0.0
    %1747 = vmatpush1.msra.mxu0 0.0
    %1748 = vmatprep.subr.mxu0 0.0
    %1749 = vmatpush1.msra.mxu0 0.0
    %1750 = vmatprep.subr.mxu0 0.0
    %1751 = vmatpush1.msra.mxu0 0.0
    %1752 = vmatprep.subr.mxu0 0.0
    %1753 = vmatpush1.msra.mxu0 0.0
    %1754 = vmatprep.subr.mxu0 0.0
    %1755 = vmatpush1.msra.mxu0 0.0
    %1756 = vmatprep.subr.mxu0 0.0
    %1757 = vmatpush1.msra.mxu0 0.0
    %1758 = vmatprep.subr.mxu0 0.0
    %1759 = vmatpush1.msra.mxu0 0.0
    %1760 = vmatprep.subr.mxu0 0.0
    %1761 = vmatpush1.msra.mxu0 0.0
    %1762 = vmatprep.subr.mxu0 0.0
    %1763 = vmatpush1.msra.mxu0 0.0
    %1764 = vmatprep.subr.mxu0 0.0
    %1765 = vmatpush1.msra.mxu0 0.0
    %1766 = vmatprep.subr.mxu0 0.0
    %1767 = vmatpush1.msra.mxu0 0.0
    %1768 = vmatprep.subr.mxu0 0.0
    %1769 = vmatpush1.msra.mxu0 0.0
    %1770 = vmatprep.subr.mxu0 0.0
    %1771 = vmatpush1.msra.mxu0 0.0
    %1772 = vmatprep.subr.mxu0 0.0
    %1773 = vmatpush1.msra.mxu0 0.0
    %1774 = vmatprep.subr.mxu0 0.0
    %1775 = vmatpush1.msra.mxu0 0.0
    %1776 = vmatprep.subr.mxu0 0.0
    %1777 = vmatpush1.msra.mxu0 0.0
    %1778 = vmatprep.subr.mxu0 0.0
    %1779 = vmatpush1.msra.mxu0 0.0
    %1780 = vmatprep.subr.mxu0 0.0
    %1781 = vmatpush1.msra.mxu0 0.0
    %1782 = vmatprep.subr.mxu0 0.0
    %1783 = vmatpush1.msra.mxu0 0.0
    %1784 = vmatprep.subr.mxu0 0.0
    %1785 = vmatpush1.msra.mxu0 0.0
    %1786 = vmatprep.subr.mxu0 0.0
    %1787 = vmatpush1.msra.mxu0 0.0
    %1788 = vmatprep.subr.mxu0 0.0
    %1789 = vmatpush1.msra.mxu0 0.0
    %1790 = vmatprep.subr.mxu0 0.0
    %1791 = vmatpush1.msra.mxu0 0.0
    %1792 = vmatprep.subr.mxu0 0.0
    %1793 = vmatpush1.msra.mxu0 0.0
    %1794 = vmatprep.subr.mxu0 0.0
    %1795 = vmatpush1.msra.mxu0 0.0
    %1796 = vmatprep.subr.mxu0 0.0
    %1797 = vmatpush1.msra.mxu0 0.0
    %1798 = vmatprep.subr.mxu0 0.0
    %1799 = vmatpush1.msra.mxu0 0.0
    %1800 = vmatprep.subr.mxu0 0.0
    %1801 = vmatpush1.msra.mxu0 0.0
    %1802 = vmatprep.mubr.f32.mxu0 0.0
    %1803 = vmatmul.mubr.f32.gmra.mrb[0].mxu0 %v1733
    %v1804 = vpop.f32.mrb[0].mxu0
    %v1805 = vadd.f32 0.0, %v1804
    %v1806 = vpop.f32.mrb[0].mxu0
    %1807 = vdwg.mxu0
    %v1808 = vsel %vm699, %v67, 0
    %1810 = vmatprep.subr.mxu0 0.0
    %1811 = vmatpush1.msra.mxu0 %v1736
    %1812 = vmatprep.subr.mxu0 0.0
    %1813 = vmatpush1.msra.mxu0 0.0
    %1814 = vmatprep.subr.mxu0 0.0
    %1815 = vmatpush1.msra.mxu0 0.0
    %1816 = vmatprep.subr.mxu0 0.0
    %1817 = vmatpush1.msra.mxu0 0.0
    %1818 = vmatprep.subr.mxu0 0.0
    %1819 = vmatpush1.msra.mxu0 0.0
    %1820 = vmatprep.subr.mxu0 0.0
    %1821 = vmatpush1.msra.mxu0 0.0
    %1822 = vmatprep.subr.mxu0 0.0
    %1823 = vmatpush1.msra.mxu0 0.0
    %1824 = vmatprep.subr.mxu0 0.0
    %1825 = vmatpush1.msra.mxu0 0.0
    %1826 = vmatprep.subr.mxu0 0.0
    %1827 = vmatpush1.msra.mxu0 0.0
    %1828 = vmatprep.subr.mxu0 0.0
    %1829 = vmatpush1.msra.mxu0 0.0
    %1830 = vmatprep.subr.mxu0 0.0
    %1831 = vmatpush1.msra.mxu0 0.0
    %1832 = vmatprep.subr.mxu0 0.0
    %1833 = vmatpush1.msra.mxu0 0.0
    %1834 = vmatprep.subr.mxu0 0.0
    %1835 = vmatpush1.msra.mxu0 0.0
    %1836 = vmatprep.subr.mxu0 0.0
    %1837 = vmatpush1.msra.mxu0 0.0
    %1838 = vmatprep.subr.mxu0 0.0
    %1839 = vmatpush1.msra.mxu0 0.0
    %1840 = vmatprep.subr.mxu0 0.0
    %1841 = vmatpush1.msra.mxu0 0.0
    %1842 = vmatprep.subr.mxu0 0.0
    %1843 = vmatpush1.msra.mxu0 0.0
    %1844 = vmatprep.subr.mxu0 0.0
    %1845 = vmatpush1.msra.mxu0 0.0
    %1846 = vmatprep.subr.mxu0 0.0
    %1847 = vmatpush1.msra.mxu0 0.0
    %1848 = vmatprep.subr.mxu0 0.0
    %1849 = vmatpush1.msra.mxu0 0.0
    %1850 = vmatprep.subr.mxu0 0.0
    %1851 = vmatpush1.msra.mxu0 0.0
    %1852 = vmatprep.subr.mxu0 0.0
    %1853 = vmatpush1.msra.mxu0 0.0
    %1854 = vmatprep.subr.mxu0 0.0
    %1855 = vmatpush1.msra.mxu0 0.0
    %1856 = vmatprep.subr.mxu0 0.0
    %1857 = vmatpush1.msra.mxu0 0.0
    %1858 = vmatprep.subr.mxu0 0.0
    %1859 = vmatpush1.msra.mxu0 0.0
    %1860 = vmatprep.subr.mxu0 0.0
    %1861 = vmatpush1.msra.mxu0 0.0
    %1862 = vmatprep.subr.mxu0 0.0
    %1863 = vmatpush1.msra.mxu0 0.0
    %1864 = vmatprep.subr.mxu0 0.0
    %1865 = vmatpush1.msra.mxu0 0.0
    %1866 = vmatprep.subr.mxu0 0.0
    %1867 = vmatpush1.msra.mxu0 0.0
    %1868 = vmatprep.subr.mxu0 0.0
    %1869 = vmatpush1.msra.mxu0 0.0
    %1870 = vmatprep.subr.mxu0 0.0
    %1871 = vmatpush1.msra.mxu0 0.0
    %1872 = vmatprep.subr.mxu0 0.0
    %1873 = vmatpush1.msra.mxu0 0.0
    %1874 = vmatprep.mubr.f32.mxu0 0.0
    %1875 = vmatmul.mubr.f32.gmra.mrb[0].mxu0 %v1808
    %v1876 = vpop.f32.mrb[0].mxu0
    %v1877 = vadd.f32 0.0, %v1876
    %v1878 = vpop.f32.mrb[0].mxu0
    %1879 = vdwg.mxu0
    %v1880 = vsel %vm699, %v71, 0
    %1882 = vmatprep.subr.mxu0 0.0
    %1883 = vmatpush1.msra.mxu0 %v1736
    %1884 = vmatprep.subr.mxu0 0.0
    %1885 = vmatpush1.msra.mxu0 0.0
    %1886 = vmatprep.subr.mxu0 0.0
    %1887 = vmatpush1.msra.mxu0 0.0
    %1888 = vmatprep.subr.mxu0 0.0
    %1889 = vmatpush1.msra.mxu0 0.0
    %1890 = vmatprep.subr.mxu0 0.0
    %1891 = vmatpush1.msra.mxu0 0.0
    %1892 = vmatprep.subr.mxu0 0.0
    %1893 = vmatpush1.msra.mxu0 0.0
    %1894 = vmatprep.subr.mxu0 0.0
    %1895 = vmatpush1.msra.mxu0 0.0
    %1896 = vmatprep.subr.mxu0 0.0
    %1897 = vmatpush1.msra.mxu0 0.0
    %1898 = vmatprep.subr.mxu0 0.0
    %1899 = vmatpush1.msra.mxu0 0.0
    %1900 = vmatprep.subr.mxu0 0.0
    %1901 = vmatpush1.msra.mxu0 0.0
    %1902 = vmatprep.subr.mxu0 0.0
    %1903 = vmatpush1.msra.mxu0 0.0
    %1904 = vmatprep.subr.mxu0 0.0
    %1905 = vmatpush1.msra.mxu0 0.0
    %1906 = vmatprep.subr.mxu0 0.0
    %1907 = vmatpush1.msra.mxu0 0.0
    %1908 = vmatprep.subr.mxu0 0.0
    %1909 = vmatpush1.msra.mxu0 0.0
    %1910 = vmatprep.subr.mxu0 0.0
    %1911 = vmatpush1.msra.mxu0 0.0
    %1912 = vmatprep.subr.mxu0 0.0
    %1913 = vmatpush1.msra.mxu0 0.0
    %1914 = vmatprep.subr.mxu0 0.0
    %1915 = vmatpush1.msra.mxu0 0.0
    %1916 = vmatprep.subr.mxu0 0.0
    %1917 = vmatpush1.msra.mxu0 0.0
    %1918 = vmatprep.subr.mxu0 0.0
    %1919 = vmatpush1.msra.mxu0 0.0
    %1920 = vmatprep.subr.mxu0 0.0
    %1921 = vmatpush1.msra.mxu0 0.0
    %1922 = vmatprep.subr.mxu0 0.0
    %1923 = vmatpush1.msra.mxu0 0.0
    %1924 = vmatprep.subr.mxu0 0.0
    %1925 = vmatpush1.msra.mxu0 0.0
    %1926 = vmatprep.subr.mxu0 0.0
    %1927 = vmatpush1.msra.mxu0 0.0
    %1928 = vmatprep.subr.mxu0 0.0
    %1929 = vmatpush1.msra.mxu0 0.0
    %1930 = vmatprep.subr.mxu0 0.0
    %1931 = vmatpush1.msra.mxu0 0.0
    %1932 = vmatprep.subr.mxu0 0.0
    %1933 = vmatpush1.msra.mxu0 0.0
    %1934 = vmatprep.subr.mxu0 0.0
    %1935 = vmatpush1.msra.mxu0 0.0
    %1936 = vmatprep.subr.mxu0 0.0
    %1937 = vmatpush1.msra.mxu0 0.0
    %1938 = vmatprep.subr.mxu0 0.0
    %1939 = vmatpush1.msra.mxu0 0.0
    %1940 = vmatprep.subr.mxu0 0.0
    %1941 = vmatpush1.msra.mxu0 0.0
    %1942 = vmatprep.subr.mxu0 0.0
    %1943 = vmatpush1.msra.mxu0 0.0
    %1944 = vmatprep.subr.mxu0 0.0
    %1945 = vmatpush1.msra.mxu0 0.0
    %1946 = vmatprep.mubr.f32.mxu0 0.0
    %1947 = vmatmul.mubr.f32.gmra.mrb[0].mxu0 %v1880
    %v1948 = vpop.f32.mrb[0].mxu0
    %v1949 = vadd.f32 0.0, %v1948
    %v1950 = vpop.f32.mrb[0].mxu0
    %1951 = vdwg.mxu0
    %1953 = vrot.lane.b32.xlu0 %v1877, 32
    %v1954 = vpop.permute.xlu0 %1953
    %1957 = vrot.lane.b32.xlu0 %v1949, 64
    %v1958 = vpop.permute.xlu0 %1957
    %v1960 = vsel %vm301, %v1805, %v1954
    %v1961 = vsel %vm1153, %v1960, %v1958
    %v1963 = vsel %vm1155, %v1961, 0
    %1965 = vmatprep.subr.mxu0 0.0
    %1966 = vmatpush1.msra.mxu0 %v1720
    %1967 = vmatprep.subr.mxu0 0.0
    %1968 = vmatpush1.msra.mxu0 %v1721
    %1969 = vmatprep.subr.mxu0 0.0
    %1970 = vmatpush1.msra.mxu0 %v1722
    %1971 = vmatprep.subr.mxu0 0.0
    %1972 = vmatpush1.msra.mxu0 %v1723
    %1973 = vmatprep.subr.mxu0 0.0
    %1974 = vmatpush1.msra.mxu0 %v1724
    %1975 = vmatprep.subr.mxu0 0.0
    %1976 = vmatpush1.msra.mxu0 %v1725
    %1977 = vmatprep.subr.mxu0 0.0
    %1978 = vmatpush1.msra.mxu0 %v1726
    %1979 = vmatprep.subr.mxu0 0.0
    %1980 = vmatpush1.msra.mxu0 %v1727
    %1981 = vmatprep.subr.mxu0 0.0
    %1982 = vmatpush1.msra.mxu0 %v1728
    %1983 = vmatprep.subr.mxu0 0.0
    %1984 = vmatpush1.msra.mxu0 %v1729
    %1985 = vmatprep.subr.mxu0 0.0
    %1986 = vmatpush1.msra.mxu0 %v1730
    %1987 = vmatprep.subr.mxu0 0.0
    %1988 = vmatpush1.msra.mxu0 %v1731
    %1989 = vmatprep.subr.mxu0 0.0
    %1990 = vmatpush1.msra.mxu0 0.0
    %1991 = vmatprep.subr.mxu0 0.0
    %1992 = vmatpush1.msra.mxu0 0.0
    %1993 = vmatprep.subr.mxu0 0.0
    %1994 = vmatpush1.msra.mxu0 0.0
    %1995 = vmatprep.subr.mxu0 0.0
    %1996 = vmatpush1.msra.mxu0 0.0
    %1997 = vmatprep.subr.mxu0 0.0
    %1998 = vmatpush1.msra.mxu0 0.0
    %1999 = vmatprep.subr.mxu0 0.0
    %2000 = vmatpush1.msra.mxu0 0.0
    %2001 = vmatprep.subr.mxu0 0.0
    %2002 = vmatpush1.msra.mxu0 0.0
    %2003 = vmatprep.subr.mxu0 0.0
    %2004 = vmatpush1.msra.mxu0 0.0
    %2005 = vmatprep.subr.mxu0 0.0
    %2006 = vmatpush1.msra.mxu0 0.0
    %2007 = vmatprep.subr.mxu0 0.0
    %2008 = vmatpush1.msra.mxu0 0.0
    %2009 = vmatprep.subr.mxu0 0.0
    %2010 = vmatpush1.msra.mxu0 0.0
    %2011 = vmatprep.subr.mxu0 0.0
    %2012 = vmatpush1.msra.mxu0 0.0
    %2013 = vmatprep.subr.mxu0 0.0
    %2014 = vmatpush1.msra.mxu0 0.0
    %2015 = vmatprep.subr.mxu0 0.0
    %2016 = vmatpush1.msra.mxu0 0.0
    %2017 = vmatprep.subr.mxu0 0.0
    %2018 = vmatpush1.msra.mxu0 0.0
    %2019 = vmatprep.subr.mxu0 0.0
    %2020 = vmatpush1.msra.mxu0 0.0
    %2021 = vmatprep.subr.mxu0 0.0
    %2022 = vmatpush1.msra.mxu0 0.0
    %2023 = vmatprep.subr.mxu0 0.0
    %2024 = vmatpush1.msra.mxu0 0.0
    %2025 = vmatprep.subr.mxu0 0.0
    %2026 = vmatpush1.msra.mxu0 0.0
    %2027 = vmatprep.subr.mxu0 0.0
    %2028 = vmatpush1.msra.mxu0 0.0
    %2029 = vmatprep.mubr.f32.mxu0 0.0
    %2030 = vmatmul.mubr.f32.gmra.mrb[0].mxu0 %v1963
    %v2031 = vpop.f32.mrb[0].mxu0
    %v2032 = vadd.f32 0.0, %v2031
    %v2033 = vpop.f32.mrb[0].mxu0
    %2034 = vdwg.mxu0
    %v2035 = vrot.slane %v1719, 4
    %v2036 = vsel %vm676, %v2035, 0
    %2038 = vmatprep.subr.mxu0 0.0
    %2039 = vmatpush1.msra.mxu0 %v2036
    %2040 = vmatprep.subr.mxu0 0.0
    %2041 = vmatpush1.msra.mxu0 0.0
    %2042 = vmatprep.subr.mxu0 0.0
    %2043 = vmatpush1.msra.mxu0 0.0
    %2044 = vmatprep.subr.mxu0 0.0
    %2045 = vmatpush1.msra.mxu0 0.0
    %2046 = vmatprep.subr.mxu0 0.0
    %2047 = vmatpush1.msra.mxu0 0.0
    %2048 = vmatprep.subr.mxu0 0.0
    %2049 = vmatpush1.msra.mxu0 0.0
    %2050 = vmatprep.subr.mxu0 0.0
    %2051 = vmatpush1.msra.mxu0 0.0
    %2052 = vmatprep.subr.mxu0 0.0
    %2053 = vmatpush1.msra.mxu0 0.0
    %2054 = vmatprep.subr.mxu0 0.0
    %2055 = vmatpush1.msra.mxu0 0.0
    %2056 = vmatprep.subr.mxu0 0.0
    %2057 = vmatpush1.msra.mxu0 0.0
    %2058 = vmatprep.subr.mxu0 0.0
    %2059 = vmatpush1.msra.mxu0 0.0
    %2060 = vmatprep.subr.mxu0 0.0
    %2061 = vmatpush1.msra.mxu0 0.0
    %2062 = vmatprep.subr.mxu0 0.0
    %2063 = vmatpush1.msra.mxu0 0.0
    %2064 = vmatprep.subr.mxu0 0.0
    %2065 = vmatpush1.msra.mxu0 0.0
    %2066 = vmatprep.subr.mxu0 0.0
    %2067 = vmatpush1.msra.mxu0 0.0
    %2068 = vmatprep.subr.mxu0 0.0
    %2069 = vmatpush1.msra.mxu0 0.0
    %2070 = vmatprep.subr.mxu0 0.0
    %2071 = vmatpush1.msra.mxu0 0.0
    %2072 = vmatprep.subr.mxu0 0.0
    %2073 = vmatpush1.msra.mxu0 0.0
    %2074 = vmatprep.subr.mxu0 0.0
    %2075 = vmatpush1.msra.mxu0 0.0
    %2076 = vmatprep.subr.mxu0 0.0
    %2077 = vmatpush1.msra.mxu0 0.0
    %2078 = vmatprep.subr.mxu0 0.0
    %2079 = vmatpush1.msra.mxu0 0.0
    %2080 = vmatprep.subr.mxu0 0.0
    %2081 = vmatpush1.msra.mxu0 0.0
    %2082 = vmatprep.subr.mxu0 0.0
    %2083 = vmatpush1.msra.mxu0 0.0
    %2084 = vmatprep.subr.mxu0 0.0
    %2085 = vmatpush1.msra.mxu0 0.0
    %2086 = vmatprep.subr.mxu0 0.0
    %2087 = vmatpush1.msra.mxu0 0.0
    %2088 = vmatprep.subr.mxu0 0.0
    %2089 = vmatpush1.msra.mxu0 0.0
    %2090 = vmatprep.subr.mxu0 0.0
    %2091 = vmatpush1.msra.mxu0 0.0
    %2092 = vmatprep.subr.mxu0 0.0
    %2093 = vmatpush1.msra.mxu0 0.0
    %2094 = vmatprep.subr.mxu0 0.0
    %2095 = vmatpush1.msra.mxu0 0.0
    %2096 = vmatprep.subr.mxu0 0.0
    %2097 = vmatpush1.msra.mxu0 0.0
    %2098 = vmatprep.subr.mxu0 0.0
    %2099 = vmatpush1.msra.mxu0 0.0
    %2100 = vmatprep.subr.mxu0 0.0
    %2101 = vmatpush1.msra.mxu0 0.0
    %2102 = vmatprep.mubr.f32.mxu0 0.0
    %2103 = vmatmul.mubr.f32.gmra.mrb[0].mxu0 %v1733
    %v2104 = vpop.f32.mrb[0].mxu0
    %v2105 = vadd.f32 0.0, %v2104
    %v2106 = vpop.f32.mrb[0].mxu0
    %2107 = vdwg.mxu0
    %2108 = vmatprep.subr.mxu0 0.0
    %2109 = vmatpush1.msra.mxu0 %v2036
    %2110 = vmatprep.subr.mxu0 0.0
    %2111 = vmatpush1.msra.mxu0 0.0
    %2112 = vmatprep.subr.mxu0 0.0
    %2113 = vmatpush1.msra.mxu0 0.0
    %2114 = vmatprep.subr.mxu0 0.0
    %2115 = vmatpush1.msra.mxu0 0.0
    %2116 = vmatprep.subr.mxu0 0.0
    %2117 = vmatpush1.msra.mxu0 0.0
    %2118 = vmatprep.subr.mxu0 0.0
    %2119 = vmatpush1.msra.mxu0 0.0
    %2120 = vmatprep.subr.mxu0 0.0
    %2121 = vmatpush1.msra.mxu0 0.0
    %2122 = vmatprep.subr.mxu0 0.0
    %2123 = vmatpush1.msra.mxu0 0.0
    %2124 = vmatprep.subr.mxu0 0.0
    %2125 = vmatpush1.msra.mxu0 0.0
    %2126 = vmatprep.subr.mxu0 0.0
    %2127 = vmatpush1.msra.mxu0 0.0
    %2128 = vmatprep.subr.mxu0 0.0
    %2129 = vmatpush1.msra.mxu0 0.0
    %2130 = vmatprep.subr.mxu0 0.0
    %2131 = vmatpush1.msra.mxu0 0.0
    %2132 = vmatprep.subr.mxu0 0.0
    %2133 = vmatpush1.msra.mxu0 0.0
    %2134 = vmatprep.subr.mxu0 0.0
    %2135 = vmatpush1.msra.mxu0 0.0
    %2136 = vmatprep.subr.mxu0 0.0
    %2137 = vmatpush1.msra.mxu0 0.0
    %2138 = vmatprep.subr.mxu0 0.0
    %2139 = vmatpush1.msra.mxu0 0.0
    %2140 = vmatprep.subr.mxu0 0.0
    %2141 = vmatpush1.msra.mxu0 0.0
    %2142 = vmatprep.subr.mxu0 0.0
    %2143 = vmatpush1.msra.mxu0 0.0
    %2144 = vmatprep.subr.mxu0 0.0
    %2145 = vmatpush1.msra.mxu0 0.0
    %2146 = vmatprep.subr.mxu0 0.0
    %2147 = vmatpush1.msra.mxu0 0.0
    %2148 = vmatprep.subr.mxu0 0.0
    %2149 = vmatpush1.msra.mxu0 0.0
    %2150 = vmatprep.subr.mxu0 0.0
    %2151 = vmatpush1.msra.mxu0 0.0
    %2152 = vmatprep.subr.mxu0 0.0
    %2153 = vmatpush1.msra.mxu0 0.0
    %2154 = vmatprep.subr.mxu0 0.0
    %2155 = vmatpush1.msra.mxu0 0.0
    %2156 = vmatprep.subr.mxu0 0.0
    %2157 = vmatpush1.msra.mxu0 0.0
    %2158 = vmatprep.subr.mxu0 0.0
    %2159 = vmatpush1.msra.mxu0 0.0
    %2160 = vmatprep.subr.mxu0 0.0
    %2161 = vmatpush1.msra.mxu0 0.0
    %2162 = vmatprep.subr.mxu0 0.0
    %2163 = vmatpush1.msra.mxu0 0.0
    %2164 = vmatprep.subr.mxu0 0.0
    %2165 = vmatpush1.msra.mxu0 0.0
    %2166 = vmatprep.subr.mxu0 0.0
    %2167 = vmatpush1.msra.mxu0 0.0
    %2168 = vmatprep.subr.mxu0 0.0
    %2169 = vmatpush1.msra.mxu0 0.0
    %2170 = vmatprep.subr.mxu0 0.0
    %2171 = vmatpush1.msra.mxu0 0.0
    %2172 = vmatprep.mubr.f32.mxu0 0.0
    %2173 = vmatmul.mubr.f32.gmra.mrb[0].mxu0 %v1808
    %v2174 = vpop.f32.mrb[0].mxu0
    %v2175 = vadd.f32 0.0, %v2174
    %v2176 = vpop.f32.mrb[0].mxu0
    %2177 = vdwg.mxu0
    %2178 = vmatprep.subr.mxu0 0.0
    %2179 = vmatpush1.msra.mxu0 %v2036
    %2180 = vmatprep.subr.mxu0 0.0
    %2181 = vmatpush1.msra.mxu0 0.0
    %2182 = vmatprep.subr.mxu0 0.0
    %2183 = vmatpush1.msra.mxu0 0.0
    %2184 = vmatprep.subr.mxu0 0.0
    %2185 = vmatpush1.msra.mxu0 0.0
    %2186 = vmatprep.subr.mxu0 0.0
    %2187 = vmatpush1.msra.mxu0 0.0
    %2188 = vmatprep.subr.mxu0 0.0
    %2189 = vmatpush1.msra.mxu0 0.0
    %2190 = vmatprep.subr.mxu0 0.0
    %2191 = vmatpush1.msra.mxu0 0.0
    %2192 = vmatprep.subr.mxu0 0.0
    %2193 = vmatpush1.msra.mxu0 0.0
    %2194 = vmatprep.subr.mxu0 0.0
    %2195 = vmatpush1.msra.mxu0 0.0
    %2196 = vmatprep.subr.mxu0 0.0
    %2197 = vmatpush1.msra.mxu0 0.0
    %2198 = vmatprep.subr.mxu0 0.0
    %2199 = vmatpush1.msra.mxu0 0.0
    %2200 = vmatprep.subr.mxu0 0.0
    %2201 = vmatpush1.msra.mxu0 0.0
    %2202 = vmatprep.subr.mxu0 0.0
    %2203 = vmatpush1.msra.mxu0 0.0
    %2204 = vmatprep.subr.mxu0 0.0
    %2205 = vmatpush1.msra.mxu0 0.0
    %2206 = vmatprep.subr.mxu0 0.0
    %2207 = vmatpush1.msra.mxu0 0.0
    %2208 = vmatprep.subr.mxu0 0.0
    %2209 = vmatpush1.msra.mxu0 0.0
    %2210 = vmatprep.subr.mxu0 0.0
    %2211 = vmatpush1.msra.mxu0 0.0
    %2212 = vmatprep.subr.mxu0 0.0
    %2213 = vmatpush1.msra.mxu0 0.0
    %2214 = vmatprep.subr.mxu0 0.0
    %2215 = vmatpush1.msra.mxu0 0.0
    %2216 = vmatprep.subr.mxu0 0.0
    %2217 = vmatpush1.msra.mxu0 0.0
    %2218 = vmatprep.subr.mxu0 0.0
    %2219 = vmatpush1.msra.mxu0 0.0
    %2220 = vmatprep.subr.mxu0 0.0
    %2221 = vmatpush1.msra.mxu0 0.0
    %2222 = vmatprep.subr.mxu0 0.0
    %2223 = vmatpush1.msra.mxu0 0.0
    %2224 = vmatprep.subr.mxu0 0.0
    %2225 = vmatpush1.msra.mxu0 0.0
    %2226 = vmatprep.subr.mxu0 0.0
    %2227 = vmatpush1.msra.mxu0 0.0
    %2228 = vmatprep.subr.mxu0 0.0
    %2229 = vmatpush1.msra.mxu0 0.0
    %2230 = vmatprep.subr.mxu0 0.0
    %2231 = vmatpush1.msra.mxu0 0.0
    %2232 = vmatprep.subr.mxu0 0.0
    %2233 = vmatpush1.msra.mxu0 0.0
    %2234 = vmatprep.subr.mxu0 0.0
    %2235 = vmatpush1.msra.mxu0 0.0
    %2236 = vmatprep.subr.mxu0 0.0
    %2237 = vmatpush1.msra.mxu0 0.0
    %2238 = vmatprep.subr.mxu0 0.0
    %2239 = vmatpush1.msra.mxu0 0.0
    %2240 = vmatprep.subr.mxu0 0.0
    %2241 = vmatpush1.msra.mxu0 0.0
    %2242 = vmatprep.mubr.f32.mxu0 0.0
    %2243 = vmatmul.mubr.f32.gmra.mrb[0].mxu0 %v1880
    %v2244 = vpop.f32.mrb[0].mxu0
    %v2245 = vadd.f32 0.0, %v2244
    %v2246 = vpop.f32.mrb[0].mxu0
    %2247 = vdwg.mxu0
    %2249 = vrot.lane.b32.xlu0 %v2175, 32
    %v2250 = vpop.permute.xlu0 %2249
    %2253 = vrot.lane.b32.xlu0 %v2245, 64
    %v2254 = vpop.permute.xlu0 %2253
    %v2256 = vsel %vm301, %v2105, %v2250
    %v2257 = vsel %vm1153, %v2256, %v2254
    %v2259 = vsel %vm1155, %v2257, 0
    %2261 = vmatprep.subr.mxu0 0.0
    %2262 = vmatpush1.msra.mxu0 %v1720
    %2263 = vmatprep.subr.mxu0 0.0
    %2264 = vmatpush1.msra.mxu0 %v1721
    %2265 = vmatprep.subr.mxu0 0.0
    %2266 = vmatpush1.msra.mxu0 %v1722
    %2267 = vmatprep.subr.mxu0 0.0
    %2268 = vmatpush1.msra.mxu0 %v1723
    %2269 = vmatprep.subr.mxu0 0.0
    %2270 = vmatpush1.msra.mxu0 %v1724
    %2271 = vmatprep.subr.mxu0 0.0
    %2272 = vmatpush1.msra.mxu0 %v1725
    %2273 = vmatprep.subr.mxu0 0.0
    %2274 = vmatpush1.msra.mxu0 %v1726
    %2275 = vmatprep.subr.mxu0 0.0
    %2276 = vmatpush1.msra.mxu0 %v1727
    %2277 = vmatprep.subr.mxu0 0.0
    %2278 = vmatpush1.msra.mxu0 %v1728
    %2279 = vmatprep.subr.mxu0 0.0
    %2280 = vmatpush1.msra.mxu0 %v1729
    %2281 = vmatprep.subr.mxu0 0.0
    %2282 = vmatpush1.msra.mxu0 %v1730
    %2283 = vmatprep.subr.mxu0 0.0
    %2284 = vmatpush1.msra.mxu0 %v1731
    %2285 = vmatprep.subr.mxu0 0.0
    %2286 = vmatpush1.msra.mxu0 0.0
    %2287 = vmatprep.subr.mxu0 0.0
    %2288 = vmatpush1.msra.mxu0 0.0
    %2289 = vmatprep.subr.mxu0 0.0
    %2290 = vmatpush1.msra.mxu0 0.0
    %2291 = vmatprep.subr.mxu0 0.0
    %2292 = vmatpush1.msra.mxu0 0.0
    %2293 = vmatprep.subr.mxu0 0.0
    %2294 = vmatpush1.msra.mxu0 0.0
    %2295 = vmatprep.subr.mxu0 0.0
    %2296 = vmatpush1.msra.mxu0 0.0
    %2297 = vmatprep.subr.mxu0 0.0
    %2298 = vmatpush1.msra.mxu0 0.0
    %2299 = vmatprep.subr.mxu0 0.0
    %2300 = vmatpush1.msra.mxu0 0.0
    %2301 = vmatprep.subr.mxu0 0.0
    %2302 = vmatpush1.msra.mxu0 0.0
    %2303 = vmatprep.subr.mxu0 0.0
    %2304 = vmatpush1.msra.mxu0 0.0
    %2305 = vmatprep.subr.mxu0 0.0
    %2306 = vmatpush1.msra.mxu0 0.0
    %2307 = vmatprep.subr.mxu0 0.0
    %2308 = vmatpush1.msra.mxu0 0.0
    %2309 = vmatprep.subr.mxu0 0.0
    %2310 = vmatpush1.msra.mxu0 0.0
    %2311 = vmatprep.subr.mxu0 0.0
    %2312 = vmatpush1.msra.mxu0 0.0
    %2313 = vmatprep.subr.mxu0 0.0
    %2314 = vmatpush1.msra.mxu0 0.0
    %2315 = vmatprep.subr.mxu0 0.0
    %2316 = vmatpush1.msra.mxu0 0.0
    %2317 = vmatprep.subr.mxu0 0.0
    %2318 = vmatpush1.msra.mxu0 0.0
    %2319 = vmatprep.subr.mxu0 0.0
    %2320 = vmatpush1.msra.mxu0 0.0
    %2321 = vmatprep.subr.mxu0 0.0
    %2322 = vmatpush1.msra.mxu0 0.0
    %2323 = vmatprep.subr.mxu0 0.0
    %2324 = vmatpush1.msra.mxu0 0.0
    %2325 = vmatprep.mubr.f32.mxu0 0.0
    %2326 = vmatmul.mubr.f32.gmra.mrb[0].mxu0 %v2259
    %v2327 = vpop.f32.mrb[0].mxu0
    %v2328 = vadd.f32 0.0, %v2327
    %v2329 = vpop.f32.mrb[0].mxu0
    %2330 = vdwg.mxu0
    %v2332 = vrot.slane %v2328, 6
    %vm2334 = vcmask 1041408
    %v2335 = vsel %vm2334, %v2032, %v2332
    %v2336 = vadd.s32 %v57, 8
    %vm2337 = vcmp.eq.s32.totalorder %v2336, %v59
    %v2338 = vsel %vm2337, 1, 0
    %v2339 = vcvt.s32.f32 %v2338
    %2341 = vrot.lane.b32.xlu0 %v2339, 16
    %v2342 = vpop.permute.xlu0 %2341
    %v2344 = vsel %vm72, %v672, %v688
    %v2345 = vsel %vm72, %v2339, %v2342
    %vm2346 = vcmask 257024
    %v2347 = vsel %vm2346, %v2335, 0.0
    %v2348 = vrot.slane %v2347, 4
    %v2349 = vadd.f32 %v2347, %v2348
    %v2350 = vrot.slane %v2349, 2
    %v2351 = vadd.f32 %v2349, %v2350
    %v2352 = vrot.slane %v2351, 1
    %v2353 = vadd.f32 %v2351, %v2352
    %v2354 = vmul.f32 %v2335, %v2335
    %v2355 = vsel %vm2346, %v2354, 0.0
    %v2356 = vrot.slane %v2355, 4
    %v2357 = vadd.f32 %v2355, %v2356
    %v2358 = vrot.slane %v2357, 2
    %v2359 = vadd.f32 %v2357, %v2358
    %v2360 = vrot.slane %v2359, 1
    %v2361 = vadd.f32 %v2359, %v2360
    %v2362 = vsel %vm732, %v2353, %v2361
    %v2364 = vsel %vm301, %v2362, 0
    %2366 = vmatprep.subr.mxu0 0.0
    %2367 = vmatpush1.msra.mxu0 %v672
    %2368 = vmatprep.subr.mxu0 0.0
    %2369 = vmatpush1.msra.mxu0 %v2339
    %2370 = vmatprep.subr.mxu0 0.0
    %2371 = vmatpush1.msra.mxu0 %v672
    %2372 = vmatprep.subr.mxu0 0.0
    %2373 = vmatpush1.msra.mxu0 %v2339
    %2374 = vmatprep.subr.mxu0 0.0
    %2375 = vmatpush1.msra.mxu0 0.0
    %2376 = vmatprep.subr.mxu0 0.0
    %2377 = vmatpush1.msra.mxu0 0.0
    %2378 = vmatprep.subr.mxu0 0.0
    %2379 = vmatpush1.msra.mxu0 0.0
    %2380 = vmatprep.subr.mxu0 0.0
    %2381 = vmatpush1.msra.mxu0 0.0
    %2382 = vmatprep.subr.mxu0 0.0
    %2383 = vmatpush1.msra.mxu0 0.0
    %2384 = vmatprep.subr.mxu0 0.0
    %2385 = vmatpush1.msra.mxu0 0.0
    %2386 = vmatprep.subr.mxu0 0.0
    %2387 = vmatpush1.msra.mxu0 0.0
    %2388 = vmatprep.subr.mxu0 0.0
    %2389 = vmatpush1.msra.mxu0 0.0
    %2390 = vmatprep.subr.mxu0 0.0
    %2391 = vmatpush1.msra.mxu0 0.0
    %2392 = vmatprep.subr.mxu0 0.0
    %2393 = vmatpush1.msra.mxu0 0.0
    %2394 = vmatprep.subr.mxu0 0.0
    %2395 = vmatpush1.msra.mxu0 0.0
    %2396 = vmatprep.subr.mxu0 0.0
    %2397 = vmatpush1.msra.mxu0 0.0
    %2398 = vmatprep.subr.mxu0 0.0
    %2399 = vmatpush1.msra.mxu0 0.0
    %2400 = vmatprep.subr.mxu0 0.0
    %2401 = vmatpush1.msra.mxu0 0.0
    %2402 = vmatprep.subr.mxu0 0.0
    %2403 = vmatpush1.msra.mxu0 0.0
    %2404 = vmatprep.subr.mxu0 0.0
    %2405 = vmatpush1.msra.mxu0 0.0
    %2406 = vmatprep.subr.mxu0 0.0
    %2407 = vmatpush1.msra.mxu0 0.0
    %2408 = vmatprep.subr.mxu0 0.0
    %2409 = vmatpush1.msra.mxu0 0.0
    %2410 = vmatprep.subr.mxu0 0.0
    %2411 = vmatpush1.msra.mxu0 0.0
    %2412 = vmatprep.subr.mxu0 0.0
    %2413 = vmatpush1.msra.mxu0 0.0
    %2414 = vmatprep.subr.mxu0 0.0
    %2415 = vmatpush1.msra.mxu0 0.0
    %2416 = vmatprep.subr.mxu0 0.0
    %2417 = vmatpush1.msra.mxu0 0.0
    %2418 = vmatprep.subr.mxu0 0.0
    %2419 = vmatpush1.msra.mxu0 0.0
    %2420 = vmatprep.subr.mxu0 0.0
    %2421 = vmatpush1.msra.mxu0 0.0
    %2422 = vmatprep.subr.mxu0 0.0
    %2423 = vmatpush1.msra.mxu0 0.0
    %2424 = vmatprep.subr.mxu0 0.0
    %2425 = vmatpush1.msra.mxu0 0.0
    %2426 = vmatprep.subr.mxu0 0.0
    %2427 = vmatpush1.msra.mxu0 0.0
    %2428 = vmatprep.subr.mxu0 0.0
    %2429 = vmatpush1.msra.mxu0 0.0
    %2430 = vmatprep.mubr.f32.mxu0 0.0
    %2431 = vmatmul.mubr.f32.gmra.mrb[0].mxu0 %v2364
    %v2432 = vpop.f32.mrb[0].mxu0
    %v2433 = vadd.f32 0.0, %v2432
    %v2434 = vpop.f32.mrb[0].mxu0
    %2435 = vdwg.mxu0
    %v2436 = vmul.f32 %v2433, 0.125
    %v2437 = vmul.f32 %v2436, %v2436
    %v2439 = vrot.slane %v2437, 7
    %v2441 = vsub.f32 %v2436, %v2439
    %v2442 = vadd.f32 %v2441, 1e-05
    %v2443 = vrsqrt.pop %v2442
    %v2445 = vrot.slane %v2443, 1
    %v2447 = vmul.f32 %v1732, %v2445
    %v2448 = vmul.f32 %v2436, %v2447
    %v2450 = vrot.slane %v2448, 7
    %v2452 = vsub.f32 %v1732, %v2450
    %v2453 = vsel %vm732, %v2447, %v2452
    %v2455 = vsel %vm72, %v2453, 0
    %2457 = vmatprep.subr.mxu0 0.0
    %2458 = vmatpush1.msra.mxu0 %v2344
    %2459 = vmatprep.subr.mxu0 0.0
    %2460 = vmatpush1.msra.mxu0 %v2345
    %2461 = vmatprep.subr.mxu0 0.0
    %2462 = vmatpush1.msra.mxu0 0.0
    %2463 = vmatprep.subr.mxu0 0.0
    %2464 = vmatpush1.msra.mxu0 0.0
    %2465 = vmatprep.subr.mxu0 0.0
    %2466 = vmatpush1.msra.mxu0 0.0
    %2467 = vmatprep.subr.mxu0 0.0
    %2468 = vmatpush1.msra.mxu0 0.0
    %2469 = vmatprep.subr.mxu0 0.0
    %2470 = vmatpush1.msra.mxu0 0.0
    %2471 = vmatprep.subr.mxu0 0.0
    %2472 = vmatpush1.msra.mxu0 0.0
    %2473 = vmatprep.subr.mxu0 0.0
    %2474 = vmatpush1.msra.mxu0 0.0
    %2475 = vmatprep.subr.mxu0 0.0
    %2476 = vmatpush1.msra.mxu0 0.0
    %2477 = vmatprep.subr.mxu0 0.0
    %2478 = vmatpush1.msra.mxu0 0.0
    %2479 = vmatprep.subr.mxu0 0.0
    %2480 = vmatpush1.msra.mxu0 0.0
    %2481 = vmatprep.subr.mxu0 0.0
    %2482 = vmatpush1.msra.mxu0 0.0
    %2483 = vmatprep.subr.mxu0 0.0
    %2484 = vmatpush1.msra.mxu0 0.0
    %2485 = vmatprep.subr.mxu0 0.0
    %2486 = vmatpush1.msra.mxu0 0.0
    %2487 = vmatprep.subr.mxu0 0.0
    %2488 = vmatpush1.msra.mxu0 0.0
    %2489 = vmatprep.subr.mxu0 0.0
    %2490 = vmatpush1.msra.mxu0 0.0
    %2491 = vmatprep.subr.mxu0 0.0
    %2492 = vmatpush1.msra.mxu0 0.0
    %2493 = vmatprep.subr.mxu0 0.0
    %2494 = vmatpush1.msra.mxu0 0.0
    %2495 = vmatprep.subr.mxu0 0.0
    %2496 = vmatpush1.msra.mxu0 0.0
    %2497 = vmatprep.subr.mxu0 0.0
    %2498 = vmatpush1.msra.mxu0 0.0
    %2499 = vmatprep.subr.mxu0 0.0
    %2500 = vmatpush1.msra.mxu0 0.0
    %2501 = vmatprep.subr.mxu0 0.0
    %2502 = vmatpush1.msra.mxu0 0.0
    %2503 = vmatprep.subr.mxu0 0.0
    %2504 = vmatpush1.msra.mxu0 0.0
    %2505 = vmatprep.subr.mxu0 0.0
    %2506 = vmatpush1.msra.mxu0 0.0
    %2507 = vmatprep.subr.mxu0 0.0
    %2508 = vmatpush1.msra.mxu0 0.0
    %2509 = vmatprep.subr.mxu0 0.0
    %2510 = vmatpush1.msra.mxu0 0.0
    %2511 = vmatprep.subr.mxu0 0.0
    %2512 = vmatpush1.msra.mxu0 0.0
    %2513 = vmatprep.subr.mxu0 0.0
    %2514 = vmatpush1.msra.mxu0 0.0
    %2515 = vmatprep.subr.mxu0 0.0
    %2516 = vmatpush1.msra.mxu0 0.0
    %2517 = vmatprep.subr.mxu0 0.0
    %2518 = vmatpush1.msra.mxu0 0.0
    %2519 = vmatprep.subr.mxu0 0.0
    %2520 = vmatpush1.msra.mxu0 0.0
    %2521 = vmatprep.mubr.f32.mxu0 0.0
    %2522 = vmatmul.mubr.f32.gmra.mrb[0].mxu0 %v2455
    %v2523 = vpop.f32.mrb[0].mxu0
    %v2524 = vadd.f32 0.0, %v2523
    %v2525 = vpop.f32.mrb[0].mxu0
    %2526 = vdwg.mxu0
    %v2527 = vlaneseq
    %v2528 = vshrl.u32 %v2527, 7
    %v2529 = vsub.s32 0, %v2528
    %v2530 = vrot.slane %v2524, %v2529
    %v2531 = vmul.f32 %v2335, %v2530
    %v2532 = vlaneseq
    %v2533 = vshrl.u32 %v2532, 7
    %v2534 = vsub.s32 1, %v2533
    %v2535 = vrot.slane %v2524, %v2534
    %v2536 = vadd.f32 %v2531, %v2535
    %v2537 = vmax.f32 %v2536, 0.0
    %v2538 = vld [vmem:[%s7] sm:$0xff]
    %v2539 = vld [vmem:[%s7 + $0x8] sm:$0xff]
    %v2540 = vld [vmem:[%s7 + $0x10] sm:$0xff]
    %v2541 = vld [vmem:[%s7 + $0x18] sm:$0xff]
    %v2542 = vld [vmem:[%s8] sm:$0xff]
    %v2543 = vld [vmem:[%s8 + $0x8] sm:$0xff]
    %v2544 = vld [vmem:[%s9] sm:$0x3]
    %v2545 = vlaneseq
    %v2546 = vshrl.u32 %v2545, 7
    %v2547 = vsub.s32 0, %v2546
    %v2548 = vrot.slane %v2544, %v2547
    %v2550 = vsel %vm301, %v2537, 0
    %2552 = vmatprep.subr.mxu0 0.0
    %2553 = vmatpush1.msra.mxu0 %v2538
    %2554 = vmatprep.subr.mxu0 0.0
    %2555 = vmatpush1.msra.mxu0 %v2539
    %2556 = vmatprep.subr.mxu0 0.0
    %2557 = vmatpush1.msra.mxu0 %v2540
    %2558 = vmatprep.subr.mxu0 0.0
    %2559 = vmatpush1.msra.mxu0 %v2541
    %2560 = vmatprep.subr.mxu0 0.0
    %2561 = vmatpush1.msra.mxu0 0.0
    %2562 = vmatprep.subr.mxu0 0.0
    %2563 = vmatpush1.msra.mxu0 0.0
    %2564 = vmatprep.subr.mxu0 0.0
    %2565 = vmatpush1.msra.mxu0 0.0
    %2566 = vmatprep.subr.mxu0 0.0
    %2567 = vmatpush1.msra.mxu0 0.0
    %2568 = vmatprep.subr.mxu0 0.0
    %2569 = vmatpush1.msra.mxu0 0.0
    %2570 = vmatprep.subr.mxu0 0.0
    %2571 = vmatpush1.msra.mxu0 0.0
    %2572 = vmatprep.subr.mxu0 0.0
    %2573 = vmatpush1.msra.mxu0 0.0
    %2574 = vmatprep.subr.mxu0 0.0
    %2575 = vmatpush1.msra.mxu0 0.0
    %2576 = vmatprep.subr.mxu0 0.0
    %2577 = vmatpush1.msra.mxu0 0.0
    %2578 = vmatprep.subr.mxu0 0.0
    %2579 = vmatpush1.msra.mxu0 0.0
    %2580 = vmatprep.subr.mxu0 0.0
    %2581 = vmatpush1.msra.mxu0 0.0
    %2582 = vmatprep.subr.mxu0 0.0
    %2583 = vmatpush1.msra.mxu0 0.0
    %2584 = vmatprep.subr.mxu0 0.0
    %2585 = vmatpush1.msra.mxu0 0.0
    %2586 = vmatprep.subr.mxu0 0.0
    %2587 = vmatpush1.msra.mxu0 0.0
    %2588 = vmatprep.subr.mxu0 0.0
    %2589 = vmatpush1.msra.mxu0 0.0
    %2590 = vmatprep.subr.mxu0 0.0
    %2591 = vmatpush1.msra.mxu0 0.0
    %2592 = vmatprep.subr.mxu0 0.0
    %2593 = vmatpush1.msra.mxu0 0.0
    %2594 = vmatprep.subr.mxu0 0.0
    %2595 = vmatpush1.msra.mxu0 0.0
    %2596 = vmatprep.subr.mxu0 0.0
    %2597 = vmatpush1.msra.mxu0 0.0
    %2598 = vmatprep.subr.mxu0 0.0
    %2599 = vmatpush1.msra.mxu0 0.0
    %2600 = vmatprep.subr.mxu0 0.0
    %2601 = vmatpush1.msra.mxu0 0.0
    %2602 = vmatprep.subr.mxu0 0.0
    %2603 = vmatpush1.msra.mxu0 0.0
    %2604 = vmatprep.subr.mxu0 0.0
    %2605 = vmatpush1.msra.mxu0 0.0
    %2606 = vmatprep.subr.mxu0 0.0
    %2607 = vmatpush1.msra.mxu0 0.0
    %2608 = vmatprep.subr.mxu0 0.0
    %2609 = vmatpush1.msra.mxu0 0.0
    %2610 = vmatprep.subr.mxu0 0.0
    %2611 = vmatpush1.msra.mxu0 0.0
    %2612 = vmatprep.subr.mxu0 0.0
    %2613 = vmatpush1.msra.mxu0 0.0
    %2614 = vmatprep.subr.mxu0 0.0
    %2615 = vmatpush1.msra.mxu0 0.0
    %2616 = vmatprep.mubr.f32.mxu0 0.0
    %2617 = vmatmul.mubr.f32.gmra.mrb[0].mxu0 %v2550
    %v2618 = vpop.f32.mrb[0].mxu0
    %v2619 = vadd.f32 %v2548, %v2618
    %v2620 = vpop.f32.mrb[0].mxu0
    %2621 = vdwg.mxu0
    %v2622 = vrot.slane %v2537, 2
    %v2623 = vsel %vm301, %v2622, 0
    %2625 = vmatprep.subr.mxu0 0.0
    %2626 = vmatpush1.msra.mxu0 %v2538
    %2627 = vmatprep.subr.mxu0 0.0
    %2628 = vmatpush1.msra.mxu0 %v2539
    %2629 = vmatprep.subr.mxu0 0.0
    %2630 = vmatpush1.msra.mxu0 %v2540
    %2631 = vmatprep.subr.mxu0 0.0
    %2632 = vmatpush1.msra.mxu0 %v2541
    %2633 = vmatprep.subr.mxu0 0.0
    %2634 = vmatpush1.msra.mxu0 0.0
    %2635 = vmatprep.subr.mxu0 0.0
    %2636 = vmatpush1.msra.mxu0 0.0
    %2637 = vmatprep.subr.mxu0 0.0
    %2638 = vmatpush1.msra.mxu0 0.0
    %2639 = vmatprep.subr.mxu0 0.0
    %2640 = vmatpush1.msra.mxu0 0.0
    %2641 = vmatprep.subr.mxu0 0.0
    %2642 = vmatpush1.msra.mxu0 0.0
    %2643 = vmatprep.subr.mxu0 0.0
    %2644 = vmatpush1.msra.mxu0 0.0
    %2645 = vmatprep.subr.mxu0 0.0
    %2646 = vmatpush1.msra.mxu0 0.0
    %2647 = vmatprep.subr.mxu0 0.0
    %2648 = vmatpush1.msra.mxu0 0.0
    %2649 = vmatprep.subr.mxu0 0.0
    %2650 = vmatpush1.msra.mxu0 0.0
    %2651 = vmatprep.subr.mxu0 0.0
    %2652 = vmatpush1.msra.mxu0 0.0
    %2653 = vmatprep.subr.mxu0 0.0
    %2654 = vmatpush1.msra.mxu0 0.0
    %2655 = vmatprep.subr.mxu0 0.0
    %2656 = vmatpush1.msra.mxu0 0.0
    %2657 = vmatprep.subr.mxu0 0.0
    %2658 = vmatpush1.msra.mxu0 0.0
    %2659 = vmatprep.subr.mxu0 0.0
    %2660 = vmatpush1.msra.mxu0 0.0
    %2661 = vmatprep.subr.mxu0 0.0
    %2662 = vmatpush1.msra.mxu0 0.0
    %2663 = vmatprep.subr.mxu0 0.0
    %2664 = vmatpush1.msra.mxu0 0.0
    %2665 = vmatprep.subr.mxu0 0.0
    %2666 = vmatpush1.msra.mxu0 0.0
    %2667 = vmatprep.subr.mxu0 0.0
    %2668 = vmatpush1.msra.mxu0 0.0
    %2669 = vmatprep.subr.mxu0 0.0
    %2670 = vmatpush1.msra.mxu0 0.0
    %2671 = vmatprep.subr.mxu0 0.0
    %2672 = vmatpush1.msra.mxu0 0.0
    %2673 = vmatprep.subr.mxu0 0.0
    %2674 = vmatpush1.msra.mxu0 0.0
    %2675 = vmatprep.subr.mxu0 0.0
    %2676 = vmatpush1.msra.mxu0 0.0
    %2677 = vmatprep.subr.mxu0 0.0
    %2678 = vmatpush1.msra.mxu0 0.0
    %2679 = vmatprep.subr.mxu0 0.0
    %2680 = vmatpush1.msra.mxu0 0.0
    %2681 = vmatprep.subr.mxu0 0.0
    %2682 = vmatpush1.msra.mxu0 0.0
    %2683 = vmatprep.subr.mxu0 0.0
    %2684 = vmatpush1.msra.mxu0 0.0
    %2685 = vmatprep.subr.mxu0 0.0
    %2686 = vmatpush1.msra.mxu0 0.0
    %2687 = vmatprep.subr.mxu0 0.0
    %2688 = vmatpush1.msra.mxu0 0.0
    %2689 = vmatprep.mubr.f32.mxu0 0.0
    %2690 = vmatmul.mubr.f32.gmra.mrb[0].mxu0 %v2623
    %v2691 = vpop.f32.mrb[0].mxu0
    %v2692 = vadd.f32 %v2548, %v2691
    %v2693 = vpop.f32.mrb[0].mxu0
    %2694 = vdwg.mxu0
    %v2696 = vrot.slane %v2692, 7
    %v2698 = vsel %vm732, %v2619, %v2696
    %v2699 = vlaneseq
    %v2700 = vshrl.u32 %v2699, 7
    %v2701 = vsub.s32 1, %v2700
    %v2702 = vrot.slane %v2544, %v2701
    %v2704 = vsel %vm72, 0.0, 0
    %2706 = vmatprep.subr.mxu0 0.0
    %2707 = vmatpush1.msra.mxu0 %v2542
    %2708 = vmatprep.subr.mxu0 0.0
    %2709 = vmatpush1.msra.mxu0 %v2543
    %2710 = vmatprep.subr.mxu0 0.0
    %2711 = vmatpush1.msra.mxu0 0.0
    %2712 = vmatprep.subr.mxu0 0.0
    %2713 = vmatpush1.msra.mxu0 0.0
    %2714 = vmatprep.subr.mxu0 0.0
    %2715 = vmatpush1.msra.mxu0 0.0
    %2716 = vmatprep.subr.mxu0 0.0
    %2717 = vmatpush1.msra.mxu0 0.0
    %2718 = vmatprep.subr.mxu0 0.0
    %2719 = vmatpush1.msra.mxu0 0.0
    %2720 = vmatprep.subr.mxu0 0.0
    %2721 = vmatpush1.msra.mxu0 0.0
    %2722 = vmatprep.subr.mxu0 0.0
    %2723 = vmatpush1.msra.mxu0 0.0
    %2724 = vmatprep.subr.mxu0 0.0
    %2725 = vmatpush1.msra.mxu0 0.0
    %2726 = vmatprep.subr.mxu0 0.0
    %2727 = vmatpush1.msra.mxu0 0.0
    %2728 = vmatprep.subr.mxu0 0.0
    %2729 = vmatpush1.msra.mxu0 0.0
    %2730 = vmatprep.subr.mxu0 0.0
    %2731 = vmatpush1.msra.mxu0 0.0
    %2732 = vmatprep.subr.mxu0 0.0
    %2733 = vmatpush1.msra.mxu0 0.0
    %2734 = vmatprep.subr.mxu0 0.0
    %2735 = vmatpush1.msra.mxu0 0.0
    %2736 = vmatprep.subr.mxu0 0.0
    %2737 = vmatpush1.msra.mxu0 0.0
    %2738 = vmatprep.subr.mxu0 0.0
    %2739 = vmatpush1.msra.mxu0 0.0
    %2740 = vmatprep.subr.mxu0 0.0
    %2741 = vmatpush1.msra.mxu0 0.0
    %2742 = vmatprep.subr.mxu0 0.0
    %2743 = vmatpush1.msra.mxu0 0.0
    %2744 = vmatprep.subr.mxu0 0.0
    %2745 = vmatpush1.msra.mxu0 0.0
    %2746 = vmatprep.subr.mxu0 0.0
    %2747 = vmatpush1.msra.mxu0 0.0
    %2748 = vmatprep.subr.mxu0 0.0
    %2749 = vmatpush1.msra.mxu0 0.0
    %2750 = vmatprep.subr.mxu0 0.0
    %2751 = vmatpush1.msra.mxu0 0.0
    %2752 = vmatprep.subr.mxu0 0.0
    %2753 = vmatpush1.msra.mxu0 0.0
    %2754 = vmatprep.subr.mxu0 0.0
    %2755 = vmatpush1.msra.mxu0 0.0
    %2756 = vmatprep.subr.mxu0 0.0
    %2757 = vmatpush1.msra.mxu0 0.0
    %2758 = vmatprep.subr.mxu0 0.0
    %2759 = vmatpush1.msra.mxu0 0.0
    %2760 = vmatprep.subr.mxu0 0.0
    %2761 = vmatpush1.msra.mxu0 0.0
    %2762 = vmatprep.subr.mxu0 0.0
    %2763 = vmatpush1.msra.mxu0 0.0
    %2764 = vmatprep.subr.mxu0 0.0
    %2765 = vmatpush1.msra.mxu0 0.0
    %2766 = vmatprep.subr.mxu0 0.0
    %2767 = vmatpush1.msra.mxu0 0.0
    %2768 = vmatprep.subr.mxu0 0.0
    %2769 = vmatpush1.msra.mxu0 0.0
    %2770 = vmatprep.mubr.f32.mxu0 0.0
    %2771 = vmatmul.mubr.f32.gmra.mrb[0].mxu0 %v2704
    %v2772 = vpop.f32.mrb[0].mxu0
    %v2773 = vadd.f32 %v2702, %v2772
    %v2774 = vpop.f32.mrb[0].mxu0
    %2775 = vdwg.mxu0
    %v2776 = vadd.f32 %v2698, %v2773
    %v2777 = vxor.u32 %v2776, 2147483648
    %v2778 = vmul.f32 %v2777, 1.442695
    %v2779 = vpow.pop %v2778
    %v2780 = vadd.f32 %v2779, 1.0
    %v2781 = vrcp.pop %v2780
    %v2782 = vmul.f32 1.0, %v2781
    %2784 = vrot.lane.b32.xlu0 %v2773, 96
    %v2785 = vpop.permute.xlu0 %2784
    %v2787 = vmul.f32 %v2782, %v2785
    %2789 = vrot.lane.b32.xlu0 %v2787, 32
    %v2790 = vpop.permute.xlu0 %2789
    %v2792 = vadd.f32 %v2698, %v2790
    %v2793 = vtanh.pop %v2792
    %v2794 = vsub.f32 1.0, %v2782
    %2796 = vrot.lane.b32.xlu0 %v2793, 112
    %v2797 = vpop.permute.xlu0 %2796
    %v2799 = vmul.f32 %v2794, %v2797
    %v2800 = vmul.f32 %v2782, 0.0
    %v2801 = vadd.f32 %v2799, %v2800
    %v2803 = vrot.slane %v2619, 1
    %v2805 = vsel %vm732, %v2803, %v2692
    %2807 = vrot.lane.b32.xlu0 %v2801, 112
    %v2808 = vpop.permute.xlu0 %2807
    %v2809 = vsel %vm72, %v2808, 0
    %2811 = vmatprep.subr.mxu0 0.0
    %2812 = vmatpush1.msra.mxu0 %v2542
    %2813 = vmatprep.subr.mxu0 0.0
    %2814 = vmatpush1.msra.mxu0 %v2543
    %2815 = vmatprep.subr.mxu0 0.0
    %2816 = vmatpush1.msra.mxu0 0.0
    %2817 = vmatprep.subr.mxu0 0.0
    %2818 = vmatpush1.msra.mxu0 0.0
    %2819 = vmatprep.subr.mxu0 0.0
    %2820 = vmatpush1.msra.mxu0 0.0
    %2821 = vmatprep.subr.mxu0 0.0
    %2822 = vmatpush1.msra.mxu0 0.0
    %2823 = vmatprep.subr.mxu0 0.0
    %2824 = vmatpush1.msra.mxu0 0.0
    %2825 = vmatprep.subr.mxu0 0.0
    %2826 = vmatpush1.msra.mxu0 0.0
    %2827 = vmatprep.subr.mxu0 0.0
    %2828 = vmatpush1.msra.mxu0 0.0
    %2829 = vmatprep.subr.mxu0 0.0
    %2830 = vmatpush1.msra.mxu0 0.0
    %2831 = vmatprep.subr.mxu0 0.0
    %2832 = vmatpush1.msra.mxu0 0.0
    %2833 = vmatprep.subr.mxu0 0.0
    %2834 = vmatpush1.msra.mxu0 0.0
    %2835 = vmatprep.subr.mxu0 0.0
    %2836 = vmatpush1.msra.mxu0 0.0
    %2837 = vmatprep.subr.mxu0 0.0
    %2838 = vmatpush1.msra.mxu0 0.0
    %2839 = vmatprep.subr.mxu0 0.0
    %2840 = vmatpush1.msra.mxu0 0.0
    %2841 = vmatprep.subr.mxu0 0.0
    %2842 = vmatpush1.msra.mxu0 0.0
    %2843 = vmatprep.subr.mxu0 0.0
    %2844 = vmatpush1.msra.mxu0 0.0
    %2845 = vmatprep.subr.mxu0 0.0
    %2846 = vmatpush1.msra.mxu0 0.0
    %2847 = vmatprep.subr.mxu0 0.0
    %2848 = vmatpush1.msra.mxu0 0.0
    %2849 = vmatprep.subr.mxu0 0.0
    %2850 = vmatpush1.msra.mxu0 0.0
    %2851 = vmatprep.subr.mxu0 0.0
    %2852 = vmatpush1.msra.mxu0 0.0
    %2853 = vmatprep.subr.mxu0 0.0
    %2854 = vmatpush1.msra.mxu0 0.0
    %2855 = vmatprep.subr.mxu0 0.0
    %2856 = vmatpush1.msra.mxu0 0.0
    %2857 = vmatprep.subr.mxu0 0.0
    %2858 = vmatpush1.msra.mxu0 0.0
    %2859 = vmatprep.subr.mxu0 0.0
    %2860 = vmatpush1.msra.mxu0 0.0
    %2861 = vmatprep.subr.mxu0 0.0
    %2862 = vmatpush1.msra.mxu0 0.0
    %2863 = vmatprep.subr.mxu0 0.0
    %2864 = vmatpush1.msra.mxu0 0.0
    %2865 = vmatprep.subr.mxu0 0.0
    %2866 = vmatpush1.msra.mxu0 0.0
    %2867 = vmatprep.subr.mxu0 0.0
    %2868 = vmatpush1.msra.mxu0 0.0
    %2869 = vmatprep.subr.mxu0 0.0
    %2870 = vmatpush1.msra.mxu0 0.0
    %2871 = vmatprep.subr.mxu0 0.0
    %2872 = vmatpush1.msra.mxu0 0.0
    %2873 = vmatprep.subr.mxu0 0.0
    %2874 = vmatpush1.msra.mxu0 0.0
    %2875 = vmatprep.mubr.f32.mxu0 0.0
    %2876 = vmatmul.mubr.f32.gmra.mrb[0].mxu0 %v2809
    %v2877 = vpop.f32.mrb[0].mxu0
    %v2878 = vadd.f32 %v2702, %v2877
    %v2879 = vpop.f32.mrb[0].mxu0
    %2880 = vdwg.mxu0
    %v2881 = vadd.f32 %v2805, %v2878
    %v2882 = vxor.u32 %v2881, 2147483648
    %v2883 = vmul.f32 %v2882, 1.442695
    %v2884 = vpow.pop %v2883
    %v2885 = vadd.f32 %v2884, 1.0
    %v2886 = vrcp.pop %v2885
    %v2887 = vmul.f32 1.0, %v2886
    %2889 = vrot.lane.b32.xlu0 %v2878, 96
    %v2890 = vpop.permute.xlu0 %2889
    %v2892 = vmul.f32 %v2887, %v2890
    %2894 = vrot.lane.b32.xlu0 %v2892, 32
    %v2895 = vpop.permute.xlu0 %2894
    %v2897 = vadd.f32 %v2805, %v2895
    %v2898 = vtanh.pop %v2897
    %v2899 = vsub.f32 1.0, %v2887
    %2901 = vrot.lane.b32.xlu0 %v2898, 112
    %v2902 = vpop.permute.xlu0 %2901
    %v2904 = vmul.f32 %v2899, %v2902
    %v2905 = vmul.f32 %v2887, %v2801
    %v2906 = vadd.f32 %v2904, %v2905
    %v2907 = vld [vmem:[%s10] sm:$0xff]
    %v2908 = vld [vmem:[%s10 + $0x8] sm:$0x3]
    %v2909 = vtanh.pop %v2907
    %v2910 = vtanh.pop %v2908
    %v2911 = vld [vmem:[%s11] sm:$0xff]
    %v2912 = vld [vmem:[%s11 + $0x8] sm:$0xff]
    %2914 = vrot.lane.b32.xlu0 %v2906, 112
    %v2915 = vpop.permute.xlu0 %2914
    %v2916 = vsel %vm72, %v2915, 0
    %2918 = vmatprep.subr.mxu0 0.0
    %2919 = vmatpush1.msra.mxu0 %v2911
    %2920 = vmatprep.subr.mxu0 0.0
    %2921 = vmatpush1.msra.mxu0 %v2912
    %2922 = vmatprep.subr.mxu0 0.0
    %2923 = vmatpush1.msra.mxu0 0.0
    %2924 = vmatprep.subr.mxu0 0.0
    %2925 = vmatpush1.msra.mxu0 0.0
    %2926 = vmatprep.subr.mxu0 0.0
    %2927 = vmatpush1.msra.mxu0 0.0
    %2928 = vmatprep.subr.mxu0 0.0
    %2929 = vmatpush1.msra.mxu0 0.0
    %2930 = vmatprep.subr.mxu0 0.0
    %2931 = vmatpush1.msra.mxu0 0.0
    %2932 = vmatprep.subr.mxu0 0.0
    %2933 = vmatpush1.msra.mxu0 0.0
    %2934 = vmatprep.subr.mxu0 0.0
    %2935 = vmatpush1.msra.mxu0 0.0
    %2936 = vmatprep.subr.mxu0 0.0
    %2937 = vmatpush1.msra.mxu0 0.0
    %2938 = vmatprep.subr.mxu0 0.0
    %2939 = vmatpush1.msra.mxu0 0.0
    %2940 = vmatprep.subr.mxu0 0.0
    %2941 = vmatpush1.msra.mxu0 0.0
    %2942 = vmatprep.subr.mxu0 0.0
    %2943 = vmatpush1.msra.mxu0 0.0
    %2944 = vmatprep.subr.mxu0 0.0
    %2945 = vmatpush1.msra.mxu0 0.0
    %2946 = vmatprep.subr.mxu0 0.0
    %2947 = vmatpush1.msra.mxu0 0.0
    %2948 = vmatprep.subr.mxu0 0.0
    %2949 = vmatpush1.msra.mxu0 0.0
    %2950 = vmatprep.subr.mxu0 0.0
    %2951 = vmatpush1.msra.mxu0 0.0
    %2952 = vmatprep.subr.mxu0 0.0
    %2953 = vmatpush1.msra.mxu0 0.0
    %2954 = vmatprep.subr.mxu0 0.0
    %2955 = vmatpush1.msra.mxu0 0.0
    %2956 = vmatprep.subr.mxu0 0.0
    %2957 = vmatpush1.msra.mxu0 0.0
    %2958 = vmatprep.subr.mxu0 0.0
    %2959 = vmatpush1.msra.mxu0 0.0
    %2960 = vmatprep.subr.mxu0 0.0
    %2961 = vmatpush1.msra.mxu0 0.0
    %2962 = vmatprep.subr.mxu0 0.0
    %2963 = vmatpush1.msra.mxu0 0.0
    %2964 = vmatprep.subr.mxu0 0.0
    %2965 = vmatpush1.msra.mxu0 0.0
    %2966 = vmatprep.subr.mxu0 0.0
    %2967 = vmatpush1.msra.mxu0 0.0
    %2968 = vmatprep.subr.mxu0 0.0
    %2969 = vmatpush1.msra.mxu0 0.0
    %2970 = vmatprep.subr.mxu0 0.0
    %2971 = vmatpush1.msra.mxu0 0.0
    %2972 = vmatprep.subr.mxu0 0.0
    %2973 = vmatpush1.msra.mxu0 0.0
    %2974 = vmatprep.subr.mxu0 0.0
    %2975 = vmatpush1.msra.mxu0 0.0
    %2976 = vmatprep.subr.mxu0 0.0
    %2977 = vmatpush1.msra.mxu0 0.0
    %2978 = vmatprep.subr.mxu0 0.0
    %2979 = vmatpush1.msra.mxu0 0.0
    %2980 = vmatprep.subr.mxu0 0.0
    %2981 = vmatpush1.msra.mxu0 0.0
    %2982 = vmatprep.mubr.f32.mxu0 0.0
    %2983 = vmatmul.mubr.f32.gmra.mrb[0].mxu0 %v2916
    %v2984 = vpop.f32.mrb[0].mxu0
    %v2985 = vadd.f32 0.0, %v2984
    %v2986 = vpop.f32.mrb[0].mxu0
    %2987 = vdwg.mxu0
    %v2988 = vld [vmem:[%s12] sm:$0xff]
    %v2990 = vsel %vm701, %v2909, 0
    %v2993 = vsel %vm701, %v2910, 0
    %2995 = vmatprep.subr.mxu0 0.0
    %2996 = vmatpush1.msra.mxu0 %v2988
    %2997 = vmatprep.subr.mxu0 0.0
    %2998 = vmatpush1.msra.mxu0 0.0
    %2999 = vmatprep.subr.mxu0 0.0
    %3000 = vmatpush1.msra.mxu0 0.0
    %3001 = vmatprep.subr.mxu0 0.0
    %3002 = vmatpush1.msra.mxu0 0.0
    %3003 = vmatprep.subr.mxu0 0.0
    %3004 = vmatpush1.msra.mxu0 0.0
    %3005 = vmatprep.subr.mxu0 0.0
    %3006 = vmatpush1.msra.mxu0 0.0
    %3007 = vmatprep.subr.mxu0 0.0
    %3008 = vmatpush1.msra.mxu0 0.0
    %3009 = vmatprep.subr.mxu0 0.0
    %3010 = vmatpush1.msra.mxu0 0.0
    %3011 = vmatprep.subr.mxu0 0.0
    %3012 = vmatpush1.msra.mxu0 0.0
    %3013 = vmatprep.subr.mxu0 0.0
    %3014 = vmatpush1.msra.mxu0 0.0
    %3015 = vmatprep.subr.mxu0 0.0
    %3016 = vmatpush1.msra.mxu0 0.0
    %3017 = vmatprep.subr.mxu0 0.0
    %3018 = vmatpush1.msra.mxu0 0.0
    %3019 = vmatprep.subr.mxu0 0.0
    %3020 = vmatpush1.msra.mxu0 0.0
    %3021 = vmatprep.subr.mxu0 0.0
    %3022 = vmatpush1.msra.mxu0 0.0
    %3023 = vmatprep.subr.mxu0 0.0
    %3024 = vmatpush1.msra.mxu0 0.0
    %3025 = vmatprep.subr.mxu0 0.0
    %3026 = vmatpush1.msra.mxu0 0.0
    %3027 = vmatprep.subr.mxu0 0.0
    %3028 = vmatpush1.msra.mxu0 0.0
    %3029 = vmatprep.subr.mxu0 0.0
    %3030 = vmatpush1.msra.mxu0 0.0
    %3031 = vmatprep.subr.mxu0 0.0
    %3032 = vmatpush1.msra.mxu0 0.0
    %3033 = vmatprep.subr.mxu0 0.0
    %3034 = vmatpush1.msra.mxu0 0.0
    %3035 = vmatprep.subr.mxu0 0.0
    %3036 = vmatpush1.msra.mxu0 0.0
    %3037 = vmatprep.subr.mxu0 0.0
    %3038 = vmatpush1.msra.mxu0 0.0
    %3039 = vmatprep.subr.mxu0 0.0
    %3040 = vmatpush1.msra.mxu0 0.0
    %3041 = vmatprep.subr.mxu0 0.0
    %3042 = vmatpush1.msra.mxu0 0.0
    %3043 = vmatprep.subr.mxu0 0.0
    %3044 = vmatpush1.msra.mxu0 0.0
    %3045 = vmatprep.subr.mxu0 0.0
    %3046 = vmatpush1.msra.mxu0 0.0
    %3047 = vmatprep.subr.mxu0 0.0
    %3048 = vmatpush1.msra.mxu0 0.0
    %3049 = vmatprep.subr.mxu0 0.0
    %3050 = vmatpush1.msra.mxu0 0.0
    %3051 = vmatprep.subr.mxu0 0.0
    %3052 = vmatpush1.msra.mxu0 0.0
    %3053 = vmatprep.subr.mxu0 0.0
    %3054 = vmatpush1.msra.mxu0 0.0
    %3055 = vmatprep.subr.mxu0 0.0
    %3056 = vmatpush1.msra.mxu0 0.0
    %3057 = vmatprep.subr.mxu0 0.0
    %3058 = vmatpush1.msra.mxu0 0.0
    %3059 = vmatprep.mubr.f32.mxu0 0.0
    %3060 = vmatmul.mubr.f32.gmra.mrb[0].mxu0 %v2990
    %v3061 = vpop.f32.mrb[0].mxu0
    %v3062 = vadd.f32 0.0, %v3061
    %v3063 = vpop.f32.mrb[0].mxu0
    %3064 = vmatprep.mubr.f32.mxu0 0.0
    %3065 = vmatmul.mubr.f32.gmra.mrb[0].mxu0 %v2993
    %v3066 = vpop.f32.mrb[0].mxu0
    %v3067 = vadd.f32 0.0, %v3066
    %v3068 = vpop.f32.mrb[0].mxu0
    %3069 = vdwg.mxu0
    %v3071 = vsel %vm701, %v2985, 0
    %v3074 = vsel %vm701, %v3062, 0
    %v3077 = vsel %vm701, %v3067, 0
    %3079 = vmatprep.subr.mxu0 0.0
    %3080 = vmatpush1.xpose.msra.mxu0 %v3074
    %3081 = vmatprep.subr.mxu0 0.0
    %3082 = vmatpush1.xpose.msra.mxu0 %v3077
    %3083 = vmatprep.subr.mxu0 0.0
    %3084 = vmatpush1.xpose.msra.mxu0 0.0
    %3085 = vmatprep.subr.mxu0 0.0
    %3086 = vmatpush1.xpose.msra.mxu0 0.0
    %3087 = vmatprep.subr.mxu0 0.0
    %3088 = vmatpush1.xpose.msra.mxu0 0.0
    %3089 = vmatprep.subr.mxu0 0.0
    %3090 = vmatpush1.xpose.msra.mxu0 0.0
    %3091 = vmatprep.subr.mxu0 0.0
    %3092 = vmatpush1.xpose.msra.mxu0 0.0
    %3093 = vmatprep.subr.mxu0 0.0
    %3094 = vmatpush1.xpose.msra.mxu0 0.0
    %3095 = vmatprep.subr.mxu0 0.0
    %3096 = vmatpush1.xpose.msra.mxu0 0.0
    %3097 = vmatprep.subr.mxu0 0.0
    %3098 = vmatpush1.xpose.msra.mxu0 0.0
    %3099 = vmatprep.subr.mxu0 0.0
    %3100 = vmatpush1.xpose.msra.mxu0 0.0
    %3101 = vmatprep.subr.mxu0 0.0
    %3102 = vmatpush1.xpose.msra.mxu0 0.0
    %3103 = vmatprep.subr.mxu0 0.0
    %3104 = vmatpush1.xpose.msra.mxu0 0.0
    %3105 = vmatprep.subr.mxu0 0.0
    %3106 = vmatpush1.xpose.msra.mxu0 0.0
    %3107 = vmatprep.subr.mxu0 0.0
    %3108 = vmatpush1.xpose.msra.mxu0 0.0
    %3109 = vmatprep.subr.mxu0 0.0
    %3110 = vmatpush1.xpose.msra.mxu0 0.0
    %3111 = vmatprep.subr.mxu0 0.0
    %3112 = vmatpush1.xpose.msra.mxu0 0.0
    %3113 = vmatprep.subr.mxu0 0.0
    %3114 = vmatpush1.xpose.msra.mxu0 0.0
    %3115 = vmatprep.subr.mxu0 0.0
    %3116 = vmatpush1.xpose.msra.mxu0 0.0
    %3117 = vmatprep.subr.mxu0 0.0
    %3118 = vmatpush1.xpose.msra.mxu0 0.0
    %3119 = vmatprep.subr.mxu0 0.0
    %3120 = vmatpush1.xpose.msra.mxu0 0.0
    %3121 = vmatprep.subr.mxu0 0.0
    %3122 = vmatpush1.xpose.msra.mxu0 0.0
    %3123 = vmatprep.subr.mxu0 0.0
    %3124 = vmatpush1.xpose.msra.mxu0 0.0
    %3125 = vmatprep.subr.mxu0 0.0
    %3126 = vmatpush1.xpose.msra.mxu0 0.0
    %3127 = vmatprep.subr.mxu0 0.0
    %3128 = vmatpush1.xpose.msra.mxu0 0.0
    %3129 = vmatprep.subr.mxu0 0.0
    %3130 = vmatpush1.xpose.msra.mxu0 0.0
    %3131 = vmatprep.subr.mxu0 0.0
    %3132 = vmatpush1.xpose.msra.mxu0 0.0
    %3133 = vmatprep.subr.mxu0 0.0
    %3134 = vmatpush1.xpose.msra.mxu0 0.0
    %3135 = vmatprep.subr.mxu0 0.0
    %3136 = vmatpush1.xpose.msra.mxu0 0.0
    %3137 = vmatprep.subr.mxu0 0.0
    %3138 = vmatpush1.xpose.msra.mxu0 0.0
    %3139 = vmatprep.subr.mxu0 0.0
    %3140 = vmatpush1.xpose.msra.mxu0 0.0
    %3141 = vmatprep.subr.mxu0 0.0
    %3142 = vmatpush1.xpose.msra.mxu0 0.0
    %3143 = vmatprep.mubr.f32.mxu0 0.0
    %3144 = vmatmul.mubr.f32.gmra.mrb[0].mxu0 %v3071
    %v3145 = vpop.f32.mrb[0].mxu0
    %v3146 = vadd.f32 0.0, %v3145
    %v3147 = vpop.f32.mrb[0].mxu0
    %3148 = vdwg.mxu0
    %3149 = vrot.lane.b32.xlu0 %v2985, 120
    %v3150 = vpop.permute.xlu0 %3149
    %3151 = vrot.lane.b32.xlu0 %v3062, 120
    %v3152 = vpop.permute.xlu0 %3151
    %3153 = vrot.lane.b32.xlu0 %v3067, 120
    %v3154 = vpop.permute.xlu0 %3153
    %v3155 = vsel %vm701, %v3150, 0
    %v3157 = vsel %vm701, %v3152, 0
    %v3159 = vsel %vm701, %v3154, 0
    %3161 = vmatprep.subr.mxu0 0.0
    %3162 = vmatpush1.xpose.msra.mxu0 %v3157
    %3163 = vmatprep.subr.mxu0 0.0
    %3164 = vmatpush1.xpose.msra.mxu0 %v3159
    %3165 = vmatprep.subr.mxu0 0.0
    %3166 = vmatpush1.xpose.msra.mxu0 0.0
    %3167 = vmatprep.subr.mxu0 0.0
    %3168 = vmatpush1.xpose.msra.mxu0 0.0
    %3169 = vmatprep.subr.mxu0 0.0
    %3170 = vmatpush1.xpose.msra.mxu0 0.0
    %3171 = vmatprep.subr.mxu0 0.0
    %3172 = vmatpush1.xpose.msra.mxu0 0.0
    %3173 = vmatprep.subr.mxu0 0.0
    %3174 = vmatpush1.xpose.msra.mxu0 0.0
    %3175 = vmatprep.subr.mxu0 0.0
    %3176 = vmatpush1.xpose.msra.mxu0 0.0
    %3177 = vmatprep.subr.mxu0 0.0
    %3178 = vmatpush1.xpose.msra.mxu0 0.0
    %3179 = vmatprep.subr.mxu0 0.0
    %3180 = vmatpush1.xpose.msra.mxu0 0.0
    %3181 = vmatprep.subr.mxu0 0.0
    %3182 = vmatpush1.xpose.msra.mxu0 0.0
    %3183 = vmatprep.subr.mxu0 0.0
    %3184 = vmatpush1.xpose.msra.mxu0 0.0
    %3185 = vmatprep.subr.mxu0 0.0
    %3186 = vmatpush1.xpose.msra.mxu0 0.0
    %3187 = vmatprep.subr.mxu0 0.0
    %3188 = vmatpush1.xpose.msra.mxu0 0.0
    %3189 = vmatprep.subr.mxu0 0.0
    %3190 = vmatpush1.xpose.msra.mxu0 0.0
    %3191 = vmatprep.subr.mxu0 0.0
    %3192 = vmatpush1.xpose.msra.mxu0 0.0
    %3193 = vmatprep.subr.mxu0 0.0
    %3194 = vmatpush1.xpose.msra.mxu0 0.0
    %3195 = vmatprep.subr.mxu0 0.0
    %3196 = vmatpush1.xpose.msra.mxu0 0.0
    %3197 = vmatprep.subr.mxu0 0.0
    %3198 = vmatpush1.xpose.msra.mxu0 0.0
    %3199 = vmatprep.subr.mxu0 0.0
    %3200 = vmatpush1.xpose.msra.mxu0 0.0
    %3201 = vmatprep.subr.mxu0 0.0
    %3202 = vmatpush1.xpose.msra.mxu0 0.0
    %3203 = vmatprep.subr.mxu0 0.0
    %3204 = vmatpush1.xpose.msra.mxu0 0.0
    %3205 = vmatprep.subr.mxu0 0.0
    %3206 = vmatpush1.xpose.msra.mxu0 0.0
    %3207 = vmatprep.subr.mxu0 0.0
    %3208 = vmatpush1.xpose.msra.mxu0 0.0
    %3209 = vmatprep.subr.mxu0 0.0
    %3210 = vmatpush1.xpose.msra.mxu0 0.0
    %3211 = vmatprep.subr.mxu0 0.0
    %3212 = vmatpush1.xpose.msra.mxu0 0.0
    %3213 = vmatprep.subr.mxu0 0.0
    %3214 = vmatpush1.xpose.msra.mxu0 0.0
    %3215 = vmatprep.subr.mxu0 0.0
    %3216 = vmatpush1.xpose.msra.mxu0 0.0
    %3217 = vmatprep.subr.mxu0 0.0
    %3218 = vmatpush1.xpose.msra.mxu0 0.0
    %3219 = vmatprep.subr.mxu0 0.0
    %3220 = vmatpush1.xpose.msra.mxu0 0.0
    %3221 = vmatprep.subr.mxu0 0.0
    %3222 = vmatpush1.xpose.msra.mxu0 0.0
    %3223 = vmatprep.subr.mxu0 0.0
    %3224 = vmatpush1.xpose.msra.mxu0 0.0
    %3225 = vmatprep.mubr.f32.mxu0 0.0
    %3226 = vmatmul.mubr.f32.gmra.mrb[0].mxu0 %v3155
    %v3227 = vpop.f32.mrb[0].mxu0
    %v3228 = vadd.f32 0.0, %v3227
    %v3229 = vpop.f32.mrb[0].mxu0
    %3230 = vdwg.mxu0
    %3231 = vrot.lane.b32.xlu0 %v2985, 112
    %v3232 = vpop.permute.xlu0 %3231
    %3233 = vrot.lane.b32.xlu0 %v3062, 112
    %v3234 = vpop.permute.xlu0 %3233
    %3235 = vrot.lane.b32.xlu0 %v3067, 112
    %v3236 = vpop.permute.xlu0 %3235
    %v3237 = vsel %vm701, %v3232, 0
    %v3239 = vsel %vm701, %v3234, 0
    %v3241 = vsel %vm701, %v3236, 0
    %3243 = vmatprep.subr.mxu0 0.0
    %3244 = vmatpush1.xpose.msra.mxu0 %v3239
    %3245 = vmatprep.subr.mxu0 0.0
    %3246 = vmatpush1.xpose.msra.mxu0 %v3241
    %3247 = vmatprep.subr.mxu0 0.0
    %3248 = vmatpush1.xpose.msra.mxu0 0.0
    %3249 = vmatprep.subr.mxu0 0.0
    %3250 = vmatpush1.xpose.msra.mxu0 0.0
    %3251 = vmatprep.subr.mxu0 0.0
    %3252 = vmatpush1.xpose.msra.mxu0 0.0
    %3253 = vmatprep.subr.mxu0 0.0
    %3254 = vmatpush1.xpose.msra.mxu0 0.0
    %3255 = vmatprep.subr.mxu0 0.0
    %3256 = vmatpush1.xpose.msra.mxu0 0.0
    %3257 = vmatprep.subr.mxu0 0.0
    %3258 = vmatpush1.xpose.msra.mxu0 0.0
    %3259 = vmatprep.subr.mxu0 0.0
    %3260 = vmatpush1.xpose.msra.mxu0 0.0
    %3261 = vmatprep.subr.mxu0 0.0
    %3262 = vmatpush1.xpose.msra.mxu0 0.0
    %3263 = vmatprep.subr.mxu0 0.0
    %3264 = vmatpush1.xpose.msra.mxu0 0.0
    %3265 = vmatprep.subr.mxu0 0.0
    %3266 = vmatpush1.xpose.msra.mxu0 0.0
    %3267 = vmatprep.subr.mxu0 0.0
    %3268 = vmatpush1.xpose.msra.mxu0 0.0
    %3269 = vmatprep.subr.mxu0 0.0
    %3270 = vmatpush1.xpose.msra.mxu0 0.0
    %3271 = vmatprep.subr.mxu0 0.0
    %3272 = vmatpush1.xpose.msra.mxu0 0.0
    %3273 = vmatprep.subr.mxu0 0.0
    %3274 = vmatpush1.xpose.msra.mxu0 0.0
    %3275 = vmatprep.subr.mxu0 0.0
    %3276 = vmatpush1.xpose.msra.mxu0 0.0
    %3277 = vmatprep.subr.mxu0 0.0
    %3278 = vmatpush1.xpose.msra.mxu0 0.0
    %3279 = vmatprep.subr.mxu0 0.0
    %3280 = vmatpush1.xpose.msra.mxu0 0.0
    %3281 = vmatprep.subr.mxu0 0.0
    %3282 = vmatpush1.xpose.msra.mxu0 0.0
    %3283 = vmatprep.subr.mxu0 0.0
    %3284 = vmatpush1.xpose.msra.mxu0 0.0
    %3285 = vmatprep.subr.mxu0 0.0
    %3286 = vmatpush1.xpose.msra.mxu0 0.0
    %3287 = vmatprep.subr.mxu0 0.0
    %3288 = vmatpush1.xpose.msra.mxu0 0.0
    %3289 = vmatprep.subr.mxu0 0.0
    %3290 = vmatpush1.xpose.msra.mxu0 0.0
    %3291 = vmatprep.subr.mxu0 0.0
    %3292 = vmatpush1.xpose.msra.mxu0 0.0
    %3293 = vmatprep.subr.mxu0 0.0
    %3294 = vmatpush1.xpose.msra.mxu0 0.0
    %3295 = vmatprep.subr.mxu0 0.0
    %3296 = vmatpush1.xpose.msra.mxu0 0.0
    %3297 = vmatprep.subr.mxu0 0.0
    %3298 = vmatpush1.xpose.msra.mxu0 0.0
    %3299 = vmatprep.subr.mxu0 0.0
    %3300 = vmatpush1.xpose.msra.mxu0 0.0
    %3301 = vmatprep.subr.mxu0 0.0
    %3302 = vmatpush1.xpose.msra.mxu0 0.0
    %3303 = vmatprep.subr.mxu0 0.0
    %3304 = vmatpush1.xpose.msra.mxu0 0.0
    %3305 = vmatprep.subr.mxu0 0.0
    %3306 = vmatpush1.xpose.msra.mxu0 0.0
    %3307 = vmatprep.mubr.f32.mxu0 0.0
    %3308 = vmatmul.mubr.f32.gmra.mrb[0].mxu0 %v3237
    %v3309 = vpop.f32.mrb[0].mxu0
    %v3310 = vadd.f32 0.0, %v3309
    %v3311 = vpop.f32.mrb[0].mxu0
    %3312 = vdwg.mxu0
    %3313 = vrot.lane.b32.xlu0 %v2985, 104
    %v3314 = vpop.permute.xlu0 %3313
    %3315 = vrot.lane.b32.xlu0 %v3062, 104
    %v3316 = vpop.permute.xlu0 %3315
    %3317 = vrot.lane.b32.xlu0 %v3067, 104
    %v3318 = vpop.permute.xlu0 %3317
    %v3319 = vsel %vm701, %v3314, 0
    %v3321 = vsel %vm701, %v3316, 0
    %v3323 = vsel %vm701, %v3318, 0
    %3325 = vmatprep.subr.mxu0 0.0
    %3326 = vmatpush1.xpose.msra.mxu0 %v3321
    %3327 = vmatprep.subr.mxu0 0.0
    %3328 = vmatpush1.xpose.msra.mxu0 %v3323
    %3329 = vmatprep.subr.mxu0 0.0
    %3330 = vmatpush1.xpose.msra.mxu0 0.0
    %3331 = vmatprep.subr.mxu0 0.0
    %3332 = vmatpush1.xpose.msra.mxu0 0.0
    %3333 = vmatprep.subr.mxu0 0.0
    %3334 = vmatpush1.xpose.msra.mxu0 0.0
    %3335 = vmatprep.subr.mxu0 0.0
    %3336 = vmatpush1.xpose.msra.mxu0 0.0
    %3337 = vmatprep.subr.mxu0 0.0
    %3338 = vmatpush1.xpose.msra.mxu0 0.0
    %3339 = vmatprep.subr.mxu0 0.0
    %3340 = vmatpush1.xpose.msra.mxu0 0.0
    %3341 = vmatprep.subr.mxu0 0.0
    %3342 = vmatpush1.xpose.msra.mxu0 0.0
    %3343 = vmatprep.subr.mxu0 0.0
    %3344 = vmatpush1.xpose.msra.mxu0 0.0
    %3345 = vmatprep.subr.mxu0 0.0
    %3346 = vmatpush1.xpose.msra.mxu0 0.0
    %3347 = vmatprep.subr.mxu0 0.0
    %3348 = vmatpush1.xpose.msra.mxu0 0.0
    %3349 = vmatprep.subr.mxu0 0.0
    %3350 = vmatpush1.xpose.msra.mxu0 0.0
    %3351 = vmatprep.subr.mxu0 0.0
    %3352 = vmatpush1.xpose.msra.mxu0 0.0
    %3353 = vmatprep.subr.mxu0 0.0
    %3354 = vmatpush1.xpose.msra.mxu0 0.0
    %3355 = vmatprep.subr.mxu0 0.0
    %3356 = vmatpush1.xpose.msra.mxu0 0.0
    %3357 = vmatprep.subr.mxu0 0.0
    %3358 = vmatpush1.xpose.msra.mxu0 0.0
    %3359 = vmatprep.subr.mxu0 0.0
    %3360 = vmatpush1.xpose.msra.mxu0 0.0
    %3361 = vmatprep.subr.mxu0 0.0
    %3362 = vmatpush1.xpose.msra.mxu0 0.0
    %3363 = vmatprep.subr.mxu0 0.0
    %3364 = vmatpush1.xpose.msra.mxu0 0.0
    %3365 = vmatprep.subr.mxu0 0.0
    %3366 = vmatpush1.xpose.msra.mxu0 0.0
    %3367 = vmatprep.subr.mxu0 0.0
    %3368 = vmatpush1.xpose.msra.mxu0 0.0
    %3369 = vmatprep.subr.mxu0 0.0
    %3370 = vmatpush1.xpose.msra.mxu0 0.0
    %3371 = vmatprep.subr.mxu0 0.0
    %3372 = vmatpush1.xpose.msra.mxu0 0.0
    %3373 = vmatprep.subr.mxu0 0.0
    %3374 = vmatpush1.xpose.msra.mxu0 0.0
    %3375 = vmatprep.subr.mxu0 0.0
    %3376 = vmatpush1.xpose.msra.mxu0 0.0
    %3377 = vmatprep.subr.mxu0 0.0
    %3378 = vmatpush1.xpose.msra.mxu0 0.0
    %3379 = vmatprep.subr.mxu0 0.0
    %3380 = vmatpush1.xpose.msra.mxu0 0.0
    %3381 = vmatprep.subr.mxu0 0.0
    %3382 = vmatpush1.xpose.msra.mxu0 0.0
    %3383 = vmatprep.subr.mxu0 0.0
    %3384 = vmatpush1.xpose.msra.mxu0 0.0
    %3385 = vmatprep.subr.mxu0 0.0
    %3386 = vmatpush1.xpose.msra.mxu0 0.0
    %3387 = vmatprep.subr.mxu0 0.0
    %3388 = vmatpush1.xpose.msra.mxu0 0.0
    %3389 = vmatprep.mubr.f32.mxu0 0.0
    %3390 = vmatmul.mubr.f32.gmra.mrb[0].mxu0 %v3319
    %v3391 = vpop.f32.mrb[0].mxu0
    %v3392 = vadd.f32 0.0, %v3391
    %v3393 = vpop.f32.mrb[0].mxu0
    %3394 = vdwg.mxu0
    %v3396 = vrot.slane %v3228, 6
    %v3399 = vrot.slane %v3310, 4
    %v3402 = vrot.slane %v3392, 2
    %v3404 = vsel %vm2334, %v3146, %v3396
    %v3405 = vsel %vm676, %v3404, %v3399
    %vm3406 = vcmask 1045504
    %v3407 = vsel %vm3406, %v3405, %v3402
    %v3408 = vmul.f32 %v3407, 0.35355338
    %vm3409 = vcmask 80896
    %v3410 = vsel %vm3409, %v3408, -inf
    %3411 = vmax.xlane.f32.xlu0 %v3410
    %v3412 = vpop.xlane.xlu0 %3411
    %v3413 = vsub.f32 %v3408, %v3412
    %v3414 = vmul.f32 %v3413, 1.442695
    %v3415 = vpow.pop %v3414
    %v3416 = vsel %vm3409, %v3415, 0.0
    %3417 = vadd.xlane.f32.xlu0 %v3416
    %v3418 = vpop.xlane.xlu0 %3417
    %v3419 = vrcp.pop %v3418
    %v3420 = vmul.f32 %v3415, %v3419
    %3421 = vrot.lane.b32.xlu0 %v3062, 96
    %v3422 = vpop.permute.xlu0 %3421
    %3423 = vrot.lane.b32.xlu0 %v3067, 96
    %v3424 = vpop.permute.xlu0 %3423
    %v3427 = vsel %vm3409, %v3420, 0
    %v3429 = vsel %vm2334, %v3424, 0
    %3431 = vmatprep.subr.mxu0 0.0
    %3432 = vmatpush1.msra.mxu0 %v3422
    %3433 = vmatprep.subr.mxu0 0.0
    %3434 = vmatpush1.msra.mxu0 %v3429
    %3435 = vmatprep.subr.mxu0 0.0
    %3436 = vmatpush1.msra.mxu0 0.0
    %3437 = vmatprep.subr.mxu0 0.0
    %3438 = vmatpush1.msra.mxu0 0.0
    %3439 = vmatprep.subr.mxu0 0.0
    %3440 = vmatpush1.msra.mxu0 0.0
    %3441 = vmatprep.subr.mxu0 0.0
    %3442 = vmatpush1.msra.mxu0 0.0
    %3443 = vmatprep.subr.mxu0 0.0
    %3444 = vmatpush1.msra.mxu0 0.0
    %3445 = vmatprep.subr.mxu0 0.0
    %3446 = vmatpush1.msra.mxu0 0.0
    %3447 = vmatprep.subr.mxu0 0.0
    %3448 = vmatpush1.msra.mxu0 0.0
    %3449 = vmatprep.subr.mxu0 0.0
    %3450 = vmatpush1.msra.mxu0 0.0
    %3451 = vmatprep.subr.mxu0 0.0
    %3452 = vmatpush1.msra.mxu0 0.0
    %3453 = vmatprep.subr.mxu0 0.0
    %3454 = vmatpush1.msra.mxu0 0.0
    %3455 = vmatprep.subr.mxu0 0.0
    %3456 = vmatpush1.msra.mxu0 0.0
    %3457 = vmatprep.subr.mxu0 0.0
    %3458 = vmatpush1.msra.mxu0 0.0
    %3459 = vmatprep.subr.mxu0 0.0
    %3460 = vmatpush1.msra.mxu0 0.0
    %3461 = vmatprep.subr.mxu0 0.0
    %3462 = vmatpush1.msra.mxu0 0.0
    %3463 = vmatprep.subr.mxu0 0.0
    %3464 = vmatpush1.msra.mxu0 0.0
    %3465 = vmatprep.subr.mxu0 0.0
    %3466 = vmatpush1.msra.mxu0 0.0
    %3467 = vmatprep.subr.mxu0 0.0
    %3468 = vmatpush1.msra.mxu0 0.0
    %3469 = vmatprep.subr.mxu0 0.0
    %3470 = vmatpush1.msra.mxu0 0.0
    %3471 = vmatprep.subr.mxu0 0.0
    %3472 = vmatpush1.msra.mxu0 0.0
    %3473 = vmatprep.subr.mxu0 0.0
    %3474 = vmatpush1.msra.mxu0 0.0
    %3475 = vmatprep.subr.mxu0 0.0
    %3476 = vmatpush1.msra.mxu0 0.0
    %3477 = vmatprep.subr.mxu0 0.0
    %3478 = vmatpush1.msra.mxu0 0.0
    %3479 = vmatprep.subr.mxu0 0.0
    %3480 = vmatpush1.msra.mxu0 0.0
    %3481 = vmatprep.subr.mxu0 0.0
    %3482 = vmatpush1.msra.mxu0 0.0
    %3483 = vmatprep.subr.mxu0 0.0
    %3484 = vmatpush1.msra.mxu0 0.0
    %3485 = vmatprep.subr.mxu0 0.0
    %3486 = vmatpush1.msra.mxu0 0.0
    %3487 = vmatprep.subr.mxu0 0.0
    %3488 = vmatpush1.msra.mxu0 0.0
    %3489 = vmatprep.subr.mxu0 0.0
    %3490 = vmatpush1.msra.mxu0 0.0
    %3491 = vmatprep.subr.mxu0 0.0
    %3492 = vmatpush1.msra.mxu0 0.0
    %3493 = vmatprep.subr.mxu0 0.0
    %3494 = vmatpush1.msra.mxu0 0.0
    %3495 = vmatprep.mubr.f32.mxu0 0.0
    %3496 = vmatmul.mubr.f32.gmra.mrb[0].mxu0 %v3427
    %v3497 = vpop.f32.mrb[0].mxu0
    %v3498 = vadd.f32 0.0, %v3497
    %v3499 = vpop.f32.mrb[0].mxu0
    %3500 = vdwg.mxu0
    %v3501 = vrot.slane %v3420, 2
    %3502 = vrot.lane.b32.xlu0 %v3062, 88
    %v3503 = vpop.permute.xlu0 %3502
    %3504 = vrot.lane.b32.xlu0 %v3067, 88
    %v3505 = vpop.permute.xlu0 %3504
    %v3507 = vsel %vm3409, %v3501, 0
    %v3509 = vsel %vm2334, %v3505, 0
    %3511 = vmatprep.subr.mxu0 0.0
    %3512 = vmatpush1.msra.mxu0 %v3503
    %3513 = vmatprep.subr.mxu0 0.0
    %3514 = vmatpush1.msra.mxu0 %v3509
    %3515 = vmatprep.subr.mxu0 0.0
    %3516 = vmatpush1.msra.mxu0 0.0
    %3517 = vmatprep.subr.mxu0 0.0
    %3518 = vmatpush1.msra.mxu0 0.0
    %3519 = vmatprep.subr.mxu0 0.0
    %3520 = vmatpush1.msra.mxu0 0.0
    %3521 = vmatprep.subr.mxu0 0.0
    %3522 = vmatpush1.msra.mxu0 0.0
    %3523 = vmatprep.subr.mxu0 0.0
    %3524 = vmatpush1.msra.mxu0 0.0
    %3525 = vmatprep.subr.mxu0 0.0
    %3526 = vmatpush1.msra.mxu0 0.0
    %3527 = vmatprep.subr.mxu0 0.0
    %3528 = vmatpush1.msra.mxu0 0.0
    %3529 = vmatprep.subr.mxu0 0.0
    %3530 = vmatpush1.msra.mxu0 0.0
    %3531 = vmatprep.subr.mxu0 0.0
    %3532 = vmatpush1.msra.mxu0 0.0
    %3533 = vmatprep.subr.mxu0 0.0
    %3534 = vmatpush1.msra.mxu0 0.0
    %3535 = vmatprep.subr.mxu0 0.0
    %3536 = vmatpush1.msra.mxu0 0.0
    %3537 = vmatprep.subr.mxu0 0.0
    %3538 = vmatpush1.msra.mxu0 0.0
    %3539 = vmatprep.subr.mxu0 0.0
    %3540 = vmatpush1.msra.mxu0 0.0
    %3541 = vmatprep.subr.mxu0 0.0
    %3542 = vmatpush1.msra.mxu0 0.0
    %3543 = vmatprep.subr.mxu0 0.0
    %3544 = vmatpush1.msra.mxu0 0.0
    %3545 = vmatprep.subr.mxu0 0.0
    %3546 = vmatpush1.msra.mxu0 0.0
    %3547 = vmatprep.subr.mxu0 0.0
    %3548 = vmatpush1.msra.mxu0 0.0
    %3549 = vmatprep.subr.mxu0 0.0
    %3550 = vmatpush1.msra.mxu0 0.0
    %3551 = vmatprep.subr.mxu0 0.0
    %3552 = vmatpush1.msra.mxu0 0.0
    %3553 = vmatprep.subr.mxu0 0.0
    %3554 = vmatpush1.msra.mxu0 0.0
    %3555 = vmatprep.subr.mxu0 0.0
    %3556 = vmatpush1.msra.mxu0 0.0
    %3557 = vmatprep.subr.mxu0 0.0
    %3558 = vmatpush1.msra.mxu0 0.0
    %3559 = vmatprep.subr.mxu0 0.0
    %3560 = vmatpush1.msra.mxu0 0.0
    %3561 = vmatprep.subr.mxu0 0.0
    %3562 = vmatpush1.msra.mxu0 0.0
    %3563 = vmatprep.subr.mxu0 0.0
    %3564 = vmatpush1.msra.mxu0 0.0
    %3565 = vmatprep.subr.mxu0 0.0
    %3566 = vmatpush1.msra.mxu0 0.0
    %3567 = vmatprep.subr.mxu0 0.0
    %3568 = vmatpush1.msra.mxu0 0.0
    %3569 = vmatprep.subr.mxu0 0.0
    %3570 = vmatpush1.msra.mxu0 0.0
    %3571 = vmatprep.subr.mxu0 0.0
    %3572 = vmatpush1.msra.mxu0 0.0
    %3573 = vmatprep.subr.mxu0 0.0
    %3574 = vmatpush1.msra.mxu0 0.0
    %3575 = vmatprep.mubr.f32.mxu0 0.0
    %3576 = vmatmul.mubr.f32.gmra.mrb[0].mxu0 %v3507
    %v3577 = vpop.f32.mrb[0].mxu0
    %v3578 = vadd.f32 0.0, %v3577
    %v3579 = vpop.f32.mrb[0].mxu0
    %3580 = vdwg.mxu0
    %v3581 = vrot.slane %v3420, 4
    %3582 = vrot.lane.b32.xlu0 %v3062, 80
    %v3583 = vpop.permute.xlu0 %3582
    %3584 = vrot.lane.b32.xlu0 %v3067, 80
    %v3585 = vpop.permute.xlu0 %3584
    %v3587 = vsel %vm3409, %v3581, 0
    %v3589 = vsel %vm2334, %v3585, 0
    %3591 = vmatprep.subr.mxu0 0.0
    %3592 = vmatpush1.msra.mxu0 %v3583
    %3593 = vmatprep.subr.mxu0 0.0
    %3594 = vmatpush1.msra.mxu0 %v3589
    %3595 = vmatprep.subr.mxu0 0.0
    %3596 = vmatpush1.msra.mxu0 0.0
    %3597 = vmatprep.subr.mxu0 0.0
    %3598 = vmatpush1.msra.mxu0 0.0
    %3599 = vmatprep.subr.mxu0 0.0
    %3600 = vmatpush1.msra.mxu0 0.0
    %3601 = vmatprep.subr.mxu0 0.0
    %3602 = vmatpush1.msra.mxu0 0.0
    %3603 = vmatprep.subr.mxu0 0.0
    %3604 = vmatpush1.msra.mxu0 0.0
    %3605 = vmatprep.subr.mxu0 0.0
    %3606 = vmatpush1.msra.mxu0 0.0
    %3607 = vmatprep.subr.mxu0 0.0
    %3608 = vmatpush1.msra.mxu0 0.0
    %3609 = vmatprep.subr.mxu0 0.0
    %3610 = vmatpush1.msra.mxu0 0.0
    %3611 = vmatprep.subr.mxu0 0.0
    %3612 = vmatpush1.msra.mxu0 0.0
    %3613 = vmatprep.subr.mxu0 0.0
    %3614 = vmatpush1.msra.mxu0 0.0
    %3615 = vmatprep.subr.mxu0 0.0
    %3616 = vmatpush1.msra.mxu0 0.0
    %3617 = vmatprep.subr.mxu0 0.0
    %3618 = vmatpush1.msra.mxu0 0.0
    %3619 = vmatprep.subr.mxu0 0.0
    %3620 = vmatpush1.msra.mxu0 0.0
    %3621 = vmatprep.subr.mxu0 0.0
    %3622 = vmatpush1.msra.mxu0 0.0
    %3623 = vmatprep.subr.mxu0 0.0
    %3624 = vmatpush1.msra.mxu0 0.0
    %3625 = vmatprep.subr.mxu0 0.0
    %3626 = vmatpush1.msra.mxu0 0.0
    %3627 = vmatprep.subr.mxu0 0.0
    %3628 = vmatpush1.msra.mxu0 0.0
    %3629 = vmatprep.subr.mxu0 0.0
    %3630 = vmatpush1.msra.mxu0 0.0
    %3631 = vmatprep.subr.mxu0 0.0
    %3632 = vmatpush1.msra.mxu0 0.0
    %3633 = vmatprep.subr.mxu0 0.0
    %3634 = vmatpush1.msra.mxu0 0.0
    %3635 = vmatprep.subr.mxu0 0.0
    %3636 = vmatpush1.msra.mxu0 0.0
    %3637 = vmatprep.subr.mxu0 0.0
    %3638 = vmatpush1.msra.mxu0 0.0
    %3639 = vmatprep.subr.mxu0 0.0
    %3640 = vmatpush1.msra.mxu0 0.0
    %3641 = vmatprep.subr.mxu0 0.0
    %3642 = vmatpush1.msra.mxu0 0.0
    %3643 = vmatprep.subr.mxu0 0.0
    %3644 = vmatpush1.msra.mxu0 0.0
    %3645 = vmatprep.subr.mxu0 0.0
    %3646 = vmatpush1.msra.mxu0 0.0
    %3647 = vmatprep.subr.mxu0 0.0
    %3648 = vmatpush1.msra.mxu0 0.0
    %3649 = vmatprep.subr.mxu0 0.0
    %3650 = vmatpush1.msra.mxu0 0.0
    %3651 = vmatprep.subr.mxu0 0.0
    %3652 = vmatpush1.msra.mxu0 0.0
    %3653 = vmatprep.subr.mxu0 0.0
    %3654 = vmatpush1.msra.mxu0 0.0
    %3655 = vmatprep.mubr.f32.mxu0 0.0
    %3656 = vmatmul.mubr.f32.gmra.mrb[0].mxu0 %v3587
    %v3657 = vpop.f32.mrb[0].mxu0
    %v3658 = vadd.f32 0.0, %v3657
    %v3659 = vpop.f32.mrb[0].mxu0
    %3660 = vdwg.mxu0
    %v3661 = vrot.slane %v3420, 6
    %3662 = vrot.lane.b32.xlu0 %v3062, 72
    %v3663 = vpop.permute.xlu0 %3662
    %3664 = vrot.lane.b32.xlu0 %v3067, 72
    %v3665 = vpop.permute.xlu0 %3664
    %v3667 = vsel %vm3409, %v3661, 0
    %v3669 = vsel %vm2334, %v3665, 0
    %3671 = vmatprep.subr.mxu0 0.0
    %3672 = vmatpush1.msra.mxu0 %v3663
    %3673 = vmatprep.subr.mxu0 0.0
    %3674 = vmatpush1.msra.mxu0 %v3669
    %3675 = vmatprep.subr.mxu0 0.0
    %3676 = vmatpush1.msra.mxu0 0.0
    %3677 = vmatprep.subr.mxu0 0.0
    %3678 = vmatpush1.msra.mxu0 0.0
    %3679 = vmatprep.subr.mxu0 0.0
    %3680 = vmatpush1.msra.mxu0 0.0
    %3681 = vmatprep.subr.mxu0 0.0
    %3682 = vmatpush1.msra.mxu0 0.0
    %3683 = vmatprep.subr.mxu0 0.0
    %3684 = vmatpush1.msra.mxu0 0.0
    %3685 = vmatprep.subr.mxu0 0.0
    %3686 = vmatpush1.msra.mxu0 0.0
    %3687 = vmatprep.subr.mxu0 0.0
    %3688 = vmatpush1.msra.mxu0 0.0
    %3689 = vmatprep.subr.mxu0 0.0
    %3690 = vmatpush1.msra.mxu0 0.0
    %3691 = vmatprep.subr.mxu0 0.0
    %3692 = vmatpush1.msra.mxu0 0.0
    %3693 = vmatprep.subr.mxu0 0.0
    %3694 = vmatpush1.msra.mxu0 0.0
    %3695 = vmatprep.subr.mxu0 0.0
    %3696 = vmatpush1.msra.mxu0 0.0
    %3697 = vmatprep.subr.mxu0 0.0
    %3698 = vmatpush1.msra.mxu0 0.0
    %3699 = vmatprep.subr.mxu0 0.0
    %3700 = vmatpush1.msra.mxu0 0.0
    %3701 = vmatprep.subr.mxu0 0.0
    %3702 = vmatpush1.msra.mxu0 0.0
    %3703 = vmatprep.subr.mxu0 0.0
    %3704 = vmatpush1.msra.mxu0 0.0
    %3705 = vmatprep.subr.mxu0 0.0
    %3706 = vmatpush1.msra.mxu0 0.0
    %3707 = vmatprep.subr.mxu0 0.0
    %3708 = vmatpush1.msra.mxu0 0.0
    %3709 = vmatprep.subr.mxu0 0.0
    %3710 = vmatpush1.msra.mxu0 0.0
    %3711 = vmatprep.subr.mxu0 0.0
    %3712 = vmatpush1.msra.mxu0 0.0
    %3713 = vmatprep.subr.mxu0 0.0
    %3714 = vmatpush1.msra.mxu0 0.0
    %3715 = vmatprep.subr.mxu0 0.0
    %3716 = vmatpush1.msra.mxu0 0.0
    %3717 = vmatprep.subr.mxu0 0.0
    %3718 = vmatpush1.msra.mxu0 0.0
    %3719 = vmatprep.subr.mxu0 0.0
    %3720 = vmatpush1.msra.mxu0 0.0
    %3721 = vmatprep.subr.mxu0 0.0
    %3722 = vmatpush1.msra.mxu0 0.0
    %3723 = vmatprep.subr.mxu0 0.0
    %3724 = vmatpush1.msra.mxu0 0.0
    %3725 = vmatprep.subr.mxu0 0.0
    %3726 = vmatpush1.msra.mxu0 0.0
    %3727 = vmatprep.subr.mxu0 0.0
    %3728 = vmatpush1.msra.mxu0 0.0
    %3729 = vmatprep.subr.mxu0 0.0
    %3730 = vmatpush1.msra.mxu0 0.0
    %3731 = vmatprep.subr.mxu0 0.0
    %3732 = vmatpush1.msra.mxu0 0.0
    %3733 = vmatprep.subr.mxu0 0.0
    %3734 = vmatpush1.msra.mxu0 0.0
    %3735 = vmatprep.mubr.f32.mxu0 0.0
    %3736 = vmatmul.mubr.f32.gmra.mrb[0].mxu0 %v3667
    %v3737 = vpop.f32.mrb[0].mxu0
    %v3738 = vadd.f32 0.0, %v3737
    %v3739 = vpop.f32.mrb[0].mxu0
    %3740 = vdwg.mxu0
    %3742 = vrot.lane.b32.xlu0 %v3578, 8
    %v3743 = vpop.permute.xlu0 %3742
    %3746 = vrot.lane.b32.xlu0 %v3658, 16
    %v3747 = vpop.permute.xlu0 %3746
    %3750 = vrot.lane.b32.xlu0 %v3738, 24
    %v3751 = vpop.permute.xlu0 %3750
    %v3753 = vsel %vm701, %v3498, %v3743
    %v3754 = vsel %vm72, %v3753, %v3747
    %v3755 = vsel %vm708, %v3754, %v3751
    %vm3756 = vcmask 254976
    %3757 = vst.msk [vmem:[#allocation2] sm:$0x3] %vm3756, %v3755
    // Predicated region
    $region54: #{gst_forward.1} parent=1 // pred_check
      _
    $region55: #{gst_forward.1} parent=1 // pred_check_branch
      %3759 = sbr.rel (0) target = $region57
    $region56: #{gst_forward.1} parent=1 // pred_region
      %s3761 = ssub.s32 32, 32
      %3762 = vsyncadd [#allocation3], %s3761
      %s3764 = sshll.u32 [#allocation2], 4
      %s3765 = int_to_ptr.vmem [resolvable:$true] %s3764
      %3767 = dma.vmem_to_hbm [thread:$0]  %s3765, 32, %s13, [#allocation3]
    $region57: #{gst_forward.1} parent=1 // pred_fallthru
      _
    // Predicated region
    $region58: #{gst_forward.1} parent=1 // pred_check
      _
    $region59: #{gst_forward.1} parent=1 // pred_check_branch
      %3769 = sbr.rel (0) target = $region61
    $region60: #{gst_forward.1} parent=1 // pred_region
      %3770 = dma.done [#allocation3], 32
    $region61: #{gst_forward.1} parent=1 // pred_fallthru
      _
    %3771 = vsyncpa [#allocation3], 1

</llo_original>
